<compile_context>
chip_gen: v7x
topology: tpu7x:2x2x1
jax: 0.10.0
libtpu: 0.0.40
codegen_flags: <defaults>
</compile_context>

<pallas_src>
import jax
import jax.numpy as jnp
from jax import lax
from jax.experimental import pallas as pl
from jax.experimental.pallas import tpu as pltpu


def bottleneck_kernel(x_ref, w1_ref, b1_ref, w2_ref, b2_ref, w3_ref, b3_ref,
                      out_ref, pad_ref, shift_ref):
    # x_ref     : (1, H*W, Cin)   bf16  full image (resident across row bands)
    # w1_ref    : (Cin, P)        bf16  conv1 weight * bn1-scale
    # w2_ref    : (3, 3P, P)      bf16  conv2 taps packed per ky, * bn2-scale
    # w3_ref    : (P, Cout)       bf16  conv3 weight * bn3-scale
    # bX_ref    : (1, C)          f32   folded BN biases
    # out_ref   : (1, TH*W, Cout) bf16  one row band of the output
    # pad_ref   : (TH+2, W+2, P)  bf16  conv2 zero-padded halo scratch
    # shift_ref : (TH+2, W, 3P)   bf16  dx-shifted conv2 operand (built once)
    TH = pad_ref.shape[0] - 2
    W = pad_ref.shape[1] - 2
    P = pad_ref.shape[2]
    rows = TH * W

    r = pl.program_id(1)
    nr = pl.num_programs(1)

    w1 = w1_ref[...]
    b1 = b1_ref[...]

    # ---- zero only the halo border (interior is fully overwritten below) --
    zcol = jnp.zeros((TH + 2, 1, P), pad_ref.dtype)
    pad_ref[:, 0:1, :] = zcol
    pad_ref[:, W + 1:W + 2, :] = zcol

    # ---- conv1 (1x1) + bias + relu for the TH rows of this band -----------
    start = pl.multiple_of(r * rows, rows)
    c1 = jnp.dot(x_ref[0, pl.ds(start, rows), :], w1,
                 preferred_element_type=jnp.float32)            # (rows, P) f32
    o1 = jnp.maximum(c1 + b1, 0.0)
    pad_ref[1:TH + 1, 1:W + 1, :] = o1.reshape(TH, W, P).astype(pad_ref.dtype)

    # ---- conv1 for the 1-row halo above / below (zero at image borders) ---
    @pl.when(r > 0)
    def _():
        top = x_ref[0, pl.ds(pl.multiple_of(r * rows - W, W), W), :]
        c = jnp.dot(top, w1, preferred_element_type=jnp.float32)
        pad_ref[0, 1:W + 1, :] = jnp.maximum(c + b1, 0.0).astype(pad_ref.dtype)

    @pl.when(r == 0)
    def _():
        pad_ref[0, 1:W + 1, :] = jnp.zeros((W, P), pad_ref.dtype)

    @pl.when(r < nr - 1)
    def _():
        bot = x_ref[0, pl.ds(pl.multiple_of((r + 1) * rows, rows), W), :]
        c = jnp.dot(bot, w1, preferred_element_type=jnp.float32)
        pad_ref[TH + 1, 1:W + 1, :] = jnp.maximum(c + b1, 0.0).astype(pad_ref.dtype)

    @pl.when(r == nr - 1)
    def _():
        pad_ref[TH + 1, 1:W + 1, :] = jnp.zeros((W, P), pad_ref.dtype)

    # ---- build the dx-shifted conv2 operand ONCE (was done per dy) --------
    shift_ref[...] = jnp.concatenate(
        [pad_ref[:, dx:dx + W, :] for dx in range(3)], axis=-1)   # (TH+2, W, 3P)

    # ---- conv2 (3x3, stride=1, pad=1) as 3 matmuls with K = 3P ------------
    acc = None
    for dy in range(3):
        # Leading-dim slice of the VMEM scratch: free (no relayout).
        op = shift_ref[dy:dy + TH].reshape(rows, 3 * P)
        contrib = jnp.dot(op, w2_ref[dy], preferred_element_type=jnp.float32)
        acc = contrib if acc is None else acc + contrib
    o2 = jnp.maximum(acc + b2_ref[...], 0.0).astype(jnp.bfloat16)  # (rows, P)

    # ---- conv3 (1x1) + bias, residual add, relu ---------------------------
    o3 = jnp.dot(o2, w3_ref[...], preferred_element_type=jnp.float32)
    # Re-read the residual band from the (VMEM-resident) x ref here instead of
    # keeping the conv1 operand live across conv2/conv3 (avoids vreg spills).
    resid = x_ref[0, pl.ds(start, rows), :].astype(jnp.float32)
    out_ref[0] = jnp.maximum(o3 + b3_ref[...] + resid, 0.0).astype(out_ref.dtype)


def bottleneck_pallas(x_nhwc, params, *, band_rows=None):
    """x_nhwc: (N, H, W, Cin) float32.  Returns (N, H, W, Cout) bfloat16."""
    N, H, W, Cin = x_nhwc.shape
    w1, b1, w2, b2, w3, b3 = params
    P = w1.shape[1]
    Cout = w3.shape[1]
    assert Cout == Cin, "stride=1 / downsample=None requires inplanes == planes*4"

    if band_rows is None:
        # Whole-image bands when N >= 2: no halo recompute, minimal per-step
        # overhead, and N >= 2 grid points keep both v7x TensorCores busy.
        # With N == 1, split the image into two bands for core parallelism.
        band_rows = H if N >= 2 else max(H // 2, 1)
    TH = min(band_rows, H)
    if H % TH != 0 or (TH * W) % 8 != 0:
        TH = H                      # whole-image band is always valid
    rows = TH * W
    assert rows % 8 == 0, "a row band must contain a multiple of 8 pixels"
    R = H // TH

    x_flat = x_nhwc.reshape(N, H * W, Cin).astype(jnp.bfloat16)

    # NOTE: the weight blocks are grid-invariant; at production (stage-4)
    # shapes on v7x they should be single-buffered (pipeline_mode=pl.Buffered(1))
    # to save VMEM.  At demo shapes the default double-buffering is harmless.
    full = lambda shape: pl.BlockSpec(shape, lambda n, r: (0,) * len(shape))

    # VMEM budget: x slab + out band (double-buffered), the two scratches and
    # the (double-buffered) weights, with 2x headroom, clamped to [32, 64] MiB.
    est = (2 * H * W * Cin * 2
           + 2 * rows * Cout * 2
           + (TH + 2) * (W + 2) * P * 2
           + (TH + 2) * W * 3 * P * 2
           + 2 * (w1.size + w2.size + w3.size) * 2
           + 2 * (b1.size + b2.size + b3.size) * 4)
    vmem_limit = int(min(max(2 * est, 32 * 1024 * 1024), 64 * 1024 * 1024))

    out = pl.pallas_call(
        bottleneck_kernel,
        out_shape=jax.ShapeDtypeStruct((N, H * W, Cout), jnp.bfloat16),
        grid_spec=pltpu.PrefetchScalarGridSpec(
            num_scalar_prefetch=0,
            grid=(N, R),
            in_specs=[
                pl.BlockSpec((1, H * W, Cin), lambda n, r: (n, 0, 0)),
                full((Cin, P)), full((1, P)),
                full((3, 3 * P, P)), full((1, P)),
                full((P, Cout)), full((1, Cout)),
            ],
            out_specs=pl.BlockSpec((1, rows, Cout), lambda n, r: (n, r, 0)),
            scratch_shapes=[
                pltpu.VMEM((TH + 2, W + 2, P), jnp.bfloat16),
                pltpu.VMEM((TH + 2, W, 3 * P), jnp.bfloat16),
            ],
        ),
        compiler_params=pltpu.CompilerParams(
            dimension_semantics=("parallel", "parallel"),
            vmem_limit_bytes=vmem_limit),
    )(x_flat, w1, b1, w2, b2, w3, b3)
    return out.reshape(N, H, W, Cout)


def fold_bn(gamma, beta, mean, var, eps=1e-5):
    scale = gamma / jnp.sqrt(var + eps)
    bias = beta - mean * scale
    return scale, bias


def pack_params(conv1_w, bn1, conv2_w, bn2, conv3_w, bn3):
    """Fold BN scales into the (PyTorch OIHW) conv weights, pack for the kernel."""
    s1, b1 = fold_bn(*bn1)
    s2, b2 = fold_bn(*bn2)
    s3, b3 = fold_bn(*bn3)
    P = conv1_w.shape[0]
    Cout = conv3_w.shape[0]

    w1 = (conv1_w[:, :, 0, 0].T * s1[None, :]).astype(jnp.bfloat16)      # (Cin, P)
    w3 = (conv3_w[:, :, 0, 0].T * s3[None, :]).astype(jnp.bfloat16)      # (P, Cout)
    # conv2 packed per ky as (3P, P): rows = [kx=0 in-channels; kx=1; kx=2].
    w2 = jnp.stack([
        jnp.concatenate([conv2_w[:, :, dy, dx].T for dx in range(3)], axis=0)
        * s2[None, :]
        for dy in range(3)]).astype(jnp.bfloat16)                        # (3, 3P, P)

    return (w1, b1.reshape(1, P).astype(jnp.float32),
            w2, b2.reshape(1, P).astype(jnp.float32),
            w3, b3.reshape(1, Cout).astype(jnp.float32))


def reference_bottleneck(x_nhwc, torch_like):
    """Pure-JAX f32 reference using lax.conv (NHWC / HWIO)."""
    (c1, bn1, c2, bn2, c3, bn3) = torch_like
    dn = ("NHWC", "HWIO", "NHWC")

    def conv(x, w_oihw, padding):
        w = jnp.transpose(w_oihw, (2, 3, 1, 0))   # OIHW -> HWIO
        return lax.conv_general_dilated(x, w, (1, 1), padding,
                                        dimension_numbers=dn)

    def bn(x, p):
        g, b, m, v = p
        return (x - m) / jnp.sqrt(v + 1e-5) * g + b

    out = jax.nn.relu(bn(conv(x_nhwc, c1, "VALID"), bn1))
    out = jax.nn.relu(bn(conv(out, c2, "SAME"), bn2))
    out = bn(conv(out, c3, "VALID"), bn3)
    return jax.nn.relu(out + x_nhwc)


if __name__ == "__main__":
    key = jax.random.PRNGKey(0)
    N, planes, H, W = 2, 4, 16, 16
    expansion = 4
    inplanes = planes * expansion          # 16 -> downsample is None

    ks = jax.random.split(key, 16)

    # PyTorch-convention parameter tensors (deterministic random init).
    conv1_w = 0.1 * jax.random.normal(ks[0], (planes, inplanes, 1, 1), jnp.float32)
    conv2_w = 0.1 * jax.random.normal(ks[1], (planes, planes, 3, 3), jnp.float32)
    conv3_w = 0.1 * jax.random.normal(ks[2], (planes * expansion, planes, 1, 1), jnp.float32)

    def bn_params(k, c):
        k1, k2, k3, k4 = jax.random.split(k, 4)
        gamma = 1.0 + 0.1 * jax.random.normal(k1, (c,), jnp.float32)
        beta = 0.1 * jax.random.normal(k2, (c,), jnp.float32)
        mean = 0.1 * jax.random.normal(k3, (c,), jnp.float32)
        var = jnp.abs(jax.random.normal(k4, (c,), jnp.float32)) + 0.5
        return gamma, beta, mean, var

    bn1_p = bn_params(ks[3], planes)
    bn2_p = bn_params(ks[4], planes)
    bn3_p = bn_params(ks[5], planes * expansion)

    # Input in PyTorch NCHW convention, transposed to NHWC for the kernel path.
    x_nchw = jax.random.normal(ks[6], (N, inplanes, H, W), jnp.float32)
    x_nhwc = jnp.transpose(x_nchw, (0, 2, 3, 1))

    params = pack_params(conv1_w, bn1_p, conv2_w, bn2_p, conv3_w, bn3_p)

    out = bottleneck_pallas(x_nhwc, params)
    out = jax.block_until_ready(out)

    ref = reference_bottleneck(x_nhwc, (conv1_w, bn1_p, conv2_w, bn2_p, conv3_w, bn3_p))
    ref = jax.block_until_ready(ref)

    assert out.shape == (N, H, W, planes * expansion)
    assert out.dtype == jnp.bfloat16
    # Tolerance accounts for bf16 MXU operands, the bf16-cast residual path and
    # the bf16 output writeback, vs. the pure-f32 reference.
    out_f32 = out.astype(jnp.float32)
    err = float(jnp.max(jnp.abs(out_f32 - ref)))
    assert jnp.allclose(out_f32, ref, atol=2e-1, rtol=5e-2), err

    print("KERNEL_OK")
</pallas_src>

<mosaic_0001>
module attributes {stable_mosaic.version = 11 : i64} {
  func.func @bottleneck_kernel(%arg0: i32, %arg1: i32, %arg2: memref<1x256x16xbf16, #tpu.memory_space<vmem>>, %arg3: memref<16x4xbf16, #tpu.memory_space<vmem>>, %arg4: memref<1x4xf32, #tpu.memory_space<vmem>>, %arg5: memref<3x12x4xbf16, #tpu.memory_space<vmem>>, %arg6: memref<1x4xf32, #tpu.memory_space<vmem>>, %arg7: memref<4x16xbf16, #tpu.memory_space<vmem>>, %arg8: memref<1x16xf32, #tpu.memory_space<vmem>>, %arg9: memref<1x256x16xbf16, #tpu.memory_space<vmem>>, %arg10: memref<18x18x4xbf16, #tpu.memory_space<vmem>>, %arg11: memref<18x16x12xbf16, #tpu.memory_space<vmem>>) attributes {dimension_semantics = [#tpu.dimension_semantics<parallel>, #tpu.dimension_semantics<parallel>], iteration_bounds = array<i64: 2, 1>, scalar_prefetch = 0 : i64, scratch_operands = 2 : i64, tpu.core_type = #tpu.core_type<tc>, window_params = [{transform_indices = @transform_0, window_bounds = array<i64: 1, 256, 16>}, {pipeline_mode = #tpu.pipeline_mode<synchronous>, transform_indices = @transform_1, window_bounds = array<i64: 16, 4>}, {pipeline_mode = #tpu.pipeline_mode<synchronous>, transform_indices = @transform_2, window_bounds = array<i64: 1, 4>}, {pipeline_mode = #tpu.pipeline_mode<synchronous>, transform_indices = @transform_3, window_bounds = array<i64: 3, 12, 4>}, {pipeline_mode = #tpu.pipeline_mode<synchronous>, transform_indices = @transform_4, window_bounds = array<i64: 1, 4>}, {pipeline_mode = #tpu.pipeline_mode<synchronous>, transform_indices = @transform_5, window_bounds = array<i64: 4, 16>}, {pipeline_mode = #tpu.pipeline_mode<synchronous>, transform_indices = @transform_6, window_bounds = array<i64: 1, 16>}, {transform_indices = @transform_7, window_bounds = array<i64: 1, 256, 16>}]} {
    %c0 = arith.constant 0 : index
    %c0_0 = arith.constant 0 : index
    %0 = vector.load %arg3[%c0, %c0_0] : memref<16x4xbf16, #tpu.memory_space<vmem>>, vector<16x4xbf16>
    %c0_1 = arith.constant 0 : index
    %c0_2 = arith.constant 0 : index
    %1 = vector.load %arg4[%c0_1, %c0_2] : memref<1x4xf32, #tpu.memory_space<vmem>>, vector<1x4xf32>
    %cst = arith.constant 0.000000e+00 : bf16
    %2 = vector.broadcast %cst : bf16 to vector<18x1x4xbf16>
    %c0_3 = arith.constant 0 : index
    %c0_4 = arith.constant 0 : index
    %c0_5 = arith.constant 0 : index
    %3 = vector.load %arg10[%c0_3, %c0_4, %c0_5] : memref<18x18x4xbf16, #tpu.memory_space<vmem>>, vector<18x1x4xbf16>
    tpu.vector_store %arg10[%c0_3, %c0_4, %c0_5], %2 {strides = array<i32>} : memref<18x18x4xbf16, #tpu.memory_space<vmem>>, vector<18x1x4xbf16>,
    %c0_6 = arith.constant 0 : index
    %c17 = arith.constant 17 : index
    %c0_7 = arith.constant 0 : index
    %4 = vector.load %arg10[%c0_6, %c17, %c0_7] : memref<18x18x4xbf16, #tpu.memory_space<vmem>>, vector<18x1x4xbf16>
    tpu.vector_store %arg10[%c0_6, %c17, %c0_7], %2 {strides = array<i32>} : memref<18x18x4xbf16, #tpu.memory_space<vmem>>, vector<18x1x4xbf16>,
    %c256_i32 = arith.constant 256 : i32
    %5 = arith.muli %arg1, %c256_i32 : i32
    %6 = tpu.assume_multiple %5, 256 : i32
    %c0_8 = arith.constant 0 : index
    %7 = arith.index_cast %6 : i32 to index
    %c0_9 = arith.constant 0 : index
    %8 = vector.load %arg2[%c0_8, %7, %c0_9] : memref<1x256x16xbf16, #tpu.memory_space<vmem>>, vector<1x256x16xbf16>
    %9 = vector.shape_cast %8 : vector<1x256x16xbf16> to vector<256x16xbf16>
    %cst_10 = arith.constant dense<0.000000e+00> : vector<256x4xf32>
    %10 = tpu.matmul %9, %0, %cst_10 {dimension_numbers = #tpu.dot_dimension_numbers<[1], [0], [0], [1], [0, 0, 1, 1], [], []>} : vector<256x16xbf16>, vector<16x4xbf16>, vector<256x4xf32> -> vector<256x4xf32>
    %11 = vector.broadcast %1 : vector<1x4xf32> to vector<256x4xf32>
    %12 = arith.addf %10, %11 : vector<256x4xf32>
    %cst_11 = arith.constant 0.000000e+00 : f32
    %13 = vector.broadcast %cst_11 : f32 to vector<256x4xf32>
    %14 = arith.maximumf %12, %13 : vector<256x4xf32>
    %15 = vector.shape_cast %14 : vector<256x4xf32> to vector<16x16x4xf32>
    %16 = arith.truncf %15 : vector<16x16x4xf32> to vector<16x16x4xbf16>
    %c1 = arith.constant 1 : index
    %c1_12 = arith.constant 1 : index
    %c0_13 = arith.constant 0 : index
    %17 = vector.load %arg10[%c1, %c1_12, %c0_13] : memref<18x18x4xbf16, #tpu.memory_space<vmem>>, vector<16x16x4xbf16>
    tpu.vector_store %arg10[%c1, %c1_12, %c0_13], %16 {strides = array<i32>} : memref<18x18x4xbf16, #tpu.memory_space<vmem>>, vector<16x16x4xbf16>,
    %c0_i32 = arith.constant 0 : i32
    %18 = arith.cmpi sgt, %arg1, %c0_i32 : i32
    %19 = arith.extui %18 : i1 to i32
    %c0_i32_14 = arith.constant 0 : i32
    %20 = arith.cmpi ne, %19, %c0_i32_14 : i32
    scf.if %20 {
      %c256_i32_67 = arith.constant 256 : i32
      %74 = arith.muli %arg1, %c256_i32_67 : i32
      %c16_i32 = arith.constant 16 : i32
      %75 = arith.subi %74, %c16_i32 : i32
      %76 = tpu.assume_multiple %75, 16 : i32
      %c0_68 = arith.constant 0 : index
      %77 = arith.index_cast %76 : i32 to index
      %c0_69 = arith.constant 0 : index
      %78 = vector.load %arg2[%c0_68, %77, %c0_69] : memref<1x256x16xbf16, #tpu.memory_space<vmem>>, vector<1x16x16xbf16>
      %79 = vector.shape_cast %78 : vector<1x16x16xbf16> to vector<16x16xbf16>
      %cst_70 = arith.constant dense<0.000000e+00> : vector<16x4xf32>
      %80 = tpu.matmul %79, %0, %cst_70 {dimension_numbers = #tpu.dot_dimension_numbers<[1], [0], [0], [1], [0, 0, 1, 1], [], []>} : vector<16x16xbf16>, vector<16x4xbf16>, vector<16x4xf32> -> vector<16x4xf32>
      %81 = vector.broadcast %1 : vector<1x4xf32> to vector<16x4xf32>
      %82 = arith.addf %80, %81 : vector<16x4xf32>
      %cst_71 = arith.constant 0.000000e+00 : f32
      %83 = vector.broadcast %cst_71 : f32 to vector<16x4xf32>
      %84 = arith.maximumf %82, %83 : vector<16x4xf32>
      %85 = arith.truncf %84 : vector<16x4xf32> to vector<16x4xbf16>
      %c0_72 = arith.constant 0 : index
      %c1_73 = arith.constant 1 : index
      %c0_74 = arith.constant 0 : index
      %86 = vector.load %arg10[%c0_72, %c1_73, %c0_74] : memref<18x18x4xbf16, #tpu.memory_space<vmem>>, vector<1x16x4xbf16>
      %87 = vector.shape_cast %86 : vector<1x16x4xbf16> to vector<16x4xbf16>
      %88 = vector.shape_cast %85 : vector<16x4xbf16> to vector<1x16x4xbf16>
      tpu.vector_store %arg10[%c0_72, %c1_73, %c0_74], %88 {strides = array<i32>} : memref<18x18x4xbf16, #tpu.memory_space<vmem>>, vector<1x16x4xbf16>,
    } else {
    }
    %c0_i32_15 = arith.constant 0 : i32
    %21 = arith.cmpi eq, %arg1, %c0_i32_15 : i32
    %22 = arith.extui %21 : i1 to i32
    %c0_i32_16 = arith.constant 0 : i32
    %23 = arith.cmpi ne, %22, %c0_i32_16 : i32
    scf.if %23 {
      %cst_67 = arith.constant 0.000000e+00 : bf16
      %74 = vector.broadcast %cst_67 : bf16 to vector<16x4xbf16>
      %c0_68 = arith.constant 0 : index
      %c1_69 = arith.constant 1 : index
      %c0_70 = arith.constant 0 : index
      %75 = vector.load %arg10[%c0_68, %c1_69, %c0_70] : memref<18x18x4xbf16, #tpu.memory_space<vmem>>, vector<1x16x4xbf16>
      %76 = vector.shape_cast %75 : vector<1x16x4xbf16> to vector<16x4xbf16>
      %77 = vector.shape_cast %74 : vector<16x4xbf16> to vector<1x16x4xbf16>
      tpu.vector_store %arg10[%c0_68, %c1_69, %c0_70], %77 {strides = array<i32>} : memref<18x18x4xbf16, #tpu.memory_space<vmem>>, vector<1x16x4xbf16>,
    } else {
    }
    %c0_i32_17 = arith.constant 0 : i32
    %24 = arith.cmpi slt, %arg1, %c0_i32_17 : i32
    %25 = arith.extui %24 : i1 to i32
    %c0_i32_18 = arith.constant 0 : i32
    %26 = arith.cmpi ne, %25, %c0_i32_18 : i32
    scf.if %26 {
      %c1_i32 = arith.constant 1 : i32
      %74 = arith.addi %arg1, %c1_i32 : i32
      %c256_i32_67 = arith.constant 256 : i32
      %75 = arith.muli %74, %c256_i32_67 : i32
      %76 = tpu.assume_multiple %75, 256 : i32
      %c0_68 = arith.constant 0 : index
      %77 = arith.index_cast %76 : i32 to index
      %c0_69 = arith.constant 0 : index
      %78 = vector.load %arg2[%c0_68, %77, %c0_69] : memref<1x256x16xbf16, #tpu.memory_space<vmem>>, vector<1x16x16xbf16>
      %79 = vector.shape_cast %78 : vector<1x16x16xbf16> to vector<16x16xbf16>
      %cst_70 = arith.constant dense<0.000000e+00> : vector<16x4xf32>
      %80 = tpu.matmul %79, %0, %cst_70 {dimension_numbers = #tpu.dot_dimension_numbers<[1], [0], [0], [1], [0, 0, 1, 1], [], []>} : vector<16x16xbf16>, vector<16x4xbf16>, vector<16x4xf32> -> vector<16x4xf32>
      %81 = vector.broadcast %1 : vector<1x4xf32> to vector<16x4xf32>
      %82 = arith.addf %80, %81 : vector<16x4xf32>
      %cst_71 = arith.constant 0.000000e+00 : f32
      %83 = vector.broadcast %cst_71 : f32 to vector<16x4xf32>
      %84 = arith.maximumf %82, %83 : vector<16x4xf32>
      %85 = arith.truncf %84 : vector<16x4xf32> to vector<16x4xbf16>
      %c17_72 = arith.constant 17 : index
      %c1_73 = arith.constant 1 : index
      %c0_74 = arith.constant 0 : index
      %86 = vector.load %arg10[%c17_72, %c1_73, %c0_74] : memref<18x18x4xbf16, #tpu.memory_space<vmem>>, vector<1x16x4xbf16>
      %87 = vector.shape_cast %86 : vector<1x16x4xbf16> to vector<16x4xbf16>
      %88 = vector.shape_cast %85 : vector<16x4xbf16> to vector<1x16x4xbf16>
      tpu.vector_store %arg10[%c17_72, %c1_73, %c0_74], %88 {strides = array<i32>} : memref<18x18x4xbf16, #tpu.memory_space<vmem>>, vector<1x16x4xbf16>,
    } else {
    }
    %c0_i32_19 = arith.constant 0 : i32
    %27 = arith.cmpi eq, %arg1, %c0_i32_19 : i32
    %28 = arith.extui %27 : i1 to i32
    %c0_i32_20 = arith.constant 0 : i32
    %29 = arith.cmpi ne, %28, %c0_i32_20 : i32
    scf.if %29 {
      %cst_67 = arith.constant 0.000000e+00 : bf16
      %74 = vector.broadcast %cst_67 : bf16 to vector<16x4xbf16>
      %c17_68 = arith.constant 17 : index
      %c1_69 = arith.constant 1 : index
      %c0_70 = arith.constant 0 : index
      %75 = vector.load %arg10[%c17_68, %c1_69, %c0_70] : memref<18x18x4xbf16, #tpu.memory_space<vmem>>, vector<1x16x4xbf16>
      %76 = vector.shape_cast %75 : vector<1x16x4xbf16> to vector<16x4xbf16>
      %77 = vector.shape_cast %74 : vector<16x4xbf16> to vector<1x16x4xbf16>
      tpu.vector_store %arg10[%c17_68, %c1_69, %c0_70], %77 {strides = array<i32>} : memref<18x18x4xbf16, #tpu.memory_space<vmem>>, vector<1x16x4xbf16>,
    } else {
    }
    %c0_21 = arith.constant 0 : index
    %c0_22 = arith.constant 0 : index
    %c0_23 = arith.constant 0 : index
    %30 = vector.load %arg10[%c0_21, %c0_22, %c0_23] : memref<18x18x4xbf16, #tpu.memory_space<vmem>>, vector<18x16x4xbf16>
    %c0_24 = arith.constant 0 : index
    %c1_25 = arith.constant 1 : index
    %c0_26 = arith.constant 0 : index
    %31 = vector.load %arg10[%c0_24, %c1_25, %c0_26] : memref<18x18x4xbf16, #tpu.memory_space<vmem>>, vector<18x16x4xbf16>
    %c0_27 = arith.constant 0 : index
    %c2 = arith.constant 2 : index
    %c0_28 = arith.constant 0 : index
    %32 = vector.load %arg10[%c0_27, %c2, %c0_28] : memref<18x18x4xbf16, #tpu.memory_space<vmem>>, vector<18x16x4xbf16>
    %33 = tpu.concatenate %30, %31, %32 in 2 : vector<18x16x4xbf16>, vector<18x16x4xbf16>, vector<18x16x4xbf16> -> vector<18x16x12xbf16>
    %c0_29 = arith.constant 0 : index
    %c0_30 = arith.constant 0 : index
    %c0_31 = arith.constant 0 : index
    %34 = vector.load %arg11[%c0_29, %c0_30, %c0_31] : memref<18x16x12xbf16, #tpu.memory_space<vmem>>, vector<18x16x12xbf16>
    tpu.vector_store %arg11[%c0_29, %c0_30, %c0_31], %33 {strides = array<i32>} : memref<18x16x12xbf16, #tpu.memory_space<vmem>>, vector<18x16x12xbf16>,
    %c0_32 = arith.constant 0 : index
    %c0_33 = arith.constant 0 : index
    %c0_34 = arith.constant 0 : index
    %35 = vector.load %arg11[%c0_32, %c0_33, %c0_34] : memref<18x16x12xbf16, #tpu.memory_space<vmem>>, vector<16x16x12xbf16>
    %36 = vector.shape_cast %35 : vector<16x16x12xbf16> to vector<256x12xbf16>
    %c0_35 = arith.constant 0 : index
    %c0_36 = arith.constant 0 : index
    %c0_37 = arith.constant 0 : index
    %37 = vector.load %arg5[%c0_35, %c0_36, %c0_37] : memref<3x12x4xbf16, #tpu.memory_space<vmem>>, vector<1x12x4xbf16>
    %38 = vector.shape_cast %37 : vector<1x12x4xbf16> to vector<12x4xbf16>
    %cst_38 = arith.constant dense<0.000000e+00> : vector<256x4xf32>
    %39 = tpu.matmul %36, %38, %cst_38 {dimension_numbers = #tpu.dot_dimension_numbers<[1], [0], [0], [1], [0, 0, 1, 1], [], []>} : vector<256x12xbf16>, vector<12x4xbf16>, vector<256x4xf32> -> vector<256x4xf32>
    %c1_39 = arith.constant 1 : index
    %c0_40 = arith.constant 0 : index
    %c0_41 = arith.constant 0 : index
    %40 = vector.load %arg11[%c1_39, %c0_40, %c0_41] : memref<18x16x12xbf16, #tpu.memory_space<vmem>>, vector<16x16x12xbf16>
    %41 = vector.shape_cast %40 : vector<16x16x12xbf16> to vector<256x12xbf16>
    %c1_42 = arith.constant 1 : index
    %c0_43 = arith.constant 0 : index
    %c0_44 = arith.constant 0 : index
    %42 = vector.load %arg5[%c1_42, %c0_43, %c0_44] : memref<3x12x4xbf16, #tpu.memory_space<vmem>>, vector<1x12x4xbf16>
    %43 = vector.shape_cast %42 : vector<1x12x4xbf16> to vector<12x4xbf16>
    %cst_45 = arith.constant dense<0.000000e+00> : vector<256x4xf32>
    %44 = tpu.matmul %41, %43, %cst_45 {dimension_numbers = #tpu.dot_dimension_numbers<[1], [0], [0], [1], [0, 0, 1, 1], [], []>} : vector<256x12xbf16>, vector<12x4xbf16>, vector<256x4xf32> -> vector<256x4xf32>
    %45 = arith.addf %39, %44 : vector<256x4xf32>
    %c2_46 = arith.constant 2 : index
    %c0_47 = arith.constant 0 : index
    %c0_48 = arith.constant 0 : index
    %46 = vector.load %arg11[%c2_46, %c0_47, %c0_48] : memref<18x16x12xbf16, #tpu.memory_space<vmem>>, vector<16x16x12xbf16>
    %47 = vector.shape_cast %46 : vector<16x16x12xbf16> to vector<256x12xbf16>
    %c2_49 = arith.constant 2 : index
    %c0_50 = arith.constant 0 : index
    %c0_51 = arith.constant 0 : index
    %48 = vector.load %arg5[%c2_49, %c0_50, %c0_51] : memref<3x12x4xbf16, #tpu.memory_space<vmem>>, vector<1x12x4xbf16>
    %49 = vector.shape_cast %48 : vector<1x12x4xbf16> to vector<12x4xbf16>
    %cst_52 = arith.constant dense<0.000000e+00> : vector<256x4xf32>
    %50 = tpu.matmul %47, %49, %cst_52 {dimension_numbers = #tpu.dot_dimension_numbers<[1], [0], [0], [1], [0, 0, 1, 1], [], []>} : vector<256x12xbf16>, vector<12x4xbf16>, vector<256x4xf32> -> vector<256x4xf32>
    %51 = arith.addf %45, %50 : vector<256x4xf32>
    %c0_53 = arith.constant 0 : index
    %c0_54 = arith.constant 0 : index
    %52 = vector.load %arg6[%c0_53, %c0_54] : memref<1x4xf32, #tpu.memory_space<vmem>>, vector<1x4xf32>
    %53 = vector.broadcast %52 : vector<1x4xf32> to vector<256x4xf32>
    %54 = arith.addf %51, %53 : vector<256x4xf32>
    %cst_55 = arith.constant 0.000000e+00 : f32
    %55 = vector.broadcast %cst_55 : f32 to vector<256x4xf32>
    %56 = arith.maximumf %54, %55 : vector<256x4xf32>
    %57 = arith.truncf %56 : vector<256x4xf32> to vector<256x4xbf16>
    %c0_56 = arith.constant 0 : index
    %c0_57 = arith.constant 0 : index
    %58 = vector.load %arg7[%c0_56, %c0_57] : memref<4x16xbf16, #tpu.memory_space<vmem>>, vector<4x16xbf16>
    %cst_58 = arith.constant dense<0.000000e+00> : vector<256x16xf32>
    %59 = tpu.matmul %57, %58, %cst_58 {dimension_numbers = #tpu.dot_dimension_numbers<[1], [0], [0], [1], [0, 0, 1, 1], [], []>} : vector<256x4xbf16>, vector<4x16xbf16>, vector<256x16xf32> -> vector<256x16xf32>
    %c0_59 = arith.constant 0 : index
    %60 = arith.index_cast %6 : i32 to index
    %c0_60 = arith.constant 0 : index
    %61 = vector.load %arg2[%c0_59, %60, %c0_60] : memref<1x256x16xbf16, #tpu.memory_space<vmem>>, vector<1x256x16xbf16>
    %62 = vector.shape_cast %61 : vector<1x256x16xbf16> to vector<256x16xbf16>
    %63 = arith.extf %62 : vector<256x16xbf16> to vector<256x16xf32>
    %c0_61 = arith.constant 0 : index
    %c0_62 = arith.constant 0 : index
    %64 = vector.load %arg8[%c0_61, %c0_62] : memref<1x16xf32, #tpu.memory_space<vmem>>, vector<1x16xf32>
    %65 = vector.broadcast %64 : vector<1x16xf32> to vector<256x16xf32>
    %66 = arith.addf %59, %65 : vector<256x16xf32>
    %67 = arith.addf %66, %63 : vector<256x16xf32>
    %cst_63 = arith.constant 0.000000e+00 : f32
    %68 = vector.broadcast %cst_63 : f32 to vector<256x16xf32>
    %69 = arith.maximumf %67, %68 : vector<256x16xf32>
    %70 = arith.truncf %69 : vector<256x16xf32> to vector<256x16xbf16>
    %c0_64 = arith.constant 0 : index
    %c0_65 = arith.constant 0 : index
    %c0_66 = arith.constant 0 : index
    %71 = vector.load %arg9[%c0_64, %c0_65, %c0_66] : memref<1x256x16xbf16, #tpu.memory_space<vmem>>, vector<1x256x16xbf16>
    %72 = vector.shape_cast %71 : vector<1x256x16xbf16> to vector<256x16xbf16>
    %73 = vector.shape_cast %70 : vector<256x16xbf16> to vector<1x256x16xbf16>
    tpu.vector_store %arg9[%c0_64, %c0_65, %c0_66], %73 {strides = array<i32>} : memref<1x256x16xbf16, #tpu.memory_space<vmem>>, vector<1x256x16xbf16>,
    return
  }
  func.func @transform_0(%arg0: i32, %arg1: i32) -> (i32, i32, i32) {
    %c0_i32 = arith.constant 0 : i32
    %c0_i32_0 = arith.constant 0 : i32
    %c0_i32_1 = arith.constant 0 : i32
    return %arg0, %c0_i32, %c0_i32_0 : i32, i32, i32
  }
  func.func @transform_1(%arg0: i32, %arg1: i32) -> (i32, i32) {
    %c0_i32 = arith.constant 0 : i32
    %c0_i32_0 = arith.constant 0 : i32
    %c0_i32_1 = arith.constant 0 : i32
    return %c0_i32, %c0_i32_0 : i32, i32
  }
  func.func @transform_2(%arg0: i32, %arg1: i32) -> (i32, i32) {
    %c0_i32 = arith.constant 0 : i32
    %c0_i32_0 = arith.constant 0 : i32
    %c0_i32_1 = arith.constant 0 : i32
    return %c0_i32, %c0_i32_0 : i32, i32
  }
  func.func @transform_3(%arg0: i32, %arg1: i32) -> (i32, i32, i32) {
    %c0_i32 = arith.constant 0 : i32
    %c0_i32_0 = arith.constant 0 : i32
    %c0_i32_1 = arith.constant 0 : i32
    %c0_i32_2 = arith.constant 0 : i32
    return %c0_i32, %c0_i32_0, %c0_i32_1 : i32, i32, i32
  }
  func.func @transform_4(%arg0: i32, %arg1: i32) -> (i32, i32) {
    %c0_i32 = arith.constant 0 : i32
    %c0_i32_0 = arith.constant 0 : i32
    %c0_i32_1 = arith.constant 0 : i32
    return %c0_i32, %c0_i32_0 : i32, i32
  }
  func.func @transform_5(%arg0: i32, %arg1: i32) -> (i32, i32) {
    %c0_i32 = arith.constant 0 : i32
    %c0_i32_0 = arith.constant 0 : i32
    %c0_i32_1 = arith.constant 0 : i32
    return %c0_i32, %c0_i32_0 : i32, i32
  }
  func.func @transform_6(%arg0: i32, %arg1: i32) -> (i32, i32) {
    %c0_i32 = arith.constant 0 : i32
    %c0_i32_0 = arith.constant 0 : i32
    %c0_i32_1 = arith.constant 0 : i32
    return %c0_i32, %c0_i32_0 : i32, i32
  }
  func.func @transform_7(%arg0: i32, %arg1: i32) -> (i32, i32, i32) {
    %c0_i32 = arith.constant 0 : i32
    %c0_i32_0 = arith.constant 0 : i32
    return %arg0, %arg1, %c0_i32 : i32, i32, i32
  }
}

</mosaic_0001>

<llo_original>
// kernel: tpu_custom_call.1
$region0: #{tpu_custom_call.1}
  #allocation0 [shape = 'u32[]', space=smem, size = 0x4, offset = 0x4, fixed_abs, tag = 'smem constant byte address 0x4 - core index']
  #allocation1 [shape = 'u32[144,128]{1,0:T(1,128)}', space=vmem, size = 0x12000, scoped, tag = 'internal scratch']
  #allocation2 [shape = 'bf16[18,18,4]{2,1,0:T(8,128)(2,1)}', space=vmem, size = 0x1b000, scoped, tag = 'scratch operand']
  #allocation3 [shape = 'bf16[18,16,12]{2,1,0:T(16,128)(2,1)}', space=vmem, size = 0x12000, scoped, tag = 'scratch operand']
  %s0 = inlined_call_operand.vmem [shape: bf16[2,256,16], index: 0, kind: input, shape index: {}]
  %s1 = inlined_call_operand.vmem [shape: bf16[16,4], index: 1, kind: input, shape index: {}]
  %s2 = inlined_call_operand.vmem [shape: f32[1,4], index: 2, kind: input, shape index: {}]
  %s3 = inlined_call_operand.vmem [shape: bf16[3,12,4], index: 3, kind: input, shape index: {}]
  %s4 = inlined_call_operand.vmem [shape: f32[1,4], index: 4, kind: input, shape index: {}]
  %s5 = inlined_call_operand.vmem [shape: bf16[4,16], index: 5, kind: input, shape index: {}]
  %s6 = inlined_call_operand.vmem [shape: f32[1,16], index: 6, kind: input, shape index: {}]
  %s7 = inlined_call_operand.vmem [shape: bf16[2,256,16], index: 7, kind: output, shape index: {}]
  %s8 = sld [smem:[#allocation0]]
  $region77: #{tpu_custom_call.1} parent=0
    _
  %s10 = ssub.s32 1, %s8
  %s11 = scalar_select 0, %s10, %s8
  loop: start=0, step=1, limit=4
  $region2: #{tpu_custom_call.1} parent=0 // loop_pre_header
    _
  $region3: #{tpu_custom_call.1} parent=0 // loop_header
    %s13 = sphi 0, %s17
    %p14 = scmp.ge.s32.totalorder %s13, 4
    %s20 = sphi 0, %s32
    %s21 = sphi 0, %s28
    %s22 = sphi 0, %s20
    %s23 = sphi 0, %s21
    %s24 = sphi 0, %s22
    %s25 = sphi 0, %s23
    %s35 = sphi 0, %s37
    %s38 = sphi 0, %s35
    %s39 = sphi 0, %s38
    %s55 = sphi 0, %s39
    %s59 = sphi 0, %s59
    %s61 = sphi 0, %s59
    %s62 = sphi 0, %s61
    %s76 = sphi 0, %s62
    %s80 = sphi 0, %s80
    %s82 = sphi 0, %s80
    %s83 = sphi 0, %s82
    %s97 = sphi 0, %s83
    %s101 = sphi 0, %s101
    %s103 = sphi 0, %s101
    %s104 = sphi 0, %s103
    %s118 = sphi 0, %s104
    %s122 = sphi 0, %s122
    %s124 = sphi 0, %s122
    %s125 = sphi 0, %s124
    %s139 = sphi 0, %s125
    %s143 = sphi 0, %s143
    %s145 = sphi 0, %s143
    %s146 = sphi 0, %s145
    %s160 = sphi 0, %s146
    %s164 = sphi 0, %s164
    %s166 = sphi 0, %s164
    %s167 = sphi 0, %s166
    %s181 = sphi 0, %s167
    %s189 = sphi 0, %s191
    %s192 = sphi 0, %s189
    %s193 = sphi 0, %s192
    %s209 = sphi 0, %s193
  $region4: #{tpu_custom_call.1} parent=0 // loop_header_branch
    %16 = sbr.rel (%p14) target = $region8
  $region5: #{tpu_custom_call.1} parent=0 // loop_body
    %s18 = ssub.s32 %s13, 1
    %s19 = ssub.s32 %s13, 2
    %s26 = sadd.s32 1, %s21
    %p27 = scmp.ge.s32.totalorder %s26, 1
    %s28 = scalar_select %p27, 0, %s26
    %s29 = sadd.s32 1, %s20
    %s30 = scalar_select %p27, %s29, %s20
    %p31 = scmp.ge.s32.totalorder %s30, 2
    %s32 = scalar_select %p31, 0, %s30
    %s33 = ssub.s32 %s20, %s32
    %p34 = scmp.eq.s32.totalorder %s33, 0
    %s36 = sadd.s32 %s35, 1
    %s37 = scalar_select %p34, %s35, %s36
    %p40 = pneg %p34
    %p41 = scmp.eq.s32.totalorder %s13, 1
    %p42 = por %p40, %p41
    %p43 = scmp.ne.s32.totalorder %s35, %s38
    %p44 = scmp.eq.s32.totalorder %s13, 0
    %p45 = por %p43, %p44
    %p46 = scmp.ne.s32.totalorder %s35, %s38
    %p47 = scmp.eq.s32.totalorder %s18, 1
    %p48 = por %p46, %p47
    %p49 = scmp.ne.s32.totalorder %s38, %s39
    %p50 = scmp.eq.s32.totalorder %s18, 0
    %p51 = por %p49, %p50
    %p52 = scmp.ne.s32.totalorder %s38, %s39
    %p53 = scmp.eq.s32.totalorder %s19, 1
    %p54 = por %p52, %p53
    %p56 = scmp.ne.s32.totalorder %s39, %s55
    %p57 = scmp.eq.s32.totalorder %s19, 0
    %p58 = por %p56, %p57
    %s60 = sadd.s32 %s59, 1
    %p63 = scmp.eq.s32.totalorder %s13, 1
    %p64 = scmp.ne.s32.totalorder %s59, %s61
    %p65 = scmp.eq.s32.totalorder %s13, 0
    %p66 = por %p64, %p65
    %p67 = scmp.ne.s32.totalorder %s59, %s61
    %p68 = scmp.eq.s32.totalorder %s18, 1
    %p69 = por %p67, %p68
    %p70 = scmp.ne.s32.totalorder %s61, %s62
    %p71 = scmp.eq.s32.totalorder %s18, 0
    %p72 = por %p70, %p71
    %p73 = scmp.ne.s32.totalorder %s61, %s62
    %p74 = scmp.eq.s32.totalorder %s19, 1
    %p75 = por %p73, %p74
    %p77 = scmp.ne.s32.totalorder %s62, %s76
    %p78 = scmp.eq.s32.totalorder %s19, 0
    %p79 = por %p77, %p78
    %s81 = sadd.s32 %s80, 1
    %p84 = scmp.eq.s32.totalorder %s13, 1
    %p85 = scmp.ne.s32.totalorder %s80, %s82
    %p86 = scmp.eq.s32.totalorder %s13, 0
    %p87 = por %p85, %p86
    %p88 = scmp.ne.s32.totalorder %s80, %s82
    %p89 = scmp.eq.s32.totalorder %s18, 1
    %p90 = por %p88, %p89
    %p91 = scmp.ne.s32.totalorder %s82, %s83
    %p92 = scmp.eq.s32.totalorder %s18, 0
    %p93 = por %p91, %p92
    %p94 = scmp.ne.s32.totalorder %s82, %s83
    %p95 = scmp.eq.s32.totalorder %s19, 1
    %p96 = por %p94, %p95
    %p98 = scmp.ne.s32.totalorder %s83, %s97
    %p99 = scmp.eq.s32.totalorder %s19, 0
    %p100 = por %p98, %p99
    %s102 = sadd.s32 %s101, 1
    %p105 = scmp.eq.s32.totalorder %s13, 1
    %p106 = scmp.ne.s32.totalorder %s101, %s103
    %p107 = scmp.eq.s32.totalorder %s13, 0
    %p108 = por %p106, %p107
    %p109 = scmp.ne.s32.totalorder %s101, %s103
    %p110 = scmp.eq.s32.totalorder %s18, 1
    %p111 = por %p109, %p110
    %p112 = scmp.ne.s32.totalorder %s103, %s104
    %p113 = scmp.eq.s32.totalorder %s18, 0
    %p114 = por %p112, %p113
    %p115 = scmp.ne.s32.totalorder %s103, %s104
    %p116 = scmp.eq.s32.totalorder %s19, 1
    %p117 = por %p115, %p116
    %p119 = scmp.ne.s32.totalorder %s104, %s118
    %p120 = scmp.eq.s32.totalorder %s19, 0
    %p121 = por %p119, %p120
    %s123 = sadd.s32 %s122, 1
    %p126 = scmp.eq.s32.totalorder %s13, 1
    %p127 = scmp.ne.s32.totalorder %s122, %s124
    %p128 = scmp.eq.s32.totalorder %s13, 0
    %p129 = por %p127, %p128
    %p130 = scmp.ne.s32.totalorder %s122, %s124
    %p131 = scmp.eq.s32.totalorder %s18, 1
    %p132 = por %p130, %p131
    %p133 = scmp.ne.s32.totalorder %s124, %s125
    %p134 = scmp.eq.s32.totalorder %s18, 0
    %p135 = por %p133, %p134
    %p136 = scmp.ne.s32.totalorder %s124, %s125
    %p137 = scmp.eq.s32.totalorder %s19, 1
    %p138 = por %p136, %p137
    %p140 = scmp.ne.s32.totalorder %s125, %s139
    %p141 = scmp.eq.s32.totalorder %s19, 0
    %p142 = por %p140, %p141
    %s144 = sadd.s32 %s143, 1
    %p147 = scmp.eq.s32.totalorder %s13, 1
    %p148 = scmp.ne.s32.totalorder %s143, %s145
    %p149 = scmp.eq.s32.totalorder %s13, 0
    %p150 = por %p148, %p149
    %p151 = scmp.ne.s32.totalorder %s143, %s145
    %p152 = scmp.eq.s32.totalorder %s18, 1
    %p153 = por %p151, %p152
    %p154 = scmp.ne.s32.totalorder %s145, %s146
    %p155 = scmp.eq.s32.totalorder %s18, 0
    %p156 = por %p154, %p155
    %p157 = scmp.ne.s32.totalorder %s145, %s146
    %p158 = scmp.eq.s32.totalorder %s19, 1
    %p159 = por %p157, %p158
    %p161 = scmp.ne.s32.totalorder %s146, %s160
    %p162 = scmp.eq.s32.totalorder %s19, 0
    %p163 = por %p161, %p162
    %s165 = sadd.s32 %s164, 1
    %p168 = scmp.eq.s32.totalorder %s13, 1
    %p169 = scmp.ne.s32.totalorder %s164, %s166
    %p170 = scmp.eq.s32.totalorder %s13, 0
    %p171 = por %p169, %p170
    %p172 = scmp.ne.s32.totalorder %s164, %s166
    %p173 = scmp.eq.s32.totalorder %s18, 1
    %p174 = por %p172, %p173
    %p175 = scmp.ne.s32.totalorder %s166, %s167
    %p176 = scmp.eq.s32.totalorder %s18, 0
    %p177 = por %p175, %p176
    %p178 = scmp.ne.s32.totalorder %s166, %s167
    %p179 = scmp.eq.s32.totalorder %s19, 1
    %p180 = por %p178, %p179
    %p182 = scmp.ne.s32.totalorder %s167, %s181
    %p183 = scmp.eq.s32.totalorder %s19, 0
    %p184 = por %p182, %p183
    %s185 = ssub.s32 %s20, %s32
    %s186 = ssub.s32 %s21, %s28
    %s187 = sor.u32 %s185, %s186
    %p188 = scmp.eq.s32.totalorder %s187, 0
    %s190 = sadd.s32 %s189, 1
    %s191 = scalar_select %p188, %s189, %s190
    %p194 = pneg %p188
    %p195 = scmp.eq.s32.totalorder %s13, 1
    %p196 = por %p194, %p195
    %p197 = scmp.ne.s32.totalorder %s189, %s192
    %p198 = scmp.eq.s32.totalorder %s13, 0
    %p199 = por %p197, %p198
    %p200 = scmp.ne.s32.totalorder %s189, %s192
    %p201 = scmp.eq.s32.totalorder %s18, 1
    %p202 = por %p200, %p201
    %p203 = scmp.ne.s32.totalorder %s192, %s193
    %p204 = scmp.eq.s32.totalorder %s18, 0
    %p205 = por %p203, %p204
    %p206 = scmp.ne.s32.totalorder %s192, %s193
    %p207 = scmp.eq.s32.totalorder %s19, 1
    %p208 = por %p206, %p207
    %p210 = scmp.ne.s32.totalorder %s193, %s209
    %p211 = scmp.eq.s32.totalorder %s19, 0
    %p212 = por %p210, %p211
    %p213 = scmp.le.s32.totalorder 1, %s13
    %p214 = scmp.lt.s32.totalorder %s13, 3
    %p215 = pnand %p213, %p214
    %p216 = pneg %p215
    // Predicated region
    $region9: #{tpu_custom_call.1} parent=5 // pred_check
      _
    $region10: #{tpu_custom_call.1} parent=5 // pred_check_branch
      %218 = sbr.rel (%p215) target = $region12
    $region11: #{tpu_custom_call.1} parent=5 // pred_region
      %s219 = ssub.s32 %s13, 1
      // Predicated region
      $region13: #{tpu_custom_call.1} parent=11 // pred_check
        %p220 = pneg %p72
      $region14: #{tpu_custom_call.1} parent=11 // pred_check_branch
        %222 = sbr.rel (%p220) target = $region16
      $region15: #{tpu_custom_call.1} parent=11 // pred_region
        _
      $region16: #{tpu_custom_call.1} parent=11 // pred_fallthru
        _
      // Predicated region
      $region17: #{tpu_custom_call.1} parent=11 // pred_check
        %p223 = pneg %p93
      $region18: #{tpu_custom_call.1} parent=11 // pred_check_branch
        %225 = sbr.rel (%p223) target = $region20
      $region19: #{tpu_custom_call.1} parent=11 // pred_region
        _
      $region20: #{tpu_custom_call.1} parent=11 // pred_fallthru
        _
      // Predicated region
      $region21: #{tpu_custom_call.1} parent=11 // pred_check
        %p226 = pneg %p114
      $region22: #{tpu_custom_call.1} parent=11 // pred_check_branch
        %228 = sbr.rel (%p226) target = $region24
      $region23: #{tpu_custom_call.1} parent=11 // pred_region
        _
      $region24: #{tpu_custom_call.1} parent=11 // pred_fallthru
        _
      // Predicated region
      $region25: #{tpu_custom_call.1} parent=11 // pred_check
        %p229 = pneg %p135
      $region26: #{tpu_custom_call.1} parent=11 // pred_check_branch
        %231 = sbr.rel (%p229) target = $region28
      $region27: #{tpu_custom_call.1} parent=11 // pred_region
        _
      $region28: #{tpu_custom_call.1} parent=11 // pred_fallthru
        _
      // Predicated region
      $region29: #{tpu_custom_call.1} parent=11 // pred_check
        %p232 = pneg %p156
      $region30: #{tpu_custom_call.1} parent=11 // pred_check_branch
        %234 = sbr.rel (%p232) target = $region32
      $region31: #{tpu_custom_call.1} parent=11 // pred_region
        _
      $region32: #{tpu_custom_call.1} parent=11 // pred_fallthru
        _
      // Predicated region
      $region33: #{tpu_custom_call.1} parent=11 // pred_check
        %p235 = pneg %p177
      $region34: #{tpu_custom_call.1} parent=11 // pred_check_branch
        %237 = sbr.rel (%p235) target = $region36
      $region35: #{tpu_custom_call.1} parent=11 // pred_region
        _
      $region36: #{tpu_custom_call.1} parent=11 // pred_fallthru
        _
    $region12: #{tpu_custom_call.1} parent=5 // pred_fallthru
      _
    %p238 = scmp.lt.s32.totalorder %s13, 2
    // Predicated region
    $region37: #{tpu_custom_call.1} parent=5 // pred_check
      %p239 = pneg %p238
    $region38: #{tpu_custom_call.1} parent=5 // pred_check_branch
      %241 = sbr.rel (%p239) target = $region40
    $region39: #{tpu_custom_call.1} parent=5 // pred_region
      // Predicated region
      $region41: #{tpu_custom_call.1} parent=39 // pred_check
        %p242 = pneg %p45
      $region42: #{tpu_custom_call.1} parent=39 // pred_check_branch
        %244 = sbr.rel (%p242) target = $region44
      $region43: #{tpu_custom_call.1} parent=39 // pred_region
        %p245 = scmp.lt.s32.totalorder %s20, 1
        %s246 = scalar_select %p245, %s20, 1
        %s247 = smul.addr %s246, 32
        %s248 = smul.addr %s247, 4
        %s249 = scalar_lea.vmem %s0, %s248
      $region44: #{tpu_custom_call.1} parent=39 // pred_fallthru
        _
    $region40: #{tpu_custom_call.1} parent=5 // pred_fallthru
      _
    %p250 = scmp.le.s32.totalorder 1, %s13
    %p251 = scmp.lt.s32.totalorder %s13, 3
    %p252 = pnand %p250, %p251
    %p253 = pneg %p252
    // Predicated region
    $region45: #{tpu_custom_call.1} parent=5 // pred_check
      _
    $region46: #{tpu_custom_call.1} parent=5 // pred_check_branch
      %255 = sbr.rel (%p252) target = $region48
    $region47: #{tpu_custom_call.1} parent=5 // pred_region
      %s256 = ssub.s32 %s13, 1
      %p257 = scmp.lt.s32.totalorder %s22, 1
      %s258 = scalar_select %p257, %s22, 1
      %s259 = smul.addr %s258, 32
      %s260 = smul.addr %s259, 4
      %s261 = scalar_lea.vmem %s0, %s260
      %p262 = pneg %p51
      %p263 = pneg %p48
      %p264 = pneg %p72
      %p265 = pneg %p69
      %p266 = pneg %p93
      %p267 = pneg %p90
      %p268 = pneg %p114
      %p269 = pneg %p111
      %p270 = pneg %p135
      %p271 = pneg %p132
      %p272 = pneg %p156
      %p273 = pneg %p153
      %p274 = pneg %p177
      %p275 = pneg %p174
      %p276 = pneg %p205
      %p277 = pneg %p202
      %s278 = smul.u32 32, %s23
      %p279 = scmp.lt.s32.totalorder %s22, 1
      %s280 = scalar_select %p279, %s22, 1
      %p281 = scmp.lt.s32.totalorder %s278, 31
      %s282 = scalar_select %p281, %s278, 31
      %s283 = smul.addr %s280, 32
      %s284 = sadd.s32 %s282, %s283
      %s285 = smul.addr %s284, 4
      %s286 = scalar_lea.vmem %s7, %s285
      %p287 = scmp.lt.s32.totalorder %s22, 1
      %s288 = scalar_select %p287, %s22, 1
      %s289 = smul.addr %s288, 32
      %s290 = smul.addr %s289, 4
      %s291 = scalar_lea.vmem %s0, %s290
      %s292 = smul.u32 32, %s23
      %p293 = scmp.lt.s32.totalorder %s22, 1
      %s294 = scalar_select %p293, %s22, 1
      %p295 = scmp.lt.s32.totalorder %s292, 31
      %s296 = scalar_select %p295, %s292, 31
      %s297 = smul.addr %s294, 32
      %s298 = sadd.s32 %s296, %s297
      %s299 = smul.addr %s298, 4
      %s300 = scalar_lea.vmem %s7, %s299
      %s301 = smul.u32 32, %s23
      %v303 = vld [vmem:[%s1] sm:$0xf]
      %v304 = vld [vmem:[%s1 + $0x4] sm:$0xf]
      %v305 = vld [vmem:[%s2] sm:$0x1]
      %vm306 = vcmask 24576
      %vm307 = vsmask.f32 256
      %vm308 = vmand %vm306, %vm307
      %v309 = vld [vmem:[#allocation2] sm:$0x1]
      %v310 = vsel %vm308, 0, %v309
      %311 = vst [vmem:[#allocation2] sm:$0x1] %v310
      %v312 = vld [vmem:[#allocation2 + $0xc] sm:$0x1]
      %v313 = vsel %vm308, 0, %v312
      %314 = vst [vmem:[#allocation2 + $0xc] sm:$0x1] %v313
      %v315 = vld [vmem:[#allocation2 + $0x18] sm:$0x1]
      %v316 = vsel %vm308, 0, %v315
      %317 = vst [vmem:[#allocation2 + $0x18] sm:$0x1] %v316
      %v318 = vld [vmem:[#allocation2 + $0x24] sm:$0x1]
      %v319 = vsel %vm308, 0, %v318
      %320 = vst [vmem:[#allocation2 + $0x24] sm:$0x1] %v319
      %v321 = vld [vmem:[#allocation2 + $0x30] sm:$0x1]
      %v322 = vsel %vm308, 0, %v321
      %323 = vst [vmem:[#allocation2 + $0x30] sm:$0x1] %v322
      %v324 = vld [vmem:[#allocation2 + $0x3c] sm:$0x1]
      %v325 = vsel %vm308, 0, %v324
      %326 = vst [vmem:[#allocation2 + $0x3c] sm:$0x1] %v325
      %v327 = vld [vmem:[#allocation2 + $0x48] sm:$0x1]
      %v328 = vsel %vm308, 0, %v327
      %329 = vst [vmem:[#allocation2 + $0x48] sm:$0x1] %v328
      %v330 = vld [vmem:[#allocation2 + $0x54] sm:$0x1]
      %v331 = vsel %vm308, 0, %v330
      %332 = vst [vmem:[#allocation2 + $0x54] sm:$0x1] %v331
      %v333 = vld [vmem:[#allocation2 + $0x60] sm:$0x1]
      %v334 = vsel %vm308, 0, %v333
      %335 = vst [vmem:[#allocation2 + $0x60] sm:$0x1] %v334
      %v336 = vld [vmem:[#allocation2 + $0x6c] sm:$0x1]
      %v337 = vsel %vm308, 0, %v336
      %338 = vst [vmem:[#allocation2 + $0x6c] sm:$0x1] %v337
      %v339 = vld [vmem:[#allocation2 + $0x78] sm:$0x1]
      %v340 = vsel %vm308, 0, %v339
      %341 = vst [vmem:[#allocation2 + $0x78] sm:$0x1] %v340
      %v342 = vld [vmem:[#allocation2 + $0x84] sm:$0x1]
      %v343 = vsel %vm308, 0, %v342
      %344 = vst [vmem:[#allocation2 + $0x84] sm:$0x1] %v343
      %v345 = vld [vmem:[#allocation2 + $0x90] sm:$0x1]
      %v346 = vsel %vm308, 0, %v345
      %347 = vst [vmem:[#allocation2 + $0x90] sm:$0x1] %v346
      %v348 = vld [vmem:[#allocation2 + $0x9c] sm:$0x1]
      %v349 = vsel %vm308, 0, %v348
      %350 = vst [vmem:[#allocation2 + $0x9c] sm:$0x1] %v349
      %v351 = vld [vmem:[#allocation2 + $0xa8] sm:$0x1]
      %v352 = vsel %vm308, 0, %v351
      %353 = vst [vmem:[#allocation2 + $0xa8] sm:$0x1] %v352
      %v354 = vld [vmem:[#allocation2 + $0xb4] sm:$0x1]
      %v355 = vsel %vm308, 0, %v354
      %356 = vst [vmem:[#allocation2 + $0xb4] sm:$0x1] %v355
      %v357 = vld [vmem:[#allocation2 + $0xc0] sm:$0x1]
      %v358 = vsel %vm308, 0, %v357
      %359 = vst [vmem:[#allocation2 + $0xc0] sm:$0x1] %v358
      %v360 = vld [vmem:[#allocation2 + $0xcc] sm:$0x1]
      %v361 = vsel %vm308, 0, %v360
      %362 = vst [vmem:[#allocation2 + $0xcc] sm:$0x1] %v361
      %vm363 = vsmask.f32 7938
      %vm364 = vmand %vm306, %vm363
      %v365 = vld [vmem:[#allocation2 + $0x8] sm:$0x1]
      %v366 = vsel %vm364, 0, %v365
      %367 = vst [vmem:[#allocation2 + $0x8] sm:$0x1] %v366
      %v368 = vld [vmem:[#allocation2 + $0x14] sm:$0x1]
      %v369 = vsel %vm364, 0, %v368
      %370 = vst [vmem:[#allocation2 + $0x14] sm:$0x1] %v369
      %v371 = vld [vmem:[#allocation2 + $0x20] sm:$0x1]
      %v372 = vsel %vm364, 0, %v371
      %373 = vst [vmem:[#allocation2 + $0x20] sm:$0x1] %v372
      %v374 = vld [vmem:[#allocation2 + $0x2c] sm:$0x1]
      %v375 = vsel %vm364, 0, %v374
      %376 = vst [vmem:[#allocation2 + $0x2c] sm:$0x1] %v375
      %v377 = vld [vmem:[#allocation2 + $0x38] sm:$0x1]
      %v378 = vsel %vm364, 0, %v377
      %379 = vst [vmem:[#allocation2 + $0x38] sm:$0x1] %v378
      %v380 = vld [vmem:[#allocation2 + $0x44] sm:$0x1]
      %v381 = vsel %vm364, 0, %v380
      %382 = vst [vmem:[#allocation2 + $0x44] sm:$0x1] %v381
      %v383 = vld [vmem:[#allocation2 + $0x50] sm:$0x1]
      %v384 = vsel %vm364, 0, %v383
      %385 = vst [vmem:[#allocation2 + $0x50] sm:$0x1] %v384
      %v386 = vld [vmem:[#allocation2 + $0x5c] sm:$0x1]
      %v387 = vsel %vm364, 0, %v386
      %388 = vst [vmem:[#allocation2 + $0x5c] sm:$0x1] %v387
      %v389 = vld [vmem:[#allocation2 + $0x68] sm:$0x1]
      %v390 = vsel %vm364, 0, %v389
      %391 = vst [vmem:[#allocation2 + $0x68] sm:$0x1] %v390
      %v392 = vld [vmem:[#allocation2 + $0x74] sm:$0x1]
      %v393 = vsel %vm364, 0, %v392
      %394 = vst [vmem:[#allocation2 + $0x74] sm:$0x1] %v393
      %v395 = vld [vmem:[#allocation2 + $0x80] sm:$0x1]
      %v396 = vsel %vm364, 0, %v395
      %397 = vst [vmem:[#allocation2 + $0x80] sm:$0x1] %v396
      %v398 = vld [vmem:[#allocation2 + $0x8c] sm:$0x1]
      %v399 = vsel %vm364, 0, %v398
      %400 = vst [vmem:[#allocation2 + $0x8c] sm:$0x1] %v399
      %v401 = vld [vmem:[#allocation2 + $0x98] sm:$0x1]
      %v402 = vsel %vm364, 0, %v401
      %403 = vst [vmem:[#allocation2 + $0x98] sm:$0x1] %v402
      %v404 = vld [vmem:[#allocation2 + $0xa4] sm:$0x1]
      %v405 = vsel %vm364, 0, %v404
      %406 = vst [vmem:[#allocation2 + $0xa4] sm:$0x1] %v405
      %v407 = vld [vmem:[#allocation2 + $0xb0] sm:$0x1]
      %v408 = vsel %vm364, 0, %v407
      %409 = vst [vmem:[#allocation2 + $0xb0] sm:$0x1] %v408
      %v410 = vld [vmem:[#allocation2 + $0xbc] sm:$0x1]
      %v411 = vsel %vm364, 0, %v410
      %412 = vst [vmem:[#allocation2 + $0xbc] sm:$0x1] %v411
      %v413 = vld [vmem:[#allocation2 + $0xc8] sm:$0x1]
      %v414 = vsel %vm364, 0, %v413
      %415 = vst [vmem:[#allocation2 + $0xc8] sm:$0x1] %v414
      %v416 = vld [vmem:[#allocation2 + $0xd4] sm:$0x1]
      %v417 = vsel %vm364, 0, %v416
      %418 = vst [vmem:[#allocation2 + $0xd4] sm:$0x1] %v417
      %s419 = smul.u32 %s23, 256
      %s420 = sshra.s32 %s419, 3
      %s421 = sand.u32 %s419, 7
      %s422 = smul.addr %s420, 4
      %s423 = scalar_lea.vmem %s291, %s422
      %v424 = vld [vmem:[%s423] sm:$0xf]
      %v425 = vld [vmem:[%s423 + $0x4] sm:$0xf]
      %v426 = vld [vmem:[%s423 + $0x8] sm:$0xf]
      %v427 = vld [vmem:[%s423 + $0xc] sm:$0xf]
      %v428 = vld [vmem:[%s423 + $0x10] sm:$0xf]
      %v429 = vld [vmem:[%s423 + $0x14] sm:$0xf]
      %v430 = vld [vmem:[%s423 + $0x18] sm:$0xf]
      %v431 = vld [vmem:[%s423 + $0x1c] sm:$0xf]
      %v432 = vld [vmem:[%s423 + $0x20] sm:$0xf]
      %v433 = vld [vmem:[%s423 + $0x24] sm:$0xf]
      %v434 = vld [vmem:[%s423 + $0x28] sm:$0xf]
      %v435 = vld [vmem:[%s423 + $0x2c] sm:$0xf]
      %v436 = vld [vmem:[%s423 + $0x30] sm:$0xf]
      %v437 = vld [vmem:[%s423 + $0x34] sm:$0xf]
      %v438 = vld [vmem:[%s423 + $0x38] sm:$0xf]
      %v439 = vld [vmem:[%s423 + $0x3c] sm:$0xf]
      %v440 = vld [vmem:[%s423 + $0x40] sm:$0xf]
      %v441 = vld [vmem:[%s423 + $0x44] sm:$0xf]
      %v442 = vld [vmem:[%s423 + $0x48] sm:$0xf]
      %v443 = vld [vmem:[%s423 + $0x4c] sm:$0xf]
      %v444 = vld [vmem:[%s423 + $0x50] sm:$0xf]
      %v445 = vld [vmem:[%s423 + $0x54] sm:$0xf]
      %v446 = vld [vmem:[%s423 + $0x58] sm:$0xf]
      %v447 = vld [vmem:[%s423 + $0x5c] sm:$0xf]
      %v448 = vld [vmem:[%s423 + $0x60] sm:$0xf]
      %v449 = vld [vmem:[%s423 + $0x64] sm:$0xf]
      %v450 = vld [vmem:[%s423 + $0x68] sm:$0xf]
      %v451 = vld [vmem:[%s423 + $0x6c] sm:$0xf]
      %v452 = vld [vmem:[%s423 + $0x70] sm:$0xf]
      %v453 = vld [vmem:[%s423 + $0x74] sm:$0xf]
      %v454 = vld [vmem:[%s423 + $0x78] sm:$0xf]
      %v455 = vld [vmem:[%s423 + $0x7c] sm:$0xf]
      %v457 = vlaneseq
      %v458 = vshrl.u32 %v457, 7
      %v459 = vsub.s32 0, %v458
      %v460 = vrot.slane %v305, %v459
      %v494 = vunpack.c.l.b16 %v424
      %v495 = vunpack.c.l.b16 %v425
      %v496 = vunpack.c.l.b16 %v426
      %v497 = vunpack.c.l.b16 %v427
      %v498 = vunpack.c.l.b16 %v428
      %v499 = vunpack.c.l.b16 %v429
      %v500 = vunpack.c.l.b16 %v430
      %v501 = vunpack.c.l.b16 %v431
      %v502 = vunpack.c.l.b16 %v432
      %v503 = vunpack.c.l.b16 %v433
      %v504 = vunpack.c.l.b16 %v434
      %v505 = vunpack.c.l.b16 %v435
      %v506 = vunpack.c.l.b16 %v436
      %v507 = vunpack.c.l.b16 %v437
      %v508 = vunpack.c.l.b16 %v438
      %v509 = vunpack.c.l.b16 %v439
      %v510 = vunpack.c.l.b16 %v440
      %v511 = vunpack.c.l.b16 %v441
      %v512 = vunpack.c.l.b16 %v442
      %v513 = vunpack.c.l.b16 %v443
      %v514 = vunpack.c.l.b16 %v444
      %v515 = vunpack.c.l.b16 %v445
      %v516 = vunpack.c.l.b16 %v446
      %v517 = vunpack.c.l.b16 %v447
      %v518 = vunpack.c.l.b16 %v448
      %v519 = vunpack.c.l.b16 %v449
      %v520 = vunpack.c.l.b16 %v450
      %v521 = vunpack.c.l.b16 %v451
      %v522 = vunpack.c.l.b16 %v452
      %v523 = vunpack.c.l.b16 %v453
      %v524 = vunpack.c.l.b16 %v454
      %v525 = vunpack.c.l.b16 %v455
      %v526 = vpack.c.b16 %v495, %v494
      %v527 = vpack.c.b16 %v497, %v496
      %v528 = vpack.c.b16 %v499, %v498
      %v529 = vpack.c.b16 %v501, %v500
      %v530 = vpack.c.b16 %v503, %v502
      %v531 = vpack.c.b16 %v505, %v504
      %v532 = vpack.c.b16 %v507, %v506
      %v533 = vpack.c.b16 %v509, %v508
      %v534 = vpack.c.b16 %v511, %v510
      %v535 = vpack.c.b16 %v513, %v512
      %v536 = vpack.c.b16 %v515, %v514
      %v537 = vpack.c.b16 %v517, %v516
      %v538 = vpack.c.b16 %v519, %v518
      %v539 = vpack.c.b16 %v521, %v520
      %v540 = vpack.c.b16 %v523, %v522
      %v541 = vpack.c.b16 %v525, %v524
      %v544 = vunpack.c.l.b16 %v303
      %v545 = vunpack.c.l.b16 %v304
      %v546 = vpack.c.b16 %v545, %v544
      %vm548 = vcmask 130048
      %v550 = vsel %vm548, %v526, 0
      %v553 = vsel %vm548, %v527, 0
      %v556 = vsel %vm548, %v528, 0
      %v559 = vsel %vm548, %v529, 0
      %v562 = vsel %vm548, %v530, 0
      %v565 = vsel %vm548, %v531, 0
      %v568 = vsel %vm548, %v532, 0
      %v571 = vsel %vm548, %v533, 0
      %v574 = vsel %vm548, %v534, 0
      %v577 = vsel %vm548, %v535, 0
      %v580 = vsel %vm548, %v536, 0
      %v583 = vsel %vm548, %v537, 0
      %v586 = vsel %vm548, %v538, 0
      %v589 = vsel %vm548, %v539, 0
      %v592 = vsel %vm548, %v540, 0
      %v595 = vsel %vm548, %v541, 0
      %597 = vmatprep.subr.bf16.mxu0 0
      %598 = vmatpush1.bf16.msra.mxu0 %v546
      %599 = vmatprep.subr.bf16.mxu0 0
      %600 = vmatpush1.bf16.msra.mxu0 0
      %601 = vmatprep.subr.bf16.mxu0 0
      %602 = vmatpush1.bf16.msra.mxu0 0
      %603 = vmatprep.subr.bf16.mxu0 0
      %604 = vmatpush1.bf16.msra.mxu0 0
      %605 = vmatprep.subr.bf16.mxu0 0
      %606 = vmatpush1.bf16.msra.mxu0 0
      %607 = vmatprep.subr.bf16.mxu0 0
      %608 = vmatpush1.bf16.msra.mxu0 0
      %609 = vmatprep.subr.bf16.mxu0 0
      %610 = vmatpush1.bf16.msra.mxu0 0
      %611 = vmatprep.subr.bf16.mxu0 0
      %612 = vmatpush1.bf16.msra.mxu0 0
      %613 = vmatprep.subr.bf16.mxu0 0
      %614 = vmatpush1.bf16.msra.mxu0 0
      %615 = vmatprep.subr.bf16.mxu0 0
      %616 = vmatpush1.bf16.msra.mxu0 0
      %617 = vmatprep.subr.bf16.mxu0 0
      %618 = vmatpush1.bf16.msra.mxu0 0
      %619 = vmatprep.subr.bf16.mxu0 0
      %620 = vmatpush1.bf16.msra.mxu0 0
      %621 = vmatprep.subr.bf16.mxu0 0
      %622 = vmatpush1.bf16.msra.mxu0 0
      %623 = vmatprep.subr.bf16.mxu0 0
      %624 = vmatpush1.bf16.msra.mxu0 0
      %625 = vmatprep.subr.bf16.mxu0 0
      %626 = vmatpush1.bf16.msra.mxu0 0
      %627 = vmatprep.subr.bf16.mxu0 0
      %628 = vmatpush1.bf16.msra.mxu0 0
      %629 = vmatprep.mubr.bf16.mxu0 0
      %630 = vmatmul.mubr.bf16.gmra.mrb[0].mxu0 %v550
      %v631 = vpop.f32.mrb[0].mxu0
      %v632 = vadd.f32 %v460, %v631
      %v633 = vpop.f32.mrb[0].mxu0
      %v634 = vpop.f32.mrb[0].mxu0
      %v635 = vadd.f32 %v460, %v634
      %v636 = vpop.f32.mrb[0].mxu0
      %637 = vmatprep.mubr.bf16.mxu0 0
      %638 = vmatmul.mubr.bf16.gmra.mrb[0].mxu0 %v553
      %v639 = vpop.f32.mrb[0].mxu0
      %v640 = vadd.f32 %v460, %v639
      %v641 = vpop.f32.mrb[0].mxu0
      %v642 = vpop.f32.mrb[0].mxu0
      %v643 = vadd.f32 %v460, %v642
      %v644 = vpop.f32.mrb[0].mxu0
      %645 = vmatprep.mubr.bf16.mxu0 0
      %646 = vmatmul.mubr.bf16.gmra.mrb[0].mxu0 %v556
      %v647 = vpop.f32.mrb[0].mxu0
      %v648 = vadd.f32 %v460, %v647
      %v649 = vpop.f32.mrb[0].mxu0
      %v650 = vpop.f32.mrb[0].mxu0
      %v651 = vadd.f32 %v460, %v650
      %v652 = vpop.f32.mrb[0].mxu0
      %653 = vmatprep.mubr.bf16.mxu0 0
      %654 = vmatmul.mubr.bf16.gmra.mrb[0].mxu0 %v559
      %v655 = vpop.f32.mrb[0].mxu0
      %v656 = vadd.f32 %v460, %v655
      %v657 = vpop.f32.mrb[0].mxu0
      %v658 = vpop.f32.mrb[0].mxu0
      %v659 = vadd.f32 %v460, %v658
      %v660 = vpop.f32.mrb[0].mxu0
      %661 = vmatprep.mubr.bf16.mxu0 0
      %662 = vmatmul.mubr.bf16.gmra.mrb[0].mxu0 %v562
      %v663 = vpop.f32.mrb[0].mxu0
      %v664 = vadd.f32 %v460, %v663
      %v665 = vpop.f32.mrb[0].mxu0
      %v666 = vpop.f32.mrb[0].mxu0
      %v667 = vadd.f32 %v460, %v666
      %v668 = vpop.f32.mrb[0].mxu0
      %669 = vmatprep.mubr.bf16.mxu0 0
      %670 = vmatmul.mubr.bf16.gmra.mrb[0].mxu0 %v565
      %v671 = vpop.f32.mrb[0].mxu0
      %v672 = vadd.f32 %v460, %v671
      %v673 = vpop.f32.mrb[0].mxu0
      %v674 = vpop.f32.mrb[0].mxu0
      %v675 = vadd.f32 %v460, %v674
      %v676 = vpop.f32.mrb[0].mxu0
      %677 = vmatprep.mubr.bf16.mxu0 0
      %678 = vmatmul.mubr.bf16.gmra.mrb[0].mxu0 %v568
      %v679 = vpop.f32.mrb[0].mxu0
      %v680 = vadd.f32 %v460, %v679
      %v681 = vpop.f32.mrb[0].mxu0
      %v682 = vpop.f32.mrb[0].mxu0
      %v683 = vadd.f32 %v460, %v682
      %v684 = vpop.f32.mrb[0].mxu0
      %685 = vmatprep.mubr.bf16.mxu0 0
      %686 = vmatmul.mubr.bf16.gmra.mrb[0].mxu0 %v571
      %v687 = vpop.f32.mrb[0].mxu0
      %v688 = vadd.f32 %v460, %v687
      %v689 = vpop.f32.mrb[0].mxu0
      %v690 = vpop.f32.mrb[0].mxu0
      %v691 = vadd.f32 %v460, %v690
      %v692 = vpop.f32.mrb[0].mxu0
      %693 = vmatprep.mubr.bf16.mxu0 0
      %694 = vmatmul.mubr.bf16.gmra.mrb[0].mxu0 %v574
      %v695 = vpop.f32.mrb[0].mxu0
      %v696 = vadd.f32 %v460, %v695
      %v697 = vpop.f32.mrb[0].mxu0
      %v698 = vpop.f32.mrb[0].mxu0
      %v699 = vadd.f32 %v460, %v698
      %v700 = vpop.f32.mrb[0].mxu0
      %701 = vmatprep.mubr.bf16.mxu0 0
      %702 = vmatmul.mubr.bf16.gmra.mrb[0].mxu0 %v577
      %v703 = vpop.f32.mrb[0].mxu0
      %v704 = vadd.f32 %v460, %v703
      %v705 = vpop.f32.mrb[0].mxu0
      %v706 = vpop.f32.mrb[0].mxu0
      %v707 = vadd.f32 %v460, %v706
      %v708 = vpop.f32.mrb[0].mxu0
      %709 = vmatprep.mubr.bf16.mxu0 0
      %710 = vmatmul.mubr.bf16.gmra.mrb[0].mxu0 %v580
      %v711 = vpop.f32.mrb[0].mxu0
      %v712 = vadd.f32 %v460, %v711
      %v713 = vpop.f32.mrb[0].mxu0
      %v714 = vpop.f32.mrb[0].mxu0
      %v715 = vadd.f32 %v460, %v714
      %v716 = vpop.f32.mrb[0].mxu0
      %717 = vmatprep.mubr.bf16.mxu0 0
      %718 = vmatmul.mubr.bf16.gmra.mrb[0].mxu0 %v583
      %v719 = vpop.f32.mrb[0].mxu0
      %v720 = vadd.f32 %v460, %v719
      %v721 = vpop.f32.mrb[0].mxu0
      %v722 = vpop.f32.mrb[0].mxu0
      %v723 = vadd.f32 %v460, %v722
      %v724 = vpop.f32.mrb[0].mxu0
      %725 = vmatprep.mubr.bf16.mxu0 0
      %726 = vmatmul.mubr.bf16.gmra.mrb[0].mxu0 %v586
      %v727 = vpop.f32.mrb[0].mxu0
      %v728 = vadd.f32 %v460, %v727
      %v729 = vpop.f32.mrb[0].mxu0
      %v730 = vpop.f32.mrb[0].mxu0
      %v731 = vadd.f32 %v460, %v730
      %v732 = vpop.f32.mrb[0].mxu0
      %733 = vmatprep.mubr.bf16.mxu0 0
      %734 = vmatmul.mubr.bf16.gmra.mrb[0].mxu0 %v589
      %v735 = vpop.f32.mrb[0].mxu0
      %v736 = vadd.f32 %v460, %v735
      %v737 = vpop.f32.mrb[0].mxu0
      %v738 = vpop.f32.mrb[0].mxu0
      %v739 = vadd.f32 %v460, %v738
      %v740 = vpop.f32.mrb[0].mxu0
      %741 = vmatprep.mubr.bf16.mxu0 0
      %742 = vmatmul.mubr.bf16.gmra.mrb[0].mxu0 %v592
      %v743 = vpop.f32.mrb[0].mxu0
      %v744 = vadd.f32 %v460, %v743
      %v745 = vpop.f32.mrb[0].mxu0
      %v746 = vpop.f32.mrb[0].mxu0
      %v747 = vadd.f32 %v460, %v746
      %v748 = vpop.f32.mrb[0].mxu0
      %749 = vmatprep.mubr.bf16.mxu0 0
      %750 = vmatmul.mubr.bf16.gmra.mrb[0].mxu0 %v595
      %v751 = vpop.f32.mrb[0].mxu0
      %v752 = vadd.f32 %v460, %v751
      %v753 = vpop.f32.mrb[0].mxu0
      %v754 = vpop.f32.mrb[0].mxu0
      %v755 = vadd.f32 %v460, %v754
      %v756 = vpop.f32.mrb[0].mxu0
      %757 = vdwg.mxu0
      %v758 = vmax.f32 %v632, 0.0
      %v759 = vmax.f32 %v635, 0.0
      %v760 = vmax.f32 %v640, 0.0
      %v761 = vmax.f32 %v643, 0.0
      %v762 = vmax.f32 %v648, 0.0
      %v763 = vmax.f32 %v651, 0.0
      %v764 = vmax.f32 %v656, 0.0
      %v765 = vmax.f32 %v659, 0.0
      %v766 = vmax.f32 %v664, 0.0
      %v767 = vmax.f32 %v667, 0.0
      %v768 = vmax.f32 %v672, 0.0
      %v769 = vmax.f32 %v675, 0.0
      %v770 = vmax.f32 %v680, 0.0
      %v771 = vmax.f32 %v683, 0.0
      %v772 = vmax.f32 %v688, 0.0
      %v773 = vmax.f32 %v691, 0.0
      %v774 = vmax.f32 %v696, 0.0
      %v775 = vmax.f32 %v699, 0.0
      %v776 = vmax.f32 %v704, 0.0
      %v777 = vmax.f32 %v707, 0.0
      %v778 = vmax.f32 %v712, 0.0
      %v779 = vmax.f32 %v715, 0.0
      %v780 = vmax.f32 %v720, 0.0
      %v781 = vmax.f32 %v723, 0.0
      %v782 = vmax.f32 %v728, 0.0
      %v783 = vmax.f32 %v731, 0.0
      %v784 = vmax.f32 %v736, 0.0
      %v785 = vmax.f32 %v739, 0.0
      %v786 = vmax.f32 %v744, 0.0
      %v787 = vmax.f32 %v747, 0.0
      %v788 = vmax.f32 %v752, 0.0
      %v789 = vmax.f32 %v755, 0.0
      %v790 = vpack.c.bf16 %v759, %v758
      %v791 = vpack.c.bf16 %v761, %v760
      %v792 = vpack.c.bf16 %v763, %v762
      %v793 = vpack.c.bf16 %v765, %v764
      %v794 = vpack.c.bf16 %v767, %v766
      %v795 = vpack.c.bf16 %v769, %v768
      %v796 = vpack.c.bf16 %v771, %v770
      %v797 = vpack.c.bf16 %v773, %v772
      %v798 = vpack.c.bf16 %v775, %v774
      %v799 = vpack.c.bf16 %v777, %v776
      %v800 = vpack.c.bf16 %v779, %v778
      %v801 = vpack.c.bf16 %v781, %v780
      %v802 = vpack.c.bf16 %v783, %v782
      %v803 = vpack.c.bf16 %v785, %v784
      %v804 = vpack.c.bf16 %v787, %v786
      %v805 = vpack.c.bf16 %v789, %v788
      %v822 = vunpack.c.l.b16 %v790
      %v823 = vunpack.c.h.b16 %v790
      %v824 = vunpack.c.l.b16 %v791
      %v825 = vunpack.c.h.b16 %v791
      %v826 = vunpack.c.l.b16 %v792
      %v827 = vunpack.c.h.b16 %v792
      %v828 = vunpack.c.l.b16 %v793
      %v829 = vunpack.c.h.b16 %v793
      %v830 = vunpack.c.l.b16 %v794
      %v831 = vunpack.c.h.b16 %v794
      %v832 = vunpack.c.l.b16 %v795
      %v833 = vunpack.c.h.b16 %v795
      %v834 = vunpack.c.l.b16 %v796
      %v835 = vunpack.c.h.b16 %v796
      %v836 = vunpack.c.l.b16 %v797
      %v837 = vunpack.c.h.b16 %v797
      %v838 = vunpack.c.l.b16 %v798
      %v839 = vunpack.c.h.b16 %v798
      %v840 = vunpack.c.l.b16 %v799
      %v841 = vunpack.c.h.b16 %v799
      %v842 = vunpack.c.l.b16 %v800
      %v843 = vunpack.c.h.b16 %v800
      %v844 = vunpack.c.l.b16 %v801
      %v845 = vunpack.c.h.b16 %v801
      %v846 = vunpack.c.l.b16 %v802
      %v847 = vunpack.c.h.b16 %v802
      %v848 = vunpack.c.l.b16 %v803
      %v849 = vunpack.c.h.b16 %v803
      %v850 = vunpack.c.l.b16 %v804
      %v851 = vunpack.c.h.b16 %v804
      %v852 = vunpack.c.l.b16 %v805
      %v853 = vunpack.c.h.b16 %v805
      %v854 = vpack.c.b16 %v822, %v822
      %v855 = vpack.c.b16 %v823, %v823
      %v856 = vpack.c.b16 %v824, %v824
      %v857 = vpack.c.b16 %v825, %v825
      %v858 = vpack.c.b16 %v826, %v826
      %v859 = vpack.c.b16 %v827, %v827
      %v860 = vpack.c.b16 %v828, %v828
      %v861 = vpack.c.b16 %v829, %v829
      %v862 = vpack.c.b16 %v830, %v830
      %v863 = vpack.c.b16 %v831, %v831
      %v864 = vpack.c.b16 %v832, %v832
      %v865 = vpack.c.b16 %v833, %v833
      %v866 = vpack.c.b16 %v834, %v834
      %v867 = vpack.c.b16 %v835, %v835
      %v868 = vpack.c.b16 %v836, %v836
      %v869 = vpack.c.b16 %v837, %v837
      %v870 = vpack.c.b16 %v838, %v838
      %v871 = vpack.c.b16 %v839, %v839
      %v872 = vpack.c.b16 %v840, %v840
      %v873 = vpack.c.b16 %v841, %v841
      %v874 = vpack.c.b16 %v842, %v842
      %v875 = vpack.c.b16 %v843, %v843
      %v876 = vpack.c.b16 %v844, %v844
      %v877 = vpack.c.b16 %v845, %v845
      %v878 = vpack.c.b16 %v846, %v846
      %v879 = vpack.c.b16 %v847, %v847
      %v880 = vpack.c.b16 %v848, %v848
      %v881 = vpack.c.b16 %v849, %v849
      %v882 = vpack.c.b16 %v850, %v850
      %v883 = vpack.c.b16 %v851, %v851
      %v884 = vpack.c.b16 %v852, %v852
      %v885 = vpack.c.b16 %v853, %v853
      %vm886 = vsmask.f32 4368
      %vm887 = vmor %vm307, %vm886
      %v889 = vshrl.u32 %v854, 16
      %v891 = vrot.slane %v889, 7
      %v892 = vshll.u32 %v854, 16
      %v894 = vor.u32 %v891, %v892
      %v895 = vrot.slane %v891, 4
      %v897 = vshrl.u32 %v855, 16
      %v899 = vrot.slane %v897, 7
      %v900 = vshll.u32 %v855, 16
      %v902 = vor.u32 %v899, %v900
      %v903 = vsel %vm887, %v895, %v902
      %v904 = vrot.slane %v899, 4
      %v906 = vshrl.u32 %v856, 16
      %v908 = vrot.slane %v906, 7
      %v909 = vshll.u32 %v856, 16
      %v911 = vor.u32 %v908, %v909
      %v912 = vrot.slane %v908, 4
      %v914 = vshrl.u32 %v857, 16
      %v916 = vrot.slane %v914, 7
      %v917 = vshll.u32 %v857, 16
      %v919 = vor.u32 %v916, %v917
      %v920 = vsel %vm887, %v912, %v919
      %v921 = vrot.slane %v916, 4
      %v923 = vshrl.u32 %v858, 16
      %v925 = vrot.slane %v923, 7
      %v926 = vshll.u32 %v858, 16
      %v928 = vor.u32 %v925, %v926
      %v929 = vrot.slane %v925, 4
      %v931 = vshrl.u32 %v859, 16
      %v933 = vrot.slane %v931, 7
      %v934 = vshll.u32 %v859, 16
      %v936 = vor.u32 %v933, %v934
      %v937 = vsel %vm887, %v929, %v936
      %v938 = vrot.slane %v933, 4
      %v940 = vshrl.u32 %v860, 16
      %v942 = vrot.slane %v940, 7
      %v943 = vshll.u32 %v860, 16
      %v945 = vor.u32 %v942, %v943
      %v946 = vrot.slane %v942, 4
      %v948 = vshrl.u32 %v861, 16
      %v950 = vrot.slane %v948, 7
      %v951 = vshll.u32 %v861, 16
      %v953 = vor.u32 %v950, %v951
      %v954 = vsel %vm887, %v946, %v953
      %v955 = vrot.slane %v950, 4
      %v957 = vshrl.u32 %v862, 16
      %v959 = vrot.slane %v957, 7
      %v960 = vshll.u32 %v862, 16
      %v962 = vor.u32 %v959, %v960
      %v963 = vrot.slane %v959, 4
      %v965 = vshrl.u32 %v863, 16
      %v967 = vrot.slane %v965, 7
      %v968 = vshll.u32 %v863, 16
      %v970 = vor.u32 %v967, %v968
      %v971 = vsel %vm887, %v963, %v970
      %v972 = vrot.slane %v967, 4
      %v974 = vshrl.u32 %v864, 16
      %v976 = vrot.slane %v974, 7
      %v977 = vshll.u32 %v864, 16
      %v979 = vor.u32 %v976, %v977
      %v980 = vrot.slane %v976, 4
      %v982 = vshrl.u32 %v865, 16
      %v984 = vrot.slane %v982, 7
      %v985 = vshll.u32 %v865, 16
      %v987 = vor.u32 %v984, %v985
      %v988 = vsel %vm887, %v980, %v987
      %v989 = vrot.slane %v984, 4
      %v991 = vshrl.u32 %v866, 16
      %v993 = vrot.slane %v991, 7
      %v994 = vshll.u32 %v866, 16
      %v996 = vor.u32 %v993, %v994
      %v997 = vrot.slane %v993, 4
      %v999 = vshrl.u32 %v867, 16
      %v1001 = vrot.slane %v999, 7
      %v1002 = vshll.u32 %v867, 16
      %v1004 = vor.u32 %v1001, %v1002
      %v1005 = vsel %vm887, %v997, %v1004
      %v1006 = vrot.slane %v1001, 4
      %v1008 = vshrl.u32 %v868, 16
      %v1010 = vrot.slane %v1008, 7
      %v1011 = vshll.u32 %v868, 16
      %v1013 = vor.u32 %v1010, %v1011
      %v1014 = vrot.slane %v1010, 4
      %v1016 = vshrl.u32 %v869, 16
      %v1018 = vrot.slane %v1016, 7
      %v1019 = vshll.u32 %v869, 16
      %v1021 = vor.u32 %v1018, %v1019
      %v1022 = vsel %vm887, %v1014, %v1021
      %v1023 = vrot.slane %v1018, 4
      %v1025 = vshrl.u32 %v870, 16
      %v1027 = vrot.slane %v1025, 7
      %v1028 = vshll.u32 %v870, 16
      %v1030 = vor.u32 %v1027, %v1028
      %v1031 = vrot.slane %v1027, 4
      %v1033 = vshrl.u32 %v871, 16
      %v1035 = vrot.slane %v1033, 7
      %v1036 = vshll.u32 %v871, 16
      %v1038 = vor.u32 %v1035, %v1036
      %v1039 = vsel %vm887, %v1031, %v1038
      %v1040 = vrot.slane %v1035, 4
      %v1042 = vshrl.u32 %v872, 16
      %v1044 = vrot.slane %v1042, 7
      %v1045 = vshll.u32 %v872, 16
      %v1047 = vor.u32 %v1044, %v1045
      %v1048 = vrot.slane %v1044, 4
      %v1050 = vshrl.u32 %v873, 16
      %v1052 = vrot.slane %v1050, 7
      %v1053 = vshll.u32 %v873, 16
      %v1055 = vor.u32 %v1052, %v1053
      %v1056 = vsel %vm887, %v1048, %v1055
      %v1057 = vrot.slane %v1052, 4
      %v1059 = vshrl.u32 %v874, 16
      %v1061 = vrot.slane %v1059, 7
      %v1062 = vshll.u32 %v874, 16
      %v1064 = vor.u32 %v1061, %v1062
      %v1065 = vrot.slane %v1061, 4
      %v1067 = vshrl.u32 %v875, 16
      %v1069 = vrot.slane %v1067, 7
      %v1070 = vshll.u32 %v875, 16
      %v1072 = vor.u32 %v1069, %v1070
      %v1073 = vsel %vm887, %v1065, %v1072
      %v1074 = vrot.slane %v1069, 4
      %v1076 = vshrl.u32 %v876, 16
      %v1078 = vrot.slane %v1076, 7
      %v1079 = vshll.u32 %v876, 16
      %v1081 = vor.u32 %v1078, %v1079
      %v1082 = vrot.slane %v1078, 4
      %v1084 = vshrl.u32 %v877, 16
      %v1086 = vrot.slane %v1084, 7
      %v1087 = vshll.u32 %v877, 16
      %v1089 = vor.u32 %v1086, %v1087
      %v1090 = vsel %vm887, %v1082, %v1089
      %v1091 = vrot.slane %v1086, 4
      %v1093 = vshrl.u32 %v878, 16
      %v1095 = vrot.slane %v1093, 7
      %v1096 = vshll.u32 %v878, 16
      %v1098 = vor.u32 %v1095, %v1096
      %v1099 = vrot.slane %v1095, 4
      %v1101 = vshrl.u32 %v879, 16
      %v1103 = vrot.slane %v1101, 7
      %v1104 = vshll.u32 %v879, 16
      %v1106 = vor.u32 %v1103, %v1104
      %v1107 = vsel %vm887, %v1099, %v1106
      %v1108 = vrot.slane %v1103, 4
      %v1110 = vshrl.u32 %v880, 16
      %v1112 = vrot.slane %v1110, 7
      %v1113 = vshll.u32 %v880, 16
      %v1115 = vor.u32 %v1112, %v1113
      %v1116 = vrot.slane %v1112, 4
      %v1118 = vshrl.u32 %v881, 16
      %v1120 = vrot.slane %v1118, 7
      %v1121 = vshll.u32 %v881, 16
      %v1123 = vor.u32 %v1120, %v1121
      %v1124 = vsel %vm887, %v1116, %v1123
      %v1125 = vrot.slane %v1120, 4
      %v1127 = vshrl.u32 %v882, 16
      %v1129 = vrot.slane %v1127, 7
      %v1130 = vshll.u32 %v882, 16
      %v1132 = vor.u32 %v1129, %v1130
      %v1133 = vrot.slane %v1129, 4
      %v1135 = vshrl.u32 %v883, 16
      %v1137 = vrot.slane %v1135, 7
      %v1138 = vshll.u32 %v883, 16
      %v1140 = vor.u32 %v1137, %v1138
      %v1141 = vsel %vm887, %v1133, %v1140
      %v1142 = vrot.slane %v1137, 4
      %v1144 = vshrl.u32 %v884, 16
      %v1146 = vrot.slane %v1144, 7
      %v1147 = vshll.u32 %v884, 16
      %v1149 = vor.u32 %v1146, %v1147
      %v1150 = vrot.slane %v1146, 4
      %v1152 = vshrl.u32 %v885, 16
      %v1154 = vrot.slane %v1152, 7
      %v1155 = vshll.u32 %v885, 16
      %v1157 = vor.u32 %v1154, %v1155
      %v1158 = vsel %vm887, %v1150, %v1157
      %v1159 = vrot.slane %v1154, 4
      %s1208 = scalar_lea.vmem [#allocation2], 12
      %vm1209 = vcmask 27648
      %vm1210 = vmand %vm1209, %vm363
      %v1211 = vld [vmem:[%s1208] sm:$0xf]
      %v1212 = vsel %vm1210, %v894, %v1211
      %1213 = vst [vmem:[%s1208] sm:$0xf] %v1212
      %vm1214 = vcmask 27648
      %1215 = vst.msk [vmem:[%s1208 + $0x4] sm:$0xf] %vm1214, %v903
      %v1216 = vld [vmem:[%s1208 + $0x8] sm:$0x1]
      %v1217 = vsel %vm308, %v904, %v1216
      %1218 = vst [vmem:[%s1208 + $0x8] sm:$0x1] %v1217
      %v1219 = vld [vmem:[%s1208 + $0xc] sm:$0xf]
      %v1220 = vsel %vm1210, %v911, %v1219
      %1221 = vst [vmem:[%s1208 + $0xc] sm:$0xf] %v1220
      %1222 = vst.msk [vmem:[%s1208 + $0x10] sm:$0xf] %vm1214, %v920
      %v1223 = vld [vmem:[%s1208 + $0x14] sm:$0x1]
      %v1224 = vsel %vm308, %v921, %v1223
      %1225 = vst [vmem:[%s1208 + $0x14] sm:$0x1] %v1224
      %v1226 = vld [vmem:[%s1208 + $0x18] sm:$0xf]
      %v1227 = vsel %vm1210, %v928, %v1226
      %1228 = vst [vmem:[%s1208 + $0x18] sm:$0xf] %v1227
      %1229 = vst.msk [vmem:[%s1208 + $0x1c] sm:$0xf] %vm1214, %v937
      %v1230 = vld [vmem:[%s1208 + $0x20] sm:$0x1]
      %v1231 = vsel %vm308, %v938, %v1230
      %1232 = vst [vmem:[%s1208 + $0x20] sm:$0x1] %v1231
      %v1233 = vld [vmem:[%s1208 + $0x24] sm:$0xf]
      %v1234 = vsel %vm1210, %v945, %v1233
      %1235 = vst [vmem:[%s1208 + $0x24] sm:$0xf] %v1234
      %1236 = vst.msk [vmem:[%s1208 + $0x28] sm:$0xf] %vm1214, %v954
      %v1237 = vld [vmem:[%s1208 + $0x2c] sm:$0x1]
      %v1238 = vsel %vm308, %v955, %v1237
      %1239 = vst [vmem:[%s1208 + $0x2c] sm:$0x1] %v1238
      %v1240 = vld [vmem:[%s1208 + $0x30] sm:$0xf]
      %v1241 = vsel %vm1210, %v962, %v1240
      %1242 = vst [vmem:[%s1208 + $0x30] sm:$0xf] %v1241
      %1243 = vst.msk [vmem:[%s1208 + $0x34] sm:$0xf] %vm1214, %v971
      %v1244 = vld [vmem:[%s1208 + $0x38] sm:$0x1]
      %v1245 = vsel %vm308, %v972, %v1244
      %1246 = vst [vmem:[%s1208 + $0x38] sm:$0x1] %v1245
      %v1247 = vld [vmem:[%s1208 + $0x3c] sm:$0xf]
      %v1248 = vsel %vm1210, %v979, %v1247
      %1249 = vst [vmem:[%s1208 + $0x3c] sm:$0xf] %v1248
      %1250 = vst.msk [vmem:[%s1208 + $0x40] sm:$0xf] %vm1214, %v988
      %v1251 = vld [vmem:[%s1208 + $0x44] sm:$0x1]
      %v1252 = vsel %vm308, %v989, %v1251
      %1253 = vst [vmem:[%s1208 + $0x44] sm:$0x1] %v1252
      %v1254 = vld [vmem:[%s1208 + $0x48] sm:$0xf]
      %v1255 = vsel %vm1210, %v996, %v1254
      %1256 = vst [vmem:[%s1208 + $0x48] sm:$0xf] %v1255
      %1257 = vst.msk [vmem:[%s1208 + $0x4c] sm:$0xf] %vm1214, %v1005
      %v1258 = vld [vmem:[%s1208 + $0x50] sm:$0x1]
      %v1259 = vsel %vm308, %v1006, %v1258
      %1260 = vst [vmem:[%s1208 + $0x50] sm:$0x1] %v1259
      %v1261 = vld [vmem:[%s1208 + $0x54] sm:$0xf]
      %v1262 = vsel %vm1210, %v1013, %v1261
      %1263 = vst [vmem:[%s1208 + $0x54] sm:$0xf] %v1262
      %1264 = vst.msk [vmem:[%s1208 + $0x58] sm:$0xf] %vm1214, %v1022
      %v1265 = vld [vmem:[%s1208 + $0x5c] sm:$0x1]
      %v1266 = vsel %vm308, %v1023, %v1265
      %1267 = vst [vmem:[%s1208 + $0x5c] sm:$0x1] %v1266
      %v1268 = vld [vmem:[%s1208 + $0x60] sm:$0xf]
      %v1269 = vsel %vm1210, %v1030, %v1268
      %1270 = vst [vmem:[%s1208 + $0x60] sm:$0xf] %v1269
      %1271 = vst.msk [vmem:[%s1208 + $0x64] sm:$0xf] %vm1214, %v1039
      %v1272 = vld [vmem:[%s1208 + $0x68] sm:$0x1]
      %v1273 = vsel %vm308, %v1040, %v1272
      %1274 = vst [vmem:[%s1208 + $0x68] sm:$0x1] %v1273
      %v1275 = vld [vmem:[%s1208 + $0x6c] sm:$0xf]
      %v1276 = vsel %vm1210, %v1047, %v1275
      %1277 = vst [vmem:[%s1208 + $0x6c] sm:$0xf] %v1276
      %1278 = vst.msk [vmem:[%s1208 + $0x70] sm:$0xf] %vm1214, %v1056
      %v1279 = vld [vmem:[%s1208 + $0x74] sm:$0x1]
      %v1280 = vsel %vm308, %v1057, %v1279
      %1281 = vst [vmem:[%s1208 + $0x74] sm:$0x1] %v1280
      %v1282 = vld [vmem:[%s1208 + $0x78] sm:$0xf]
      %v1283 = vsel %vm1210, %v1064, %v1282
      %1284 = vst [vmem:[%s1208 + $0x78] sm:$0xf] %v1283
      %1285 = vst.msk [vmem:[%s1208 + $0x7c] sm:$0xf] %vm1214, %v1073
      %v1286 = vld [vmem:[%s1208 + $0x80] sm:$0x1]
      %v1287 = vsel %vm308, %v1074, %v1286
      %1288 = vst [vmem:[%s1208 + $0x80] sm:$0x1] %v1287
      %v1289 = vld [vmem:[%s1208 + $0x84] sm:$0xf]
      %v1290 = vsel %vm1210, %v1081, %v1289
      %1291 = vst [vmem:[%s1208 + $0x84] sm:$0xf] %v1290
      %1292 = vst.msk [vmem:[%s1208 + $0x88] sm:$0xf] %vm1214, %v1090
      %v1293 = vld [vmem:[%s1208 + $0x8c] sm:$0x1]
      %v1294 = vsel %vm308, %v1091, %v1293
      %1295 = vst [vmem:[%s1208 + $0x8c] sm:$0x1] %v1294
      %v1296 = vld [vmem:[%s1208 + $0x90] sm:$0xf]
      %v1297 = vsel %vm1210, %v1098, %v1296
      %1298 = vst [vmem:[%s1208 + $0x90] sm:$0xf] %v1297
      %1299 = vst.msk [vmem:[%s1208 + $0x94] sm:$0xf] %vm1214, %v1107
      %v1300 = vld [vmem:[%s1208 + $0x98] sm:$0x1]
      %v1301 = vsel %vm308, %v1108, %v1300
      %1302 = vst [vmem:[%s1208 + $0x98] sm:$0x1] %v1301
      %v1303 = vld [vmem:[%s1208 + $0x9c] sm:$0xf]
      %v1304 = vsel %vm1210, %v1115, %v1303
      %1305 = vst [vmem:[%s1208 + $0x9c] sm:$0xf] %v1304
      %1306 = vst.msk [vmem:[%s1208 + $0xa0] sm:$0xf] %vm1214, %v1124
      %v1307 = vld [vmem:[%s1208 + $0xa4] sm:$0x1]
      %v1308 = vsel %vm308, %v1125, %v1307
      %1309 = vst [vmem:[%s1208 + $0xa4] sm:$0x1] %v1308
      %v1310 = vld [vmem:[%s1208 + $0xa8] sm:$0xf]
      %v1311 = vsel %vm1210, %v1132, %v1310
      %1312 = vst [vmem:[%s1208 + $0xa8] sm:$0xf] %v1311
      %1313 = vst.msk [vmem:[%s1208 + $0xac] sm:$0xf] %vm1214, %v1141
      %v1314 = vld [vmem:[%s1208 + $0xb0] sm:$0x1]
      %v1315 = vsel %vm308, %v1142, %v1314
      %1316 = vst [vmem:[%s1208 + $0xb0] sm:$0x1] %v1315
      %v1317 = vld [vmem:[%s1208 + $0xb4] sm:$0xf]
      %v1318 = vsel %vm1210, %v1149, %v1317
      %1319 = vst [vmem:[%s1208 + $0xb4] sm:$0xf] %v1318
      %1320 = vst.msk [vmem:[%s1208 + $0xb8] sm:$0xf] %vm1214, %v1158
      %v1321 = vld [vmem:[%s1208 + $0xbc] sm:$0x1]
      %v1322 = vsel %vm308, %v1159, %v1321
      %1323 = vst [vmem:[%s1208 + $0xbc] sm:$0x1] %v1322
      %p1324 = scmp.gt.s32.totalorder %s23, 0
      // Predicated region
      $region49: #{tpu_custom_call.1} parent=47 // pred_check
        %p1325 = pneg %p1324
      $region50: #{tpu_custom_call.1} parent=47 // pred_check_branch
        %1327 = sbr.rel (%p1325) target = $region52
      $region51: #{tpu_custom_call.1} parent=47 // pred_region
        %s1328 = ssub.s32 %s419, 16
        %s1329 = sshra.s32 %s1328, 3
        %s1330 = sand.u32 %s1328, 7
        %s1331 = smul.addr %s1329, 4
        %s1332 = scalar_lea.vmem %s291, %s1331
        %v1333 = vld [vmem:[%s1332] sm:$0xf]
        %v1334 = vld [vmem:[%s1332 + $0x4] sm:$0xf]
        %v1337 = vunpack.c.l.b16 %v1333
        %v1338 = vunpack.c.l.b16 %v1334
        %v1339 = vpack.c.b16 %v1338, %v1337
        %v1341 = vsel %vm548, %v1339, 0
        %1343 = vmatprep.subr.bf16.mxu0 0
        %1344 = vmatpush1.bf16.msra.mxu0 %v546
        %1345 = vmatprep.subr.bf16.mxu0 0
        %1346 = vmatpush1.bf16.msra.mxu0 0
        %1347 = vmatprep.subr.bf16.mxu0 0
        %1348 = vmatpush1.bf16.msra.mxu0 0
        %1349 = vmatprep.subr.bf16.mxu0 0
        %1350 = vmatpush1.bf16.msra.mxu0 0
        %1351 = vmatprep.subr.bf16.mxu0 0
        %1352 = vmatpush1.bf16.msra.mxu0 0
        %1353 = vmatprep.subr.bf16.mxu0 0
        %1354 = vmatpush1.bf16.msra.mxu0 0
        %1355 = vmatprep.subr.bf16.mxu0 0
        %1356 = vmatpush1.bf16.msra.mxu0 0
        %1357 = vmatprep.subr.bf16.mxu0 0
        %1358 = vmatpush1.bf16.msra.mxu0 0
        %1359 = vmatprep.subr.bf16.mxu0 0
        %1360 = vmatpush1.bf16.msra.mxu0 0
        %1361 = vmatprep.subr.bf16.mxu0 0
        %1362 = vmatpush1.bf16.msra.mxu0 0
        %1363 = vmatprep.subr.bf16.mxu0 0
        %1364 = vmatpush1.bf16.msra.mxu0 0
        %1365 = vmatprep.subr.bf16.mxu0 0
        %1366 = vmatpush1.bf16.msra.mxu0 0
        %1367 = vmatprep.subr.bf16.mxu0 0
        %1368 = vmatpush1.bf16.msra.mxu0 0
        %1369 = vmatprep.subr.bf16.mxu0 0
        %1370 = vmatpush1.bf16.msra.mxu0 0
        %1371 = vmatprep.subr.bf16.mxu0 0
        %1372 = vmatpush1.bf16.msra.mxu0 0
        %1373 = vmatprep.subr.bf16.mxu0 0
        %1374 = vmatpush1.bf16.msra.mxu0 0
        %1375 = vmatprep.mubr.bf16.mxu0 0
        %1376 = vmatmul.mubr.bf16.gmra.mrb[0].mxu0 %v1341
        %v1377 = vpop.f32.mrb[0].mxu0
        %v1378 = vadd.f32 %v460, %v1377
        %v1379 = vpop.f32.mrb[0].mxu0
        %v1380 = vpop.f32.mrb[0].mxu0
        %v1381 = vadd.f32 %v460, %v1380
        %v1382 = vpop.f32.mrb[0].mxu0
        %1383 = vdwg.mxu0
        %v1384 = vmax.f32 %v1378, 0.0
        %v1385 = vmax.f32 %v1381, 0.0
        %v1386 = vpack.c.bf16 %v1385, %v1384
        %v1388 = vunpack.c.l.b16 %v1386
        %v1389 = vunpack.c.h.b16 %v1386
        %v1390 = vpack.c.b16 %v1388, %v1388
        %v1391 = vpack.c.b16 %v1389, %v1389
        %v1393 = vshrl.u32 %v1390, 16
        %v1395 = vrot.slane %v1393, 7
        %v1396 = vshll.u32 %v1390, 16
        %v1398 = vor.u32 %v1395, %v1396
        %v1399 = vrot.slane %v1395, 4
        %v1401 = vshrl.u32 %v1391, 16
        %v1403 = vrot.slane %v1401, 7
        %v1404 = vshll.u32 %v1391, 16
        %v1406 = vor.u32 %v1403, %v1404
        %v1407 = vsel %vm887, %v1399, %v1406
        %v1408 = vrot.slane %v1403, 4
        %v1412 = vld [vmem:[#allocation2] sm:$0xf]
        %v1413 = vsel %vm1210, %v1398, %v1412
        %1414 = vst [vmem:[#allocation2] sm:$0xf] %v1413
        %1415 = vst.msk [vmem:[#allocation2 + $0x4] sm:$0xf] %vm1214, %v1407
        %v1416 = vld [vmem:[#allocation2 + $0x8] sm:$0x1]
        %v1417 = vsel %vm308, %v1408, %v1416
        %1418 = vst [vmem:[#allocation2 + $0x8] sm:$0x1] %v1417
      $region52: #{tpu_custom_call.1} parent=47 // pred_fallthru
        _
      %p1419 = scmp.eq.s32.totalorder %s23, 0
      // Predicated region
      $region53: #{tpu_custom_call.1} parent=47 // pred_check
        %p1420 = pneg %p1419
      $region54: #{tpu_custom_call.1} parent=47 // pred_check_branch
        %1422 = sbr.rel (%p1420) target = $region56
      $region55: #{tpu_custom_call.1} parent=47 // pred_region
        %v1423 = vld [vmem:[#allocation2] sm:$0xf]
        %v1424 = vsel %vm1210, 0, %v1423
        %1425 = vst [vmem:[#allocation2] sm:$0xf] %v1424
        %1426 = vst.msk [vmem:[#allocation2 + $0x4] sm:$0xf] %vm1214, 0
        %v1427 = vld [vmem:[#allocation2 + $0x8] sm:$0x1]
        %v1428 = vsel %vm308, 0, %v1427
        %1429 = vst [vmem:[#allocation2 + $0x8] sm:$0x1] %v1428
      $region56: #{tpu_custom_call.1} parent=47 // pred_fallthru
        _
      %p1430 = scmp.lt.s32.totalorder %s23, 0
      // Predicated region
      $region57: #{tpu_custom_call.1} parent=47 // pred_check
        %p1431 = pneg %p1430
      $region58: #{tpu_custom_call.1} parent=47 // pred_check_branch
        %1433 = sbr.rel (%p1431) target = $region60
      $region59: #{tpu_custom_call.1} parent=47 // pred_region
        %s1434 = sadd.s32 %s23, 1
        %s1435 = smul.u32 %s1434, 256
        %s1436 = sshra.s32 %s1435, 3
        %s1437 = sand.u32 %s1435, 7
        %s1438 = smul.addr %s1436, 4
        %s1439 = scalar_lea.vmem %s291, %s1438
        %v1440 = vld [vmem:[%s1439] sm:$0xf]
        %v1441 = vld [vmem:[%s1439 + $0x4] sm:$0xf]
        %v1444 = vunpack.c.l.b16 %v1440
        %v1445 = vunpack.c.l.b16 %v1441
        %v1446 = vpack.c.b16 %v1445, %v1444
        %v1448 = vsel %vm548, %v1446, 0
        %1450 = vmatprep.subr.bf16.mxu0 0
        %1451 = vmatpush1.bf16.msra.mxu0 %v546
        %1452 = vmatprep.subr.bf16.mxu0 0
        %1453 = vmatpush1.bf16.msra.mxu0 0
        %1454 = vmatprep.subr.bf16.mxu0 0
        %1455 = vmatpush1.bf16.msra.mxu0 0
        %1456 = vmatprep.subr.bf16.mxu0 0
        %1457 = vmatpush1.bf16.msra.mxu0 0
        %1458 = vmatprep.subr.bf16.mxu0 0
        %1459 = vmatpush1.bf16.msra.mxu0 0
        %1460 = vmatprep.subr.bf16.mxu0 0
        %1461 = vmatpush1.bf16.msra.mxu0 0
        %1462 = vmatprep.subr.bf16.mxu0 0
        %1463 = vmatpush1.bf16.msra.mxu0 0
        %1464 = vmatprep.subr.bf16.mxu0 0
        %1465 = vmatpush1.bf16.msra.mxu0 0
        %1466 = vmatprep.subr.bf16.mxu0 0
        %1467 = vmatpush1.bf16.msra.mxu0 0
        %1468 = vmatprep.subr.bf16.mxu0 0
        %1469 = vmatpush1.bf16.msra.mxu0 0
        %1470 = vmatprep.subr.bf16.mxu0 0
        %1471 = vmatpush1.bf16.msra.mxu0 0
        %1472 = vmatprep.subr.bf16.mxu0 0
        %1473 = vmatpush1.bf16.msra.mxu0 0
        %1474 = vmatprep.subr.bf16.mxu0 0
        %1475 = vmatpush1.bf16.msra.mxu0 0
        %1476 = vmatprep.subr.bf16.mxu0 0
        %1477 = vmatpush1.bf16.msra.mxu0 0
        %1478 = vmatprep.subr.bf16.mxu0 0
        %1479 = vmatpush1.bf16.msra.mxu0 0
        %1480 = vmatprep.subr.bf16.mxu0 0
        %1481 = vmatpush1.bf16.msra.mxu0 0
        %1482 = vmatprep.mubr.bf16.mxu0 0
        %1483 = vmatmul.mubr.bf16.gmra.mrb[0].mxu0 %v1448
        %v1484 = vpop.f32.mrb[0].mxu0
        %v1485 = vadd.f32 %v460, %v1484
        %v1486 = vpop.f32.mrb[0].mxu0
        %v1487 = vpop.f32.mrb[0].mxu0
        %v1488 = vadd.f32 %v460, %v1487
        %v1489 = vpop.f32.mrb[0].mxu0
        %1490 = vdwg.mxu0
        %v1491 = vmax.f32 %v1485, 0.0
        %v1492 = vmax.f32 %v1488, 0.0
        %v1493 = vpack.c.bf16 %v1492, %v1491
        %v1495 = vunpack.c.l.b16 %v1493
        %v1496 = vunpack.c.h.b16 %v1493
        %v1497 = vpack.c.b16 %v1495, %v1495
        %v1498 = vpack.c.b16 %v1496, %v1496
        %v1500 = vshrl.u32 %v1497, 16
        %v1502 = vrot.slane %v1500, 7
        %v1503 = vshll.u32 %v1497, 16
        %v1505 = vor.u32 %v1502, %v1503
        %v1506 = vrot.slane %v1502, 4
        %v1508 = vshrl.u32 %v1498, 16
        %v1510 = vrot.slane %v1508, 7
        %v1511 = vshll.u32 %v1498, 16
        %v1513 = vor.u32 %v1510, %v1511
        %v1514 = vsel %vm887, %v1506, %v1513
        %v1515 = vrot.slane %v1510, 4
        %s1519 = scalar_lea.vmem [#allocation2], 204
        %v1520 = vld [vmem:[%s1519] sm:$0xf]
        %v1521 = vsel %vm1210, %v1505, %v1520
        %1522 = vst [vmem:[%s1519] sm:$0xf] %v1521
        %1523 = vst.msk [vmem:[%s1519 + $0x4] sm:$0xf] %vm1214, %v1514
        %v1524 = vld [vmem:[%s1519 + $0x8] sm:$0x1]
        %v1525 = vsel %vm308, %v1515, %v1524
        %1526 = vst [vmem:[%s1519 + $0x8] sm:$0x1] %v1525
      $region60: #{tpu_custom_call.1} parent=47 // pred_fallthru
        _
      // Predicated region
      $region61: #{tpu_custom_call.1} parent=47 // pred_check
        %p1527 = pneg %p1419
      $region62: #{tpu_custom_call.1} parent=47 // pred_check_branch
        %1529 = sbr.rel (%p1527) target = $region64
      $region63: #{tpu_custom_call.1} parent=47 // pred_region
        %s1530 = scalar_lea.vmem [#allocation2], 204
        %v1531 = vld [vmem:[%s1530] sm:$0xf]
        %v1532 = vsel %vm1210, 0, %v1531
        %1533 = vst [vmem:[%s1530] sm:$0xf] %v1532
        %1534 = vst.msk [vmem:[%s1530 + $0x4] sm:$0xf] %vm1214, 0
        %v1535 = vld [vmem:[%s1530 + $0x8] sm:$0x1]
        %v1536 = vsel %vm308, 0, %v1535
        %1537 = vst [vmem:[%s1530 + $0x8] sm:$0x1] %v1536
      $region64: #{tpu_custom_call.1} parent=47 // pred_fallthru
        _
      %v1538 = vld [vmem:[#allocation2] sm:$0xf]
      %v1539 = vld [vmem:[#allocation2 + $0x4] sm:$0xf]
      %v1540 = vld [vmem:[#allocation2 + $0xc] sm:$0xf]
      %v1541 = vld [vmem:[#allocation2 + $0x10] sm:$0xf]
      %v1542 = vld [vmem:[#allocation2 + $0x18] sm:$0xf]
      %v1543 = vld [vmem:[#allocation2 + $0x1c] sm:$0xf]
      %v1544 = vld [vmem:[#allocation2 + $0x24] sm:$0xf]
      %v1545 = vld [vmem:[#allocation2 + $0x28] sm:$0xf]
      %v1546 = vld [vmem:[#allocation2 + $0x30] sm:$0xf]
      %v1547 = vld [vmem:[#allocation2 + $0x34] sm:$0xf]
      %v1548 = vld [vmem:[#allocation2 + $0x3c] sm:$0xf]
      %v1549 = vld [vmem:[#allocation2 + $0x40] sm:$0xf]
      %v1550 = vld [vmem:[#allocation2 + $0x48] sm:$0xf]
      %v1551 = vld [vmem:[#allocation2 + $0x4c] sm:$0xf]
      %v1552 = vld [vmem:[#allocation2 + $0x54] sm:$0xf]
      %v1553 = vld [vmem:[#allocation2 + $0x58] sm:$0xf]
      %v1554 = vld [vmem:[#allocation2 + $0x60] sm:$0xf]
      %v1555 = vld [vmem:[#allocation2 + $0x64] sm:$0xf]
      %v1556 = vld [vmem:[#allocation2 + $0x6c] sm:$0xf]
      %v1557 = vld [vmem:[#allocation2 + $0x70] sm:$0xf]
      %v1558 = vld [vmem:[#allocation2 + $0x78] sm:$0xf]
      %v1559 = vld [vmem:[#allocation2 + $0x7c] sm:$0xf]
      %v1560 = vld [vmem:[#allocation2 + $0x84] sm:$0xf]
      %v1561 = vld [vmem:[#allocation2 + $0x88] sm:$0xf]
      %v1562 = vld [vmem:[#allocation2 + $0x90] sm:$0xf]
      %v1563 = vld [vmem:[#allocation2 + $0x94] sm:$0xf]
      %v1564 = vld [vmem:[#allocation2 + $0x9c] sm:$0xf]
      %v1565 = vld [vmem:[#allocation2 + $0xa0] sm:$0xf]
      %v1566 = vld [vmem:[#allocation2 + $0xa8] sm:$0xf]
      %v1567 = vld [vmem:[#allocation2 + $0xac] sm:$0xf]
      %v1568 = vld [vmem:[#allocation2 + $0xb4] sm:$0xf]
      %v1569 = vld [vmem:[#allocation2 + $0xb8] sm:$0xf]
      %v1570 = vld [vmem:[#allocation2 + $0xc0] sm:$0xf]
      %v1571 = vld [vmem:[#allocation2 + $0xc4] sm:$0xf]
      %v1572 = vld [vmem:[#allocation2 + $0xcc] sm:$0xf]
      %v1573 = vld [vmem:[#allocation2 + $0xd0] sm:$0xf]
      %v1574 = vld [vmem:[#allocation2 + $0x8] sm:$0x1]
      %v1575 = vld [vmem:[#allocation2 + $0x14] sm:$0x1]
      %v1576 = vld [vmem:[#allocation2 + $0x20] sm:$0x1]
      %v1577 = vld [vmem:[#allocation2 + $0x2c] sm:$0x1]
      %v1578 = vld [vmem:[#allocation2 + $0x38] sm:$0x1]
      %v1579 = vld [vmem:[#allocation2 + $0x44] sm:$0x1]
      %v1580 = vld [vmem:[#allocation2 + $0x50] sm:$0x1]
      %v1581 = vld [vmem:[#allocation2 + $0x5c] sm:$0x1]
      %v1582 = vld [vmem:[#allocation2 + $0x68] sm:$0x1]
      %v1583 = vld [vmem:[#allocation2 + $0x74] sm:$0x1]
      %v1584 = vld [vmem:[#allocation2 + $0x80] sm:$0x1]
      %v1585 = vld [vmem:[#allocation2 + $0x8c] sm:$0x1]
      %v1586 = vld [vmem:[#allocation2 + $0x98] sm:$0x1]
      %v1587 = vld [vmem:[#allocation2 + $0xa4] sm:$0x1]
      %v1588 = vld [vmem:[#allocation2 + $0xb0] sm:$0x1]
      %v1589 = vld [vmem:[#allocation2 + $0xbc] sm:$0x1]
      %v1590 = vld [vmem:[#allocation2 + $0xc8] sm:$0x1]
      %v1591 = vld [vmem:[#allocation2 + $0xd4] sm:$0x1]
      %v1592 = vld [vmem:[#allocation2] sm:$0xe]
      %v1593 = vld [vmem:[#allocation2 + $0xc] sm:$0xe]
      %v1594 = vld [vmem:[#allocation2 + $0x18] sm:$0xe]
      %v1595 = vld [vmem:[#allocation2 + $0x24] sm:$0xe]
      %v1596 = vld [vmem:[#allocation2 + $0x30] sm:$0xe]
      %v1597 = vld [vmem:[#allocation2 + $0x3c] sm:$0xe]
      %v1598 = vld [vmem:[#allocation2 + $0x48] sm:$0xe]
      %v1599 = vld [vmem:[#allocation2 + $0x54] sm:$0xe]
      %v1600 = vld [vmem:[#allocation2 + $0x60] sm:$0xe]
      %v1601 = vld [vmem:[#allocation2 + $0x6c] sm:$0xe]
      %v1602 = vld [vmem:[#allocation2 + $0x78] sm:$0xe]
      %v1603 = vld [vmem:[#allocation2 + $0x84] sm:$0xe]
      %v1604 = vld [vmem:[#allocation2 + $0x90] sm:$0xe]
      %v1605 = vld [vmem:[#allocation2 + $0x9c] sm:$0xe]
      %v1606 = vld [vmem:[#allocation2 + $0xa8] sm:$0xe]
      %v1607 = vld [vmem:[#allocation2 + $0xb4] sm:$0xe]
      %v1608 = vld [vmem:[#allocation2 + $0xc0] sm:$0xe]
      %v1609 = vld [vmem:[#allocation2 + $0xcc] sm:$0xe]
      %v1646 = vunpack.c.l.b16 %v1538
      %v1647 = vunpack.c.l.b16 %v1539
      %v1648 = vunpack.c.l.b16 %v1540
      %v1649 = vunpack.c.l.b16 %v1541
      %v1650 = vunpack.c.l.b16 %v1542
      %v1651 = vunpack.c.l.b16 %v1543
      %v1652 = vunpack.c.l.b16 %v1544
      %v1653 = vunpack.c.l.b16 %v1545
      %v1654 = vunpack.c.l.b16 %v1546
      %v1655 = vunpack.c.l.b16 %v1547
      %v1656 = vunpack.c.l.b16 %v1548
      %v1657 = vunpack.c.l.b16 %v1549
      %v1658 = vunpack.c.l.b16 %v1550
      %v1659 = vunpack.c.l.b16 %v1551
      %v1660 = vunpack.c.l.b16 %v1552
      %v1661 = vunpack.c.l.b16 %v1553
      %v1662 = vunpack.c.l.b16 %v1554
      %v1663 = vunpack.c.l.b16 %v1555
      %v1664 = vunpack.c.l.b16 %v1556
      %v1665 = vunpack.c.l.b16 %v1557
      %v1666 = vunpack.c.l.b16 %v1558
      %v1667 = vunpack.c.l.b16 %v1559
      %v1668 = vunpack.c.l.b16 %v1560
      %v1669 = vunpack.c.l.b16 %v1561
      %v1670 = vunpack.c.l.b16 %v1562
      %v1671 = vunpack.c.l.b16 %v1563
      %v1672 = vunpack.c.l.b16 %v1564
      %v1673 = vunpack.c.l.b16 %v1565
      %v1674 = vunpack.c.l.b16 %v1566
      %v1675 = vunpack.c.l.b16 %v1567
      %v1676 = vunpack.c.l.b16 %v1568
      %v1677 = vunpack.c.l.b16 %v1569
      %v1678 = vunpack.c.l.b16 %v1570
      %v1679 = vunpack.c.l.b16 %v1571
      %v1680 = vunpack.c.l.b16 %v1572
      %v1681 = vunpack.c.l.b16 %v1573
      %v1682 = vpack.c.b16 %v1647, %v1646
      %v1683 = vpack.c.b16 %v1649, %v1648
      %v1684 = vpack.c.b16 %v1651, %v1650
      %v1685 = vpack.c.b16 %v1653, %v1652
      %v1686 = vpack.c.b16 %v1655, %v1654
      %v1687 = vpack.c.b16 %v1657, %v1656
      %v1688 = vpack.c.b16 %v1659, %v1658
      %v1689 = vpack.c.b16 %v1661, %v1660
      %v1690 = vpack.c.b16 %v1663, %v1662
      %v1691 = vpack.c.b16 %v1665, %v1664
      %v1692 = vpack.c.b16 %v1667, %v1666
      %v1693 = vpack.c.b16 %v1669, %v1668
      %v1694 = vpack.c.b16 %v1671, %v1670
      %v1695 = vpack.c.b16 %v1673, %v1672
      %v1696 = vpack.c.b16 %v1675, %v1674
      %v1697 = vpack.c.b16 %v1677, %v1676
      %v1698 = vpack.c.b16 %v1679, %v1678
      %v1699 = vpack.c.b16 %v1681, %v1680
      %v1718 = vunpack.c.l.b16 %v1574
      %v1719 = vunpack.c.l.b16 %v1575
      %v1720 = vunpack.c.l.b16 %v1576
      %v1721 = vunpack.c.l.b16 %v1577
      %v1722 = vunpack.c.l.b16 %v1578
      %v1723 = vunpack.c.l.b16 %v1579
      %v1724 = vunpack.c.l.b16 %v1580
      %v1725 = vunpack.c.l.b16 %v1581
      %v1726 = vunpack.c.l.b16 %v1582
      %v1727 = vunpack.c.l.b16 %v1583
      %v1728 = vunpack.c.l.b16 %v1584
      %v1729 = vunpack.c.l.b16 %v1585
      %v1730 = vunpack.c.l.b16 %v1586
      %v1731 = vunpack.c.l.b16 %v1587
      %v1732 = vunpack.c.l.b16 %v1588
      %v1733 = vunpack.c.l.b16 %v1589
      %v1734 = vunpack.c.l.b16 %v1590
      %v1735 = vunpack.c.l.b16 %v1591
      %v1736 = vpack.c.b16 %v1718, %v1718
      %v1737 = vpack.c.b16 %v1719, %v1719
      %v1738 = vpack.c.b16 %v1720, %v1720
      %v1739 = vpack.c.b16 %v1721, %v1721
      %v1740 = vpack.c.b16 %v1722, %v1722
      %v1741 = vpack.c.b16 %v1723, %v1723
      %v1742 = vpack.c.b16 %v1724, %v1724
      %v1743 = vpack.c.b16 %v1725, %v1725
      %v1744 = vpack.c.b16 %v1726, %v1726
      %v1745 = vpack.c.b16 %v1727, %v1727
      %v1746 = vpack.c.b16 %v1728, %v1728
      %v1747 = vpack.c.b16 %v1729, %v1729
      %v1748 = vpack.c.b16 %v1730, %v1730
      %v1749 = vpack.c.b16 %v1731, %v1731
      %v1750 = vpack.c.b16 %v1732, %v1732
      %v1751 = vpack.c.b16 %v1733, %v1733
      %v1752 = vpack.c.b16 %v1734, %v1734
      %v1753 = vpack.c.b16 %v1735, %v1735
      %vm1754 = vsmask.f32 7424
      %v1756 = vshrl.u32 %v1682, 16
      %v1758 = vshll.u32 %v1682, 16
      %v1760 = vrot.slane %v1758, 1
      %v1761 = vor.u32 %v1756, %v1760
      %v1763 = vshll.u32 %v1736, 16
      %v1765 = vrot.slane %v1763, 1
      %v1766 = vsel %vm1754, %v1761, %v1765
      %v1768 = vshrl.u32 %v1683, 16
      %v1770 = vshll.u32 %v1683, 16
      %v1772 = vrot.slane %v1770, 1
      %v1773 = vor.u32 %v1768, %v1772
      %v1775 = vshll.u32 %v1737, 16
      %v1777 = vrot.slane %v1775, 1
      %v1778 = vsel %vm1754, %v1773, %v1777
      %v1780 = vshrl.u32 %v1684, 16
      %v1782 = vshll.u32 %v1684, 16
      %v1784 = vrot.slane %v1782, 1
      %v1785 = vor.u32 %v1780, %v1784
      %v1787 = vshll.u32 %v1738, 16
      %v1789 = vrot.slane %v1787, 1
      %v1790 = vsel %vm1754, %v1785, %v1789
      %v1792 = vshrl.u32 %v1685, 16
      %v1794 = vshll.u32 %v1685, 16
      %v1796 = vrot.slane %v1794, 1
      %v1797 = vor.u32 %v1792, %v1796
      %v1799 = vshll.u32 %v1739, 16
      %v1801 = vrot.slane %v1799, 1
      %v1802 = vsel %vm1754, %v1797, %v1801
      %v1804 = vshrl.u32 %v1686, 16
      %v1806 = vshll.u32 %v1686, 16
      %v1808 = vrot.slane %v1806, 1
      %v1809 = vor.u32 %v1804, %v1808
      %v1811 = vshll.u32 %v1740, 16
      %v1813 = vrot.slane %v1811, 1
      %v1814 = vsel %vm1754, %v1809, %v1813
      %v1816 = vshrl.u32 %v1687, 16
      %v1818 = vshll.u32 %v1687, 16
      %v1820 = vrot.slane %v1818, 1
      %v1821 = vor.u32 %v1816, %v1820
      %v1823 = vshll.u32 %v1741, 16
      %v1825 = vrot.slane %v1823, 1
      %v1826 = vsel %vm1754, %v1821, %v1825
      %v1828 = vshrl.u32 %v1688, 16
      %v1830 = vshll.u32 %v1688, 16
      %v1832 = vrot.slane %v1830, 1
      %v1833 = vor.u32 %v1828, %v1832
      %v1835 = vshll.u32 %v1742, 16
      %v1837 = vrot.slane %v1835, 1
      %v1838 = vsel %vm1754, %v1833, %v1837
      %v1840 = vshrl.u32 %v1689, 16
      %v1842 = vshll.u32 %v1689, 16
      %v1844 = vrot.slane %v1842, 1
      %v1845 = vor.u32 %v1840, %v1844
      %v1847 = vshll.u32 %v1743, 16
      %v1849 = vrot.slane %v1847, 1
      %v1850 = vsel %vm1754, %v1845, %v1849
      %v1852 = vshrl.u32 %v1690, 16
      %v1854 = vshll.u32 %v1690, 16
      %v1856 = vrot.slane %v1854, 1
      %v1857 = vor.u32 %v1852, %v1856
      %v1859 = vshll.u32 %v1744, 16
      %v1861 = vrot.slane %v1859, 1
      %v1862 = vsel %vm1754, %v1857, %v1861
      %v1864 = vshrl.u32 %v1691, 16
      %v1866 = vshll.u32 %v1691, 16
      %v1868 = vrot.slane %v1866, 1
      %v1869 = vor.u32 %v1864, %v1868
      %v1871 = vshll.u32 %v1745, 16
      %v1873 = vrot.slane %v1871, 1
      %v1874 = vsel %vm1754, %v1869, %v1873
      %v1876 = vshrl.u32 %v1692, 16
      %v1878 = vshll.u32 %v1692, 16
      %v1880 = vrot.slane %v1878, 1
      %v1881 = vor.u32 %v1876, %v1880
      %v1883 = vshll.u32 %v1746, 16
      %v1885 = vrot.slane %v1883, 1
      %v1886 = vsel %vm1754, %v1881, %v1885
      %v1888 = vshrl.u32 %v1693, 16
      %v1890 = vshll.u32 %v1693, 16
      %v1892 = vrot.slane %v1890, 1
      %v1893 = vor.u32 %v1888, %v1892
      %v1895 = vshll.u32 %v1747, 16
      %v1897 = vrot.slane %v1895, 1
      %v1898 = vsel %vm1754, %v1893, %v1897
      %v1900 = vshrl.u32 %v1694, 16
      %v1902 = vshll.u32 %v1694, 16
      %v1904 = vrot.slane %v1902, 1
      %v1905 = vor.u32 %v1900, %v1904
      %v1907 = vshll.u32 %v1748, 16
      %v1909 = vrot.slane %v1907, 1
      %v1910 = vsel %vm1754, %v1905, %v1909
      %v1912 = vshrl.u32 %v1695, 16
      %v1914 = vshll.u32 %v1695, 16
      %v1916 = vrot.slane %v1914, 1
      %v1917 = vor.u32 %v1912, %v1916
      %v1919 = vshll.u32 %v1749, 16
      %v1921 = vrot.slane %v1919, 1
      %v1922 = vsel %vm1754, %v1917, %v1921
      %v1924 = vshrl.u32 %v1696, 16
      %v1926 = vshll.u32 %v1696, 16
      %v1928 = vrot.slane %v1926, 1
      %v1929 = vor.u32 %v1924, %v1928
      %v1931 = vshll.u32 %v1750, 16
      %v1933 = vrot.slane %v1931, 1
      %v1934 = vsel %vm1754, %v1929, %v1933
      %v1936 = vshrl.u32 %v1697, 16
      %v1938 = vshll.u32 %v1697, 16
      %v1940 = vrot.slane %v1938, 1
      %v1941 = vor.u32 %v1936, %v1940
      %v1943 = vshll.u32 %v1751, 16
      %v1945 = vrot.slane %v1943, 1
      %v1946 = vsel %vm1754, %v1941, %v1945
      %v1948 = vshrl.u32 %v1698, 16
      %v1950 = vshll.u32 %v1698, 16
      %v1952 = vrot.slane %v1950, 1
      %v1953 = vor.u32 %v1948, %v1952
      %v1955 = vshll.u32 %v1752, 16
      %v1957 = vrot.slane %v1955, 1
      %v1958 = vsel %vm1754, %v1953, %v1957
      %v1960 = vshrl.u32 %v1699, 16
      %v1962 = vshll.u32 %v1699, 16
      %v1964 = vrot.slane %v1962, 1
      %v1965 = vor.u32 %v1960, %v1964
      %v1967 = vshll.u32 %v1753, 16
      %v1969 = vrot.slane %v1967, 1
      %v1970 = vsel %vm1754, %v1965, %v1969
      %1971 = vrot.lane.b32.xlu0 %v1766, 4
      %v1972 = vpop.permute.xlu0 %1971
      %1973 = vrot.lane.b32.xlu0 %v1778, 4
      %v1974 = vpop.permute.xlu0 %1973
      %1975 = vrot.lane.b32.xlu0 %v1790, 4
      %v1976 = vpop.permute.xlu0 %1975
      %1977 = vrot.lane.b32.xlu0 %v1802, 4
      %v1978 = vpop.permute.xlu0 %1977
      %1979 = vrot.lane.b32.xlu0 %v1814, 4
      %v1980 = vpop.permute.xlu0 %1979
      %1981 = vrot.lane.b32.xlu0 %v1826, 4
      %v1982 = vpop.permute.xlu0 %1981
      %1983 = vrot.lane.b32.xlu0 %v1838, 4
      %v1984 = vpop.permute.xlu0 %1983
      %1985 = vrot.lane.b32.xlu0 %v1850, 4
      %v1986 = vpop.permute.xlu0 %1985
      %1987 = vrot.lane.b32.xlu0 %v1862, 4
      %v1988 = vpop.permute.xlu0 %1987
      %1989 = vrot.lane.b32.xlu0 %v1874, 4
      %v1990 = vpop.permute.xlu0 %1989
      %1991 = vrot.lane.b32.xlu0 %v1886, 4
      %v1992 = vpop.permute.xlu0 %1991
      %1993 = vrot.lane.b32.xlu0 %v1898, 4
      %v1994 = vpop.permute.xlu0 %1993
      %1995 = vrot.lane.b32.xlu0 %v1910, 4
      %v1996 = vpop.permute.xlu0 %1995
      %1997 = vrot.lane.b32.xlu0 %v1922, 4
      %v1998 = vpop.permute.xlu0 %1997
      %1999 = vrot.lane.b32.xlu0 %v1934, 4
      %v2000 = vpop.permute.xlu0 %1999
      %2001 = vrot.lane.b32.xlu0 %v1946, 4
      %v2002 = vpop.permute.xlu0 %2001
      %2003 = vrot.lane.b32.xlu0 %v1958, 4
      %v2004 = vpop.permute.xlu0 %2003
      %2005 = vrot.lane.b32.xlu0 %v1970, 4
      %v2006 = vpop.permute.xlu0 %2005
      %v2025 = vunpack.c.l.b16 %v1592
      %v2026 = vunpack.c.l.b16 %v1593
      %v2027 = vunpack.c.l.b16 %v1594
      %v2028 = vunpack.c.l.b16 %v1595
      %v2029 = vunpack.c.l.b16 %v1596
      %v2030 = vunpack.c.l.b16 %v1597
      %v2031 = vunpack.c.l.b16 %v1598
      %v2032 = vunpack.c.l.b16 %v1599
      %v2033 = vunpack.c.l.b16 %v1600
      %v2034 = vunpack.c.l.b16 %v1601
      %v2035 = vunpack.c.l.b16 %v1602
      %v2036 = vunpack.c.l.b16 %v1603
      %v2037 = vunpack.c.l.b16 %v1604
      %v2038 = vunpack.c.l.b16 %v1605
      %v2039 = vunpack.c.l.b16 %v1606
      %v2040 = vunpack.c.l.b16 %v1607
      %v2041 = vunpack.c.l.b16 %v1608
      %v2042 = vunpack.c.l.b16 %v1609
      %v2043 = vpack.c.b16 %v1647, %v2025
      %v2044 = vpack.c.b16 %v1649, %v2026
      %v2045 = vpack.c.b16 %v1651, %v2027
      %v2046 = vpack.c.b16 %v1653, %v2028
      %v2047 = vpack.c.b16 %v1655, %v2029
      %v2048 = vpack.c.b16 %v1657, %v2030
      %v2049 = vpack.c.b16 %v1659, %v2031
      %v2050 = vpack.c.b16 %v1661, %v2032
      %v2051 = vpack.c.b16 %v1663, %v2033
      %v2052 = vpack.c.b16 %v1665, %v2034
      %v2053 = vpack.c.b16 %v1667, %v2035
      %v2054 = vpack.c.b16 %v1669, %v2036
      %v2055 = vpack.c.b16 %v1671, %v2037
      %v2056 = vpack.c.b16 %v1673, %v2038
      %v2057 = vpack.c.b16 %v1675, %v2039
      %v2058 = vpack.c.b16 %v1677, %v2040
      %v2059 = vpack.c.b16 %v1679, %v2041
      %v2060 = vpack.c.b16 %v1681, %v2042
      %vm2061 = vcmask 1046528
      %v2062 = vrot.slane %v2043, 1
      %v2063 = vrot.slane %v1736, 1
      %v2064 = vsel %vm2061, %v2062, %v2063
      %v2065 = vrot.slane %v2044, 1
      %v2066 = vrot.slane %v1737, 1
      %v2067 = vsel %vm2061, %v2065, %v2066
      %v2068 = vrot.slane %v2045, 1
      %v2069 = vrot.slane %v1738, 1
      %v2070 = vsel %vm2061, %v2068, %v2069
      %v2071 = vrot.slane %v2046, 1
      %v2072 = vrot.slane %v1739, 1
      %v2073 = vsel %vm2061, %v2071, %v2072
      %v2074 = vrot.slane %v2047, 1
      %v2075 = vrot.slane %v1740, 1
      %v2076 = vsel %vm2061, %v2074, %v2075
      %v2077 = vrot.slane %v2048, 1
      %v2078 = vrot.slane %v1741, 1
      %v2079 = vsel %vm2061, %v2077, %v2078
      %v2080 = vrot.slane %v2049, 1
      %v2081 = vrot.slane %v1742, 1
      %v2082 = vsel %vm2061, %v2080, %v2081
      %v2083 = vrot.slane %v2050, 1
      %v2084 = vrot.slane %v1743, 1
      %v2085 = vsel %vm2061, %v2083, %v2084
      %v2086 = vrot.slane %v2051, 1
      %v2087 = vrot.slane %v1744, 1
      %v2088 = vsel %vm2061, %v2086, %v2087
      %v2089 = vrot.slane %v2052, 1
      %v2090 = vrot.slane %v1745, 1
      %v2091 = vsel %vm2061, %v2089, %v2090
      %v2092 = vrot.slane %v2053, 1
      %v2093 = vrot.slane %v1746, 1
      %v2094 = vsel %vm2061, %v2092, %v2093
      %v2095 = vrot.slane %v2054, 1
      %v2096 = vrot.slane %v1747, 1
      %v2097 = vsel %vm2061, %v2095, %v2096
      %v2098 = vrot.slane %v2055, 1
      %v2099 = vrot.slane %v1748, 1
      %v2100 = vsel %vm2061, %v2098, %v2099
      %v2101 = vrot.slane %v2056, 1
      %v2102 = vrot.slane %v1749, 1
      %v2103 = vsel %vm2061, %v2101, %v2102
      %v2104 = vrot.slane %v2057, 1
      %v2105 = vrot.slane %v1750, 1
      %v2106 = vsel %vm2061, %v2104, %v2105
      %v2107 = vrot.slane %v2058, 1
      %v2108 = vrot.slane %v1751, 1
      %v2109 = vsel %vm2061, %v2107, %v2108
      %v2110 = vrot.slane %v2059, 1
      %v2111 = vrot.slane %v1752, 1
      %v2112 = vsel %vm2061, %v2110, %v2111
      %v2113 = vrot.slane %v2060, 1
      %v2114 = vrot.slane %v1753, 1
      %v2115 = vsel %vm2061, %v2113, %v2114
      %2116 = vrot.lane.b32.xlu0 %v2064, 8
      %v2117 = vpop.permute.xlu0 %2116
      %2118 = vrot.lane.b32.xlu0 %v2067, 8
      %v2119 = vpop.permute.xlu0 %2118
      %2120 = vrot.lane.b32.xlu0 %v2070, 8
      %v2121 = vpop.permute.xlu0 %2120
      %2122 = vrot.lane.b32.xlu0 %v2073, 8
      %v2123 = vpop.permute.xlu0 %2122
      %2124 = vrot.lane.b32.xlu0 %v2076, 8
      %v2125 = vpop.permute.xlu0 %2124
      %2126 = vrot.lane.b32.xlu0 %v2079, 8
      %v2127 = vpop.permute.xlu0 %2126
      %2128 = vrot.lane.b32.xlu0 %v2082, 8
      %v2129 = vpop.permute.xlu0 %2128
      %2130 = vrot.lane.b32.xlu0 %v2085, 8
      %v2131 = vpop.permute.xlu0 %2130
      %2132 = vrot.lane.b32.xlu0 %v2088, 8
      %v2133 = vpop.permute.xlu0 %2132
      %2134 = vrot.lane.b32.xlu0 %v2091, 8
      %v2135 = vpop.permute.xlu0 %2134
      %2136 = vrot.lane.b32.xlu0 %v2094, 8
      %v2137 = vpop.permute.xlu0 %2136
      %2138 = vrot.lane.b32.xlu0 %v2097, 8
      %v2139 = vpop.permute.xlu0 %2138
      %2140 = vrot.lane.b32.xlu0 %v2100, 8
      %v2141 = vpop.permute.xlu0 %2140
      %2142 = vrot.lane.b32.xlu0 %v2103, 8
      %v2143 = vpop.permute.xlu0 %2142
      %2144 = vrot.lane.b32.xlu0 %v2106, 8
      %v2145 = vpop.permute.xlu0 %2144
      %2146 = vrot.lane.b32.xlu0 %v2109, 8
      %v2147 = vpop.permute.xlu0 %2146
      %2148 = vrot.lane.b32.xlu0 %v2112, 8
      %v2149 = vpop.permute.xlu0 %2148
      %2150 = vrot.lane.b32.xlu0 %v2115, 8
      %v2151 = vpop.permute.xlu0 %2150
      %vm2152 = vcmask 31744
      %v2154 = vsel %vm2152, %v1682, %v1972
      %v2156 = vsel %vm2152, %v1683, %v1974
      %v2158 = vsel %vm2152, %v1684, %v1976
      %v2160 = vsel %vm2152, %v1685, %v1978
      %v2162 = vsel %vm2152, %v1686, %v1980
      %v2164 = vsel %vm2152, %v1687, %v1982
      %v2166 = vsel %vm2152, %v1688, %v1984
      %v2168 = vsel %vm2152, %v1689, %v1986
      %v2170 = vsel %vm2152, %v1690, %v1988
      %v2172 = vsel %vm2152, %v1691, %v1990
      %v2174 = vsel %vm2152, %v1692, %v1992
      %v2176 = vsel %vm2152, %v1693, %v1994
      %v2178 = vsel %vm2152, %v1694, %v1996
      %v2180 = vsel %vm2152, %v1695, %v1998
      %v2182 = vsel %vm2152, %v1696, %v2000
      %v2184 = vsel %vm2152, %v1697, %v2002
      %v2186 = vsel %vm2152, %v1698, %v2004
      %v2188 = vsel %vm2152, %v1699, %v2006
      %vm2189 = vcmask 64512
      %v2191 = vsel %vm2189, %v2154, %v2117
      %v2194 = vsel %vm2189, %v2156, %v2119
      %v2197 = vsel %vm2189, %v2158, %v2121
      %v2200 = vsel %vm2189, %v2160, %v2123
      %v2203 = vsel %vm2189, %v2162, %v2125
      %v2206 = vsel %vm2189, %v2164, %v2127
      %v2209 = vsel %vm2189, %v2166, %v2129
      %v2212 = vsel %vm2189, %v2168, %v2131
      %v2215 = vsel %vm2189, %v2170, %v2133
      %v2218 = vsel %vm2189, %v2172, %v2135
      %v2221 = vsel %vm2189, %v2174, %v2137
      %v2224 = vsel %vm2189, %v2176, %v2139
      %v2227 = vsel %vm2189, %v2178, %v2141
      %v2230 = vsel %vm2189, %v2180, %v2143
      %v2233 = vsel %vm2189, %v2182, %v2145
      %v2236 = vsel %vm2189, %v2184, %v2147
      %v2239 = vsel %vm2189, %v2186, %v2149
      %v2242 = vsel %vm2189, %v2188, %v2151
      %vm2244 = vcmask 97280
      %2245 = vst.msk [vmem:[#allocation3] sm:$0xff] %vm2244, %v2191
      %2246 = vst.msk [vmem:[#allocation3 + $0x8] sm:$0xff] %vm2244, %v2194
      %2247 = vst.msk [vmem:[#allocation3 + $0x10] sm:$0xff] %vm2244, %v2197
      %2248 = vst.msk [vmem:[#allocation3 + $0x18] sm:$0xff] %vm2244, %v2200
      %2249 = vst.msk [vmem:[#allocation3 + $0x20] sm:$0xff] %vm2244, %v2203
      %2250 = vst.msk [vmem:[#allocation3 + $0x28] sm:$0xff] %vm2244, %v2206
      %2251 = vst.msk [vmem:[#allocation3 + $0x30] sm:$0xff] %vm2244, %v2209
      %2252 = vst.msk [vmem:[#allocation3 + $0x38] sm:$0xff] %vm2244, %v2212
      %2253 = vst.msk [vmem:[#allocation3 + $0x40] sm:$0xff] %vm2244, %v2215
      %2254 = vst.msk [vmem:[#allocation3 + $0x48] sm:$0xff] %vm2244, %v2218
      %2255 = vst.msk [vmem:[#allocation3 + $0x50] sm:$0xff] %vm2244, %v2221
      %2256 = vst.msk [vmem:[#allocation3 + $0x58] sm:$0xff] %vm2244, %v2224
      %2257 = vst.msk [vmem:[#allocation3 + $0x60] sm:$0xff] %vm2244, %v2227
      %2258 = vst.msk [vmem:[#allocation3 + $0x68] sm:$0xff] %vm2244, %v2230
      %2259 = vst.msk [vmem:[#allocation3 + $0x70] sm:$0xff] %vm2244, %v2233
      %2260 = vst.msk [vmem:[#allocation3 + $0x78] sm:$0xff] %vm2244, %v2236
      %2261 = vst.msk [vmem:[#allocation3 + $0x80] sm:$0xff] %vm2244, %v2239
      %2262 = vst.msk [vmem:[#allocation3 + $0x88] sm:$0xff] %vm2244, %v2242
      %v2263 = vld [vmem:[#allocation3] sm:$0xff]
      %v2264 = vld [vmem:[#allocation3 + $0x8] sm:$0xff]
      %v2265 = vld [vmem:[#allocation3 + $0x10] sm:$0xff]
      %v2266 = vld [vmem:[#allocation3 + $0x18] sm:$0xff]
      %v2267 = vld [vmem:[#allocation3 + $0x20] sm:$0xff]
      %v2268 = vld [vmem:[#allocation3 + $0x28] sm:$0xff]
      %v2269 = vld [vmem:[#allocation3 + $0x30] sm:$0xff]
      %v2270 = vld [vmem:[#allocation3 + $0x38] sm:$0xff]
      %v2271 = vld [vmem:[#allocation3 + $0x40] sm:$0xff]
      %v2272 = vld [vmem:[#allocation3 + $0x48] sm:$0xff]
      %v2273 = vld [vmem:[#allocation3 + $0x50] sm:$0xff]
      %v2274 = vld [vmem:[#allocation3 + $0x58] sm:$0xff]
      %v2275 = vld [vmem:[#allocation3 + $0x60] sm:$0xff]
      %v2276 = vld [vmem:[#allocation3 + $0x68] sm:$0xff]
      %v2277 = vld [vmem:[#allocation3 + $0x70] sm:$0xff]
      %v2278 = vld [vmem:[#allocation3 + $0x78] sm:$0xff]
      %v2279 = vld [vmem:[%s3] sm:$0xf]
      %v2280 = vld [vmem:[%s3 + $0x4] sm:$0x3]
      %s2281 = scalar_lea.vmem [#allocation3], 8
      %v2282 = vld [vmem:[%s2281] sm:$0xff]
      %v2283 = vld [vmem:[%s2281 + $0x8] sm:$0xff]
      %v2284 = vld [vmem:[%s2281 + $0x10] sm:$0xff]
      %v2285 = vld [vmem:[%s2281 + $0x18] sm:$0xff]
      %v2286 = vld [vmem:[%s2281 + $0x20] sm:$0xff]
      %v2287 = vld [vmem:[%s2281 + $0x28] sm:$0xff]
      %v2288 = vld [vmem:[%s2281 + $0x30] sm:$0xff]
      %v2289 = vld [vmem:[%s2281 + $0x38] sm:$0xff]
      %v2290 = vld [vmem:[%s2281 + $0x40] sm:$0xff]
      %v2291 = vld [vmem:[%s2281 + $0x48] sm:$0xff]
      %v2292 = vld [vmem:[%s2281 + $0x50] sm:$0xff]
      %v2293 = vld [vmem:[%s2281 + $0x58] sm:$0xff]
      %v2294 = vld [vmem:[%s2281 + $0x60] sm:$0xff]
      %v2295 = vld [vmem:[%s2281 + $0x68] sm:$0xff]
      %v2296 = vld [vmem:[%s2281 + $0x70] sm:$0xff]
      %v2297 = vld [vmem:[%s2281 + $0x78] sm:$0xff]
      %s2298 = scalar_lea.vmem %s3, 8
      %v2299 = vld [vmem:[%s2298] sm:$0xf]
      %v2300 = vld [vmem:[%s2298 + $0x4] sm:$0x3]
      %v2303 = vunpack.c.l.b16 %v2299
      %v2304 = vunpack.c.l.b16 %v2300
      %v2305 = vpack.c.b16 %v2304, %v2303
      %v2307 = vsel %vm2244, %v2282, 0
      %v2310 = vsel %vm2244, %v2283, 0
      %v2313 = vsel %vm2244, %v2284, 0
      %v2316 = vsel %vm2244, %v2285, 0
      %v2319 = vsel %vm2244, %v2286, 0
      %v2322 = vsel %vm2244, %v2287, 0
      %v2325 = vsel %vm2244, %v2288, 0
      %v2328 = vsel %vm2244, %v2289, 0
      %v2331 = vsel %vm2244, %v2290, 0
      %v2334 = vsel %vm2244, %v2291, 0
      %v2337 = vsel %vm2244, %v2292, 0
      %v2340 = vsel %vm2244, %v2293, 0
      %v2343 = vsel %vm2244, %v2294, 0
      %v2346 = vsel %vm2244, %v2295, 0
      %v2349 = vsel %vm2244, %v2296, 0
      %v2352 = vsel %vm2244, %v2297, 0
      %vm2354 = vcmask 1045504
      %v2356 = vsel %vm2354, %v2305, 0
      %2358 = vmatprep.subr.bf16.mxu0 0
      %2359 = vmatpush1.bf16.msra.mxu0 %v2356
      %2360 = vmatprep.subr.bf16.mxu0 0
      %2361 = vmatpush1.bf16.msra.mxu0 0
      %2362 = vmatprep.subr.bf16.mxu0 0
      %2363 = vmatpush1.bf16.msra.mxu0 0
      %2364 = vmatprep.subr.bf16.mxu0 0
      %2365 = vmatpush1.bf16.msra.mxu0 0
      %2366 = vmatprep.subr.bf16.mxu0 0
      %2367 = vmatpush1.bf16.msra.mxu0 0
      %2368 = vmatprep.subr.bf16.mxu0 0
      %2369 = vmatpush1.bf16.msra.mxu0 0
      %2370 = vmatprep.subr.bf16.mxu0 0
      %2371 = vmatpush1.bf16.msra.mxu0 0
      %2372 = vmatprep.subr.bf16.mxu0 0
      %2373 = vmatpush1.bf16.msra.mxu0 0
      %2374 = vmatprep.subr.bf16.mxu0 0
      %2375 = vmatpush1.bf16.msra.mxu0 0
      %2376 = vmatprep.subr.bf16.mxu0 0
      %2377 = vmatpush1.bf16.msra.mxu0 0
      %2378 = vmatprep.subr.bf16.mxu0 0
      %2379 = vmatpush1.bf16.msra.mxu0 0
      %2380 = vmatprep.subr.bf16.mxu0 0
      %2381 = vmatpush1.bf16.msra.mxu0 0
      %2382 = vmatprep.subr.bf16.mxu0 0
      %2383 = vmatpush1.bf16.msra.mxu0 0
      %2384 = vmatprep.subr.bf16.mxu0 0
      %2385 = vmatpush1.bf16.msra.mxu0 0
      %2386 = vmatprep.subr.bf16.mxu0 0
      %2387 = vmatpush1.bf16.msra.mxu0 0
      %2388 = vmatprep.subr.bf16.mxu0 0
      %2389 = vmatpush1.bf16.msra.mxu0 0
      %2390 = vmatprep.mubr.bf16.mxu0 0
      %2391 = vmatmul.mubr.bf16.gmra.mrb[0].mxu0 %v2307
      %v2392 = vpop.f32.mrb[0].mxu0
      %v2393 = vadd.f32 0.0, %v2392
      %v2394 = vpop.f32.mrb[0].mxu0
      %v2395 = vpop.f32.mrb[0].mxu0
      %v2396 = vadd.f32 0.0, %v2395
      %v2397 = vpop.f32.mrb[0].mxu0
      %2398 = vmatprep.mubr.bf16.mxu0 0
      %2399 = vmatmul.mubr.bf16.gmra.mrb[0].mxu0 %v2310
      %v2400 = vpop.f32.mrb[0].mxu0
      %v2401 = vadd.f32 0.0, %v2400
      %v2402 = vpop.f32.mrb[0].mxu0
      %v2403 = vpop.f32.mrb[0].mxu0
      %v2404 = vadd.f32 0.0, %v2403
      %v2405 = vpop.f32.mrb[0].mxu0
      %2406 = vmatprep.mubr.bf16.mxu0 0
      %2407 = vmatmul.mubr.bf16.gmra.mrb[0].mxu0 %v2313
      %v2408 = vpop.f32.mrb[0].mxu0
      %v2409 = vadd.f32 0.0, %v2408
      %v2410 = vpop.f32.mrb[0].mxu0
      %v2411 = vpop.f32.mrb[0].mxu0
      %v2412 = vadd.f32 0.0, %v2411
      %v2413 = vpop.f32.mrb[0].mxu0
      %2414 = vmatprep.mubr.bf16.mxu0 0
      %2415 = vmatmul.mubr.bf16.gmra.mrb[0].mxu0 %v2316
      %v2416 = vpop.f32.mrb[0].mxu0
      %v2417 = vadd.f32 0.0, %v2416
      %v2418 = vpop.f32.mrb[0].mxu0
      %v2419 = vpop.f32.mrb[0].mxu0
      %v2420 = vadd.f32 0.0, %v2419
      %v2421 = vpop.f32.mrb[0].mxu0
      %2422 = vmatprep.mubr.bf16.mxu0 0
      %2423 = vmatmul.mubr.bf16.gmra.mrb[0].mxu0 %v2319
      %v2424 = vpop.f32.mrb[0].mxu0
      %v2425 = vadd.f32 0.0, %v2424
      %v2426 = vpop.f32.mrb[0].mxu0
      %v2427 = vpop.f32.mrb[0].mxu0
      %v2428 = vadd.f32 0.0, %v2427
      %v2429 = vpop.f32.mrb[0].mxu0
      %2430 = vmatprep.mubr.bf16.mxu0 0
      %2431 = vmatmul.mubr.bf16.gmra.mrb[0].mxu0 %v2322
      %v2432 = vpop.f32.mrb[0].mxu0
      %v2433 = vadd.f32 0.0, %v2432
      %v2434 = vpop.f32.mrb[0].mxu0
      %v2435 = vpop.f32.mrb[0].mxu0
      %v2436 = vadd.f32 0.0, %v2435
      %v2437 = vpop.f32.mrb[0].mxu0
      %2438 = vmatprep.mubr.bf16.mxu0 0
      %2439 = vmatmul.mubr.bf16.gmra.mrb[0].mxu0 %v2325
      %v2440 = vpop.f32.mrb[0].mxu0
      %v2441 = vadd.f32 0.0, %v2440
      %v2442 = vpop.f32.mrb[0].mxu0
      %v2443 = vpop.f32.mrb[0].mxu0
      %v2444 = vadd.f32 0.0, %v2443
      %v2445 = vpop.f32.mrb[0].mxu0
      %2446 = vmatprep.mubr.bf16.mxu0 0
      %2447 = vmatmul.mubr.bf16.gmra.mrb[0].mxu0 %v2328
      %v2448 = vpop.f32.mrb[0].mxu0
      %v2449 = vadd.f32 0.0, %v2448
      %v2450 = vpop.f32.mrb[0].mxu0
      %v2451 = vpop.f32.mrb[0].mxu0
      %v2452 = vadd.f32 0.0, %v2451
      %v2453 = vpop.f32.mrb[0].mxu0
      %2454 = vmatprep.mubr.bf16.mxu0 0
      %2455 = vmatmul.mubr.bf16.gmra.mrb[0].mxu0 %v2331
      %v2456 = vpop.f32.mrb[0].mxu0
      %v2457 = vadd.f32 0.0, %v2456
      %v2458 = vpop.f32.mrb[0].mxu0
      %v2459 = vpop.f32.mrb[0].mxu0
      %v2460 = vadd.f32 0.0, %v2459
      %v2461 = vpop.f32.mrb[0].mxu0
      %2462 = vmatprep.mubr.bf16.mxu0 0
      %2463 = vmatmul.mubr.bf16.gmra.mrb[0].mxu0 %v2334
      %v2464 = vpop.f32.mrb[0].mxu0
      %v2465 = vadd.f32 0.0, %v2464
      %v2466 = vpop.f32.mrb[0].mxu0
      %v2467 = vpop.f32.mrb[0].mxu0
      %v2468 = vadd.f32 0.0, %v2467
      %v2469 = vpop.f32.mrb[0].mxu0
      %2470 = vmatprep.mubr.bf16.mxu0 0
      %2471 = vmatmul.mubr.bf16.gmra.mrb[0].mxu0 %v2337
      %v2472 = vpop.f32.mrb[0].mxu0
      %v2473 = vadd.f32 0.0, %v2472
      %v2474 = vpop.f32.mrb[0].mxu0
      %v2475 = vpop.f32.mrb[0].mxu0
      %v2476 = vadd.f32 0.0, %v2475
      %v2477 = vpop.f32.mrb[0].mxu0
      %2478 = vmatprep.mubr.bf16.mxu0 0
      %2479 = vmatmul.mubr.bf16.gmra.mrb[0].mxu0 %v2340
      %v2480 = vpop.f32.mrb[0].mxu0
      %v2481 = vadd.f32 0.0, %v2480
      %v2482 = vpop.f32.mrb[0].mxu0
      %v2483 = vpop.f32.mrb[0].mxu0
      %v2484 = vadd.f32 0.0, %v2483
      %v2485 = vpop.f32.mrb[0].mxu0
      %2486 = vmatprep.mubr.bf16.mxu0 0
      %2487 = vmatmul.mubr.bf16.gmra.mrb[0].mxu0 %v2343
      %v2488 = vpop.f32.mrb[0].mxu0
      %v2489 = vadd.f32 0.0, %v2488
      %v2490 = vpop.f32.mrb[0].mxu0
      %v2491 = vpop.f32.mrb[0].mxu0
      %v2492 = vadd.f32 0.0, %v2491
      %v2493 = vpop.f32.mrb[0].mxu0
      %2494 = vmatprep.mubr.bf16.mxu0 0
      %2495 = vmatmul.mubr.bf16.gmra.mrb[0].mxu0 %v2346
      %v2496 = vpop.f32.mrb[0].mxu0
      %v2497 = vadd.f32 0.0, %v2496
      %v2498 = vpop.f32.mrb[0].mxu0
      %v2499 = vpop.f32.mrb[0].mxu0
      %v2500 = vadd.f32 0.0, %v2499
      %v2501 = vpop.f32.mrb[0].mxu0
      %2502 = vmatprep.mubr.bf16.mxu0 0
      %2503 = vmatmul.mubr.bf16.gmra.mrb[0].mxu0 %v2349
      %v2504 = vpop.f32.mrb[0].mxu0
      %v2505 = vadd.f32 0.0, %v2504
      %v2506 = vpop.f32.mrb[0].mxu0
      %v2507 = vpop.f32.mrb[0].mxu0
      %v2508 = vadd.f32 0.0, %v2507
      %v2509 = vpop.f32.mrb[0].mxu0
      %2510 = vmatprep.mubr.bf16.mxu0 0
      %2511 = vmatmul.mubr.bf16.gmra.mrb[0].mxu0 %v2352
      %v2512 = vpop.f32.mrb[0].mxu0
      %v2513 = vadd.f32 0.0, %v2512
      %v2514 = vpop.f32.mrb[0].mxu0
      %v2515 = vpop.f32.mrb[0].mxu0
      %v2516 = vadd.f32 0.0, %v2515
      %v2517 = vpop.f32.mrb[0].mxu0
      %2518 = vdwg.mxu0
      %v2521 = vunpack.c.l.b16 %v2279
      %v2522 = vunpack.c.l.b16 %v2280
      %v2523 = vpack.c.b16 %v2522, %v2521
      %v2525 = vsel %vm2244, %v2263, 0
      %v2528 = vsel %vm2244, %v2264, 0
      %v2531 = vsel %vm2244, %v2265, 0
      %v2534 = vsel %vm2244, %v2266, 0
      %v2537 = vsel %vm2244, %v2267, 0
      %v2540 = vsel %vm2244, %v2268, 0
      %v2543 = vsel %vm2244, %v2269, 0
      %v2546 = vsel %vm2244, %v2270, 0
      %v2549 = vsel %vm2244, %v2271, 0
      %v2552 = vsel %vm2244, %v2272, 0
      %v2555 = vsel %vm2244, %v2273, 0
      %v2558 = vsel %vm2244, %v2274, 0
      %v2561 = vsel %vm2244, %v2275, 0
      %v2564 = vsel %vm2244, %v2276, 0
      %v2567 = vsel %vm2244, %v2277, 0
      %v2570 = vsel %vm2244, %v2278, 0
      %v2573 = vsel %vm2354, %v2523, 0
      %2575 = vmatprep.subr.bf16.mxu0 0
      %2576 = vmatpush1.bf16.msra.mxu0 %v2573
      %2577 = vmatprep.subr.bf16.mxu0 0
      %2578 = vmatpush1.bf16.msra.mxu0 0
      %2579 = vmatprep.subr.bf16.mxu0 0
      %2580 = vmatpush1.bf16.msra.mxu0 0
      %2581 = vmatprep.subr.bf16.mxu0 0
      %2582 = vmatpush1.bf16.msra.mxu0 0
      %2583 = vmatprep.subr.bf16.mxu0 0
      %2584 = vmatpush1.bf16.msra.mxu0 0
      %2585 = vmatprep.subr.bf16.mxu0 0
      %2586 = vmatpush1.bf16.msra.mxu0 0
      %2587 = vmatprep.subr.bf16.mxu0 0
      %2588 = vmatpush1.bf16.msra.mxu0 0
      %2589 = vmatprep.subr.bf16.mxu0 0
      %2590 = vmatpush1.bf16.msra.mxu0 0
      %2591 = vmatprep.subr.bf16.mxu0 0
      %2592 = vmatpush1.bf16.msra.mxu0 0
      %2593 = vmatprep.subr.bf16.mxu0 0
      %2594 = vmatpush1.bf16.msra.mxu0 0
      %2595 = vmatprep.subr.bf16.mxu0 0
      %2596 = vmatpush1.bf16.msra.mxu0 0
      %2597 = vmatprep.subr.bf16.mxu0 0
      %2598 = vmatpush1.bf16.msra.mxu0 0
      %2599 = vmatprep.subr.bf16.mxu0 0
      %2600 = vmatpush1.bf16.msra.mxu0 0
      %2601 = vmatprep.subr.bf16.mxu0 0
      %2602 = vmatpush1.bf16.msra.mxu0 0
      %2603 = vmatprep.subr.bf16.mxu0 0
      %2604 = vmatpush1.bf16.msra.mxu0 0
      %2605 = vmatprep.subr.bf16.mxu0 0
      %2606 = vmatpush1.bf16.msra.mxu0 0
      %2607 = vmatprep.mubr.bf16.mxu0 0
      %2608 = vmatmul.mubr.bf16.gmra.mrb[0].mxu0 %v2525
      %v2609 = vpop.f32.mrb[0].mxu0
      %v2610 = vadd.f32 %v2393, %v2609
      %v2611 = vpop.f32.mrb[0].mxu0
      %v2612 = vpop.f32.mrb[0].mxu0
      %v2613 = vadd.f32 %v2396, %v2612
      %v2614 = vpop.f32.mrb[0].mxu0
      %2615 = vmatprep.mubr.bf16.mxu0 0
      %2616 = vmatmul.mubr.bf16.gmra.mrb[0].mxu0 %v2528
      %v2617 = vpop.f32.mrb[0].mxu0
      %v2618 = vadd.f32 %v2401, %v2617
      %v2619 = vpop.f32.mrb[0].mxu0
      %v2620 = vpop.f32.mrb[0].mxu0
      %v2621 = vadd.f32 %v2404, %v2620
      %v2622 = vpop.f32.mrb[0].mxu0
      %2623 = vmatprep.mubr.bf16.mxu0 0
      %2624 = vmatmul.mubr.bf16.gmra.mrb[0].mxu0 %v2531
      %v2625 = vpop.f32.mrb[0].mxu0
      %v2626 = vadd.f32 %v2409, %v2625
      %v2627 = vpop.f32.mrb[0].mxu0
      %v2628 = vpop.f32.mrb[0].mxu0
      %v2629 = vadd.f32 %v2412, %v2628
      %v2630 = vpop.f32.mrb[0].mxu0
      %2631 = vmatprep.mubr.bf16.mxu0 0
      %2632 = vmatmul.mubr.bf16.gmra.mrb[0].mxu0 %v2534
      %v2633 = vpop.f32.mrb[0].mxu0
      %v2634 = vadd.f32 %v2417, %v2633
      %v2635 = vpop.f32.mrb[0].mxu0
      %v2636 = vpop.f32.mrb[0].mxu0
      %v2637 = vadd.f32 %v2420, %v2636
      %v2638 = vpop.f32.mrb[0].mxu0
      %2639 = vmatprep.mubr.bf16.mxu0 0
      %2640 = vmatmul.mubr.bf16.gmra.mrb[0].mxu0 %v2537
      %v2641 = vpop.f32.mrb[0].mxu0
      %v2642 = vadd.f32 %v2425, %v2641
      %v2643 = vpop.f32.mrb[0].mxu0
      %v2644 = vpop.f32.mrb[0].mxu0
      %v2645 = vadd.f32 %v2428, %v2644
      %v2646 = vpop.f32.mrb[0].mxu0
      %2647 = vmatprep.mubr.bf16.mxu0 0
      %2648 = vmatmul.mubr.bf16.gmra.mrb[0].mxu0 %v2540
      %v2649 = vpop.f32.mrb[0].mxu0
      %v2650 = vadd.f32 %v2433, %v2649
      %v2651 = vpop.f32.mrb[0].mxu0
      %v2652 = vpop.f32.mrb[0].mxu0
      %v2653 = vadd.f32 %v2436, %v2652
      %v2654 = vpop.f32.mrb[0].mxu0
      %2655 = vmatprep.mubr.bf16.mxu0 0
      %2656 = vmatmul.mubr.bf16.gmra.mrb[0].mxu0 %v2543
      %v2657 = vpop.f32.mrb[0].mxu0
      %v2658 = vadd.f32 %v2441, %v2657
      %v2659 = vpop.f32.mrb[0].mxu0
      %v2660 = vpop.f32.mrb[0].mxu0
      %v2661 = vadd.f32 %v2444, %v2660
      %v2662 = vpop.f32.mrb[0].mxu0
      %2663 = vmatprep.mubr.bf16.mxu0 0
      %2664 = vmatmul.mubr.bf16.gmra.mrb[0].mxu0 %v2546
      %v2665 = vpop.f32.mrb[0].mxu0
      %v2666 = vadd.f32 %v2449, %v2665
      %v2667 = vpop.f32.mrb[0].mxu0
      %v2668 = vpop.f32.mrb[0].mxu0
      %v2669 = vadd.f32 %v2452, %v2668
      %v2670 = vpop.f32.mrb[0].mxu0
      %2671 = vmatprep.mubr.bf16.mxu0 0
      %2672 = vmatmul.mubr.bf16.gmra.mrb[0].mxu0 %v2549
      %v2673 = vpop.f32.mrb[0].mxu0
      %v2674 = vadd.f32 %v2457, %v2673
      %v2675 = vpop.f32.mrb[0].mxu0
      %v2676 = vpop.f32.mrb[0].mxu0
      %v2677 = vadd.f32 %v2460, %v2676
      %v2678 = vpop.f32.mrb[0].mxu0
      %2679 = vmatprep.mubr.bf16.mxu0 0
      %2680 = vmatmul.mubr.bf16.gmra.mrb[0].mxu0 %v2552
      %v2681 = vpop.f32.mrb[0].mxu0
      %v2682 = vadd.f32 %v2465, %v2681
      %v2683 = vpop.f32.mrb[0].mxu0
      %v2684 = vpop.f32.mrb[0].mxu0
      %v2685 = vadd.f32 %v2468, %v2684
      %v2686 = vpop.f32.mrb[0].mxu0
      %2687 = vmatprep.mubr.bf16.mxu0 0
      %2688 = vmatmul.mubr.bf16.gmra.mrb[0].mxu0 %v2555
      %v2689 = vpop.f32.mrb[0].mxu0
      %v2690 = vadd.f32 %v2473, %v2689
      %v2691 = vpop.f32.mrb[0].mxu0
      %v2692 = vpop.f32.mrb[0].mxu0
      %v2693 = vadd.f32 %v2476, %v2692
      %v2694 = vpop.f32.mrb[0].mxu0
      %2695 = vmatprep.mubr.bf16.mxu0 0
      %2696 = vmatmul.mubr.bf16.gmra.mrb[0].mxu0 %v2558
      %v2697 = vpop.f32.mrb[0].mxu0
      %v2698 = vadd.f32 %v2481, %v2697
      %v2699 = vpop.f32.mrb[0].mxu0
      %v2700 = vpop.f32.mrb[0].mxu0
      %v2701 = vadd.f32 %v2484, %v2700
      %v2702 = vpop.f32.mrb[0].mxu0
      %2703 = vmatprep.mubr.bf16.mxu0 0
      %2704 = vmatmul.mubr.bf16.gmra.mrb[0].mxu0 %v2561
      %v2705 = vpop.f32.mrb[0].mxu0
      %v2706 = vadd.f32 %v2489, %v2705
      %v2707 = vpop.f32.mrb[0].mxu0
      %v2708 = vpop.f32.mrb[0].mxu0
      %v2709 = vadd.f32 %v2492, %v2708
      %v2710 = vpop.f32.mrb[0].mxu0
      %2711 = vmatprep.mubr.bf16.mxu0 0
      %2712 = vmatmul.mubr.bf16.gmra.mrb[0].mxu0 %v2564
      %v2713 = vpop.f32.mrb[0].mxu0
      %v2714 = vadd.f32 %v2497, %v2713
      %v2715 = vpop.f32.mrb[0].mxu0
      %v2716 = vpop.f32.mrb[0].mxu0
      %v2717 = vadd.f32 %v2500, %v2716
      %v2718 = vpop.f32.mrb[0].mxu0
      %2719 = vmatprep.mubr.bf16.mxu0 0
      %2720 = vmatmul.mubr.bf16.gmra.mrb[0].mxu0 %v2567
      %v2721 = vpop.f32.mrb[0].mxu0
      %v2722 = vadd.f32 %v2505, %v2721
      %v2723 = vpop.f32.mrb[0].mxu0
      %v2724 = vpop.f32.mrb[0].mxu0
      %v2725 = vadd.f32 %v2508, %v2724
      %v2726 = vpop.f32.mrb[0].mxu0
      %2727 = vmatprep.mubr.bf16.mxu0 0
      %2728 = vmatmul.mubr.bf16.gmra.mrb[0].mxu0 %v2570
      %v2729 = vpop.f32.mrb[0].mxu0
      %v2730 = vadd.f32 %v2513, %v2729
      %v2731 = vpop.f32.mrb[0].mxu0
      %v2732 = vpop.f32.mrb[0].mxu0
      %v2733 = vadd.f32 %v2516, %v2732
      %v2734 = vpop.f32.mrb[0].mxu0
      %2735 = vdwg.mxu0
      %s2736 = scalar_lea.vmem [#allocation3], 16
      %v2737 = vld [vmem:[%s2736] sm:$0xff]
      %v2738 = vld [vmem:[%s2736 + $0x8] sm:$0xff]
      %v2739 = vld [vmem:[%s2736 + $0x10] sm:$0xff]
      %v2740 = vld [vmem:[%s2736 + $0x18] sm:$0xff]
      %v2741 = vld [vmem:[%s2736 + $0x20] sm:$0xff]
      %v2742 = vld [vmem:[%s2736 + $0x28] sm:$0xff]
      %v2743 = vld [vmem:[%s2736 + $0x30] sm:$0xff]
      %v2744 = vld [vmem:[%s2736 + $0x38] sm:$0xff]
      %v2745 = vld [vmem:[%s2736 + $0x40] sm:$0xff]
      %v2746 = vld [vmem:[%s2736 + $0x48] sm:$0xff]
      %v2747 = vld [vmem:[%s2736 + $0x50] sm:$0xff]
      %v2748 = vld [vmem:[%s2736 + $0x58] sm:$0xff]
      %v2749 = vld [vmem:[%s2736 + $0x60] sm:$0xff]
      %v2750 = vld [vmem:[%s2736 + $0x68] sm:$0xff]
      %v2751 = vld [vmem:[%s2736 + $0x70] sm:$0xff]
      %v2752 = vld [vmem:[%s2736 + $0x78] sm:$0xff]
      %s2753 = scalar_lea.vmem %s3, 16
      %v2754 = vld [vmem:[%s2753] sm:$0xf]
      %v2755 = vld [vmem:[%s2753 + $0x4] sm:$0x3]
      %v2758 = vunpack.c.l.b16 %v2754
      %v2759 = vunpack.c.l.b16 %v2755
      %v2760 = vpack.c.b16 %v2759, %v2758
      %v2762 = vsel %vm2244, %v2737, 0
      %v2765 = vsel %vm2244, %v2738, 0
      %v2768 = vsel %vm2244, %v2739, 0
      %v2771 = vsel %vm2244, %v2740, 0
      %v2774 = vsel %vm2244, %v2741, 0
      %v2777 = vsel %vm2244, %v2742, 0
      %v2780 = vsel %vm2244, %v2743, 0
      %v2783 = vsel %vm2244, %v2744, 0
      %v2786 = vsel %vm2244, %v2745, 0
      %v2789 = vsel %vm2244, %v2746, 0
      %v2792 = vsel %vm2244, %v2747, 0
      %v2795 = vsel %vm2244, %v2748, 0
      %v2798 = vsel %vm2244, %v2749, 0
      %v2801 = vsel %vm2244, %v2750, 0
      %v2804 = vsel %vm2244, %v2751, 0
      %v2807 = vsel %vm2244, %v2752, 0
      %v2810 = vsel %vm2354, %v2760, 0
      %2812 = vmatprep.subr.bf16.mxu0 0
      %2813 = vmatpush1.bf16.msra.mxu0 %v2810
      %2814 = vmatprep.subr.bf16.mxu0 0
      %2815 = vmatpush1.bf16.msra.mxu0 0
      %2816 = vmatprep.subr.bf16.mxu0 0
      %2817 = vmatpush1.bf16.msra.mxu0 0
      %2818 = vmatprep.subr.bf16.mxu0 0
      %2819 = vmatpush1.bf16.msra.mxu0 0
      %2820 = vmatprep.subr.bf16.mxu0 0
      %2821 = vmatpush1.bf16.msra.mxu0 0
      %2822 = vmatprep.subr.bf16.mxu0 0
      %2823 = vmatpush1.bf16.msra.mxu0 0
      %2824 = vmatprep.subr.bf16.mxu0 0
      %2825 = vmatpush1.bf16.msra.mxu0 0
      %2826 = vmatprep.subr.bf16.mxu0 0
      %2827 = vmatpush1.bf16.msra.mxu0 0
      %2828 = vmatprep.subr.bf16.mxu0 0
      %2829 = vmatpush1.bf16.msra.mxu0 0
      %2830 = vmatprep.subr.bf16.mxu0 0
      %2831 = vmatpush1.bf16.msra.mxu0 0
      %2832 = vmatprep.subr.bf16.mxu0 0
      %2833 = vmatpush1.bf16.msra.mxu0 0
      %2834 = vmatprep.subr.bf16.mxu0 0
      %2835 = vmatpush1.bf16.msra.mxu0 0
      %2836 = vmatprep.subr.bf16.mxu0 0
      %2837 = vmatpush1.bf16.msra.mxu0 0
      %2838 = vmatprep.subr.bf16.mxu0 0
      %2839 = vmatpush1.bf16.msra.mxu0 0
      %2840 = vmatprep.subr.bf16.mxu0 0
      %2841 = vmatpush1.bf16.msra.mxu0 0
      %2842 = vmatprep.subr.bf16.mxu0 0
      %2843 = vmatpush1.bf16.msra.mxu0 0
      %2844 = vmatprep.mubr.bf16.mxu0 0
      %2845 = vmatmul.mubr.bf16.gmra.mrb[0].mxu0 %v2762
      %v2846 = vpop.f32.mrb[0].mxu0
      %v2847 = vadd.f32 0.0, %v2846
      %v2848 = vpop.f32.mrb[0].mxu0
      %v2849 = vpop.f32.mrb[0].mxu0
      %v2850 = vadd.f32 0.0, %v2849
      %v2851 = vpop.f32.mrb[0].mxu0
      %2852 = vmatprep.mubr.bf16.mxu0 0
      %2853 = vmatmul.mubr.bf16.gmra.mrb[0].mxu0 %v2765
      %v2854 = vpop.f32.mrb[0].mxu0
      %v2855 = vadd.f32 0.0, %v2854
      %v2856 = vpop.f32.mrb[0].mxu0
      %v2857 = vpop.f32.mrb[0].mxu0
      %v2858 = vadd.f32 0.0, %v2857
      %v2859 = vpop.f32.mrb[0].mxu0
      %2860 = vmatprep.mubr.bf16.mxu0 0
      %2861 = vmatmul.mubr.bf16.gmra.mrb[0].mxu0 %v2768
      %v2862 = vpop.f32.mrb[0].mxu0
      %v2863 = vadd.f32 0.0, %v2862
      %v2864 = vpop.f32.mrb[0].mxu0
      %v2865 = vpop.f32.mrb[0].mxu0
      %v2866 = vadd.f32 0.0, %v2865
      %v2867 = vpop.f32.mrb[0].mxu0
      %2868 = vmatprep.mubr.bf16.mxu0 0
      %2869 = vmatmul.mubr.bf16.gmra.mrb[0].mxu0 %v2771
      %v2870 = vpop.f32.mrb[0].mxu0
      %v2871 = vadd.f32 0.0, %v2870
      %v2872 = vpop.f32.mrb[0].mxu0
      %v2873 = vpop.f32.mrb[0].mxu0
      %v2874 = vadd.f32 0.0, %v2873
      %v2875 = vpop.f32.mrb[0].mxu0
      %2876 = vmatprep.mubr.bf16.mxu0 0
      %2877 = vmatmul.mubr.bf16.gmra.mrb[0].mxu0 %v2774
      %v2878 = vpop.f32.mrb[0].mxu0
      %v2879 = vadd.f32 0.0, %v2878
      %v2880 = vpop.f32.mrb[0].mxu0
      %v2881 = vpop.f32.mrb[0].mxu0
      %v2882 = vadd.f32 0.0, %v2881
      %v2883 = vpop.f32.mrb[0].mxu0
      %2884 = vmatprep.mubr.bf16.mxu0 0
      %2885 = vmatmul.mubr.bf16.gmra.mrb[0].mxu0 %v2777
      %v2886 = vpop.f32.mrb[0].mxu0
      %v2887 = vadd.f32 0.0, %v2886
      %v2888 = vpop.f32.mrb[0].mxu0
      %v2889 = vpop.f32.mrb[0].mxu0
      %v2890 = vadd.f32 0.0, %v2889
      %v2891 = vpop.f32.mrb[0].mxu0
      %2892 = vmatprep.mubr.bf16.mxu0 0
      %2893 = vmatmul.mubr.bf16.gmra.mrb[0].mxu0 %v2780
      %v2894 = vpop.f32.mrb[0].mxu0
      %v2895 = vadd.f32 0.0, %v2894
      %v2896 = vpop.f32.mrb[0].mxu0
      %v2897 = vpop.f32.mrb[0].mxu0
      %v2898 = vadd.f32 0.0, %v2897
      %v2899 = vpop.f32.mrb[0].mxu0
      %2900 = vmatprep.mubr.bf16.mxu0 0
      %2901 = vmatmul.mubr.bf16.gmra.mrb[0].mxu0 %v2783
      %v2902 = vpop.f32.mrb[0].mxu0
      %v2903 = vadd.f32 0.0, %v2902
      %v2904 = vpop.f32.mrb[0].mxu0
      %v2905 = vpop.f32.mrb[0].mxu0
      %v2906 = vadd.f32 0.0, %v2905
      %v2907 = vpop.f32.mrb[0].mxu0
      %2908 = vmatprep.mubr.bf16.mxu0 0
      %2909 = vmatmul.mubr.bf16.gmra.mrb[0].mxu0 %v2786
      %v2910 = vpop.f32.mrb[0].mxu0
      %v2911 = vadd.f32 0.0, %v2910
      %v2912 = vpop.f32.mrb[0].mxu0
      %v2913 = vpop.f32.mrb[0].mxu0
      %v2914 = vadd.f32 0.0, %v2913
      %v2915 = vpop.f32.mrb[0].mxu0
      %2916 = vmatprep.mubr.bf16.mxu0 0
      %2917 = vmatmul.mubr.bf16.gmra.mrb[0].mxu0 %v2789
      %v2918 = vpop.f32.mrb[0].mxu0
      %v2919 = vadd.f32 0.0, %v2918
      %v2920 = vpop.f32.mrb[0].mxu0
      %v2921 = vpop.f32.mrb[0].mxu0
      %v2922 = vadd.f32 0.0, %v2921
      %v2923 = vpop.f32.mrb[0].mxu0
      %2924 = vmatprep.mubr.bf16.mxu0 0
      %2925 = vmatmul.mubr.bf16.gmra.mrb[0].mxu0 %v2792
      %v2926 = vpop.f32.mrb[0].mxu0
      %v2927 = vadd.f32 0.0, %v2926
      %v2928 = vpop.f32.mrb[0].mxu0
      %v2929 = vpop.f32.mrb[0].mxu0
      %v2930 = vadd.f32 0.0, %v2929
      %v2931 = vpop.f32.mrb[0].mxu0
      %2932 = vmatprep.mubr.bf16.mxu0 0
      %2933 = vmatmul.mubr.bf16.gmra.mrb[0].mxu0 %v2795
      %v2934 = vpop.f32.mrb[0].mxu0
      %v2935 = vadd.f32 0.0, %v2934
      %v2936 = vpop.f32.mrb[0].mxu0
      %v2937 = vpop.f32.mrb[0].mxu0
      %v2938 = vadd.f32 0.0, %v2937
      %v2939 = vpop.f32.mrb[0].mxu0
      %2940 = vmatprep.mubr.bf16.mxu0 0
      %2941 = vmatmul.mubr.bf16.gmra.mrb[0].mxu0 %v2798
      %v2942 = vpop.f32.mrb[0].mxu0
      %v2943 = vadd.f32 0.0, %v2942
      %v2944 = vpop.f32.mrb[0].mxu0
      %v2945 = vpop.f32.mrb[0].mxu0
      %v2946 = vadd.f32 0.0, %v2945
      %v2947 = vpop.f32.mrb[0].mxu0
      %2948 = vmatprep.mubr.bf16.mxu0 0
      %2949 = vmatmul.mubr.bf16.gmra.mrb[0].mxu0 %v2801
      %v2950 = vpop.f32.mrb[0].mxu0
      %v2951 = vadd.f32 0.0, %v2950
      %v2952 = vpop.f32.mrb[0].mxu0
      %v2953 = vpop.f32.mrb[0].mxu0
      %v2954 = vadd.f32 0.0, %v2953
      %v2955 = vpop.f32.mrb[0].mxu0
      %2956 = vmatprep.mubr.bf16.mxu0 0
      %2957 = vmatmul.mubr.bf16.gmra.mrb[0].mxu0 %v2804
      %v2958 = vpop.f32.mrb[0].mxu0
      %v2959 = vadd.f32 0.0, %v2958
      %v2960 = vpop.f32.mrb[0].mxu0
      %v2961 = vpop.f32.mrb[0].mxu0
      %v2962 = vadd.f32 0.0, %v2961
      %v2963 = vpop.f32.mrb[0].mxu0
      %2964 = vmatprep.mubr.bf16.mxu0 0
      %2965 = vmatmul.mubr.bf16.gmra.mrb[0].mxu0 %v2807
      %v2966 = vpop.f32.mrb[0].mxu0
      %v2967 = vadd.f32 0.0, %v2966
      %v2968 = vpop.f32.mrb[0].mxu0
      %v2969 = vpop.f32.mrb[0].mxu0
      %v2970 = vadd.f32 0.0, %v2969
      %v2971 = vpop.f32.mrb[0].mxu0
      %2972 = vdwg.mxu0
      %v2973 = vadd.f32 %v2610, %v2847
      %v2974 = vadd.f32 %v2613, %v2850
      %v2975 = vadd.f32 %v2618, %v2855
      %v2976 = vadd.f32 %v2621, %v2858
      %v2977 = vadd.f32 %v2626, %v2863
      %v2978 = vadd.f32 %v2629, %v2866
      %v2979 = vadd.f32 %v2634, %v2871
      %v2980 = vadd.f32 %v2637, %v2874
      %v2981 = vadd.f32 %v2642, %v2879
      %v2982 = vadd.f32 %v2645, %v2882
      %v2983 = vadd.f32 %v2650, %v2887
      %v2984 = vadd.f32 %v2653, %v2890
      %v2985 = vadd.f32 %v2658, %v2895
      %v2986 = vadd.f32 %v2661, %v2898
      %v2987 = vadd.f32 %v2666, %v2903
      %v2988 = vadd.f32 %v2669, %v2906
      %v2989 = vadd.f32 %v2674, %v2911
      %v2990 = vadd.f32 %v2677, %v2914
      %v2991 = vadd.f32 %v2682, %v2919
      %v2992 = vadd.f32 %v2685, %v2922
      %v2993 = vadd.f32 %v2690, %v2927
      %v2994 = vadd.f32 %v2693, %v2930
      %v2995 = vadd.f32 %v2698, %v2935
      %v2996 = vadd.f32 %v2701, %v2938
      %v2997 = vadd.f32 %v2706, %v2943
      %v2998 = vadd.f32 %v2709, %v2946
      %v2999 = vadd.f32 %v2714, %v2951
      %v3000 = vadd.f32 %v2717, %v2954
      %v3001 = vadd.f32 %v2722, %v2959
      %v3002 = vadd.f32 %v2725, %v2962
      %v3003 = vadd.f32 %v2730, %v2967
      %v3004 = vadd.f32 %v2733, %v2970
      %v3005 = vld [vmem:[%s4] sm:$0x1]
      %v3007 = vlaneseq
      %v3008 = vshrl.u32 %v3007, 7
      %v3009 = vsub.s32 0, %v3008
      %v3010 = vrot.slane %v3005, %v3009
      %v3012 = vadd.f32 %v2973, %v3010
      %v3013 = vadd.f32 %v2974, %v3010
      %v3014 = vadd.f32 %v2975, %v3010
      %v3015 = vadd.f32 %v2976, %v3010
      %v3016 = vadd.f32 %v2977, %v3010
      %v3017 = vadd.f32 %v2978, %v3010
      %v3018 = vadd.f32 %v2979, %v3010
      %v3019 = vadd.f32 %v2980, %v3010
      %v3020 = vadd.f32 %v2981, %v3010
      %v3021 = vadd.f32 %v2982, %v3010
      %v3022 = vadd.f32 %v2983, %v3010
      %v3023 = vadd.f32 %v2984, %v3010
      %v3024 = vadd.f32 %v2985, %v3010
      %v3025 = vadd.f32 %v2986, %v3010
      %v3026 = vadd.f32 %v2987, %v3010
      %v3027 = vadd.f32 %v2988, %v3010
      %v3028 = vadd.f32 %v2989, %v3010
      %v3029 = vadd.f32 %v2990, %v3010
      %v3030 = vadd.f32 %v2991, %v3010
      %v3031 = vadd.f32 %v2992, %v3010
      %v3032 = vadd.f32 %v2993, %v3010
      %v3033 = vadd.f32 %v2994, %v3010
      %v3034 = vadd.f32 %v2995, %v3010
      %v3035 = vadd.f32 %v2996, %v3010
      %v3036 = vadd.f32 %v2997, %v3010
      %v3037 = vadd.f32 %v2998, %v3010
      %v3038 = vadd.f32 %v2999, %v3010
      %v3039 = vadd.f32 %v3000, %v3010
      %v3040 = vadd.f32 %v3001, %v3010
      %v3041 = vadd.f32 %v3002, %v3010
      %v3042 = vadd.f32 %v3003, %v3010
      %v3043 = vadd.f32 %v3004, %v3010
      %v3044 = vmax.f32 %v3012, 0.0
      %v3045 = vmax.f32 %v3013, 0.0
      %v3046 = vmax.f32 %v3014, 0.0
      %v3047 = vmax.f32 %v3015, 0.0
      %v3048 = vmax.f32 %v3016, 0.0
      %v3049 = vmax.f32 %v3017, 0.0
      %v3050 = vmax.f32 %v3018, 0.0
      %v3051 = vmax.f32 %v3019, 0.0
      %v3052 = vmax.f32 %v3020, 0.0
      %v3053 = vmax.f32 %v3021, 0.0
      %v3054 = vmax.f32 %v3022, 0.0
      %v3055 = vmax.f32 %v3023, 0.0
      %v3056 = vmax.f32 %v3024, 0.0
      %v3057 = vmax.f32 %v3025, 0.0
      %v3058 = vmax.f32 %v3026, 0.0
      %v3059 = vmax.f32 %v3027, 0.0
      %v3060 = vmax.f32 %v3028, 0.0
      %v3061 = vmax.f32 %v3029, 0.0
      %v3062 = vmax.f32 %v3030, 0.0
      %v3063 = vmax.f32 %v3031, 0.0
      %v3064 = vmax.f32 %v3032, 0.0
      %v3065 = vmax.f32 %v3033, 0.0
      %v3066 = vmax.f32 %v3034, 0.0
      %v3067 = vmax.f32 %v3035, 0.0
      %v3068 = vmax.f32 %v3036, 0.0
      %v3069 = vmax.f32 %v3037, 0.0
      %v3070 = vmax.f32 %v3038, 0.0
      %v3071 = vmax.f32 %v3039, 0.0
      %v3072 = vmax.f32 %v3040, 0.0
      %v3073 = vmax.f32 %v3041, 0.0
      %v3074 = vmax.f32 %v3042, 0.0
      %v3075 = vmax.f32 %v3043, 0.0
      %v3076 = vpack.c.bf16 %v3045, %v3044
      %v3077 = vpack.c.bf16 %v3047, %v3046
      %v3078 = vpack.c.bf16 %v3049, %v3048
      %v3079 = vpack.c.bf16 %v3051, %v3050
      %v3080 = vpack.c.bf16 %v3053, %v3052
      %v3081 = vpack.c.bf16 %v3055, %v3054
      %v3082 = vpack.c.bf16 %v3057, %v3056
      %v3083 = vpack.c.bf16 %v3059, %v3058
      %v3084 = vpack.c.bf16 %v3061, %v3060
      %v3085 = vpack.c.bf16 %v3063, %v3062
      %v3086 = vpack.c.bf16 %v3065, %v3064
      %v3087 = vpack.c.bf16 %v3067, %v3066
      %v3088 = vpack.c.bf16 %v3069, %v3068
      %v3089 = vpack.c.bf16 %v3071, %v3070
      %v3090 = vpack.c.bf16 %v3073, %v3072
      %v3091 = vpack.c.bf16 %v3075, %v3074
      %v3092 = vld [vmem:[%s5] sm:$0x3]
      %v3093 = vld [vmem:[%s423] sm:$0xf]
      %v3094 = vld [vmem:[%s423 + $0x4] sm:$0xf]
      %v3095 = vld [vmem:[%s423 + $0x8] sm:$0xf]
      %v3096 = vld [vmem:[%s423 + $0xc] sm:$0xf]
      %v3097 = vld [vmem:[%s423 + $0x10] sm:$0xf]
      %v3098 = vld [vmem:[%s423 + $0x14] sm:$0xf]
      %v3099 = vld [vmem:[%s423 + $0x18] sm:$0xf]
      %v3100 = vld [vmem:[%s423 + $0x1c] sm:$0xf]
      %v3101 = vld [vmem:[%s423 + $0x20] sm:$0xf]
      %v3102 = vld [vmem:[%s423 + $0x24] sm:$0xf]
      %v3103 = vld [vmem:[%s423 + $0x28] sm:$0xf]
      %v3104 = vld [vmem:[%s423 + $0x2c] sm:$0xf]
      %v3105 = vld [vmem:[%s423 + $0x30] sm:$0xf]
      %v3106 = vld [vmem:[%s423 + $0x34] sm:$0xf]
      %v3107 = vld [vmem:[%s423 + $0x38] sm:$0xf]
      %v3108 = vld [vmem:[%s423 + $0x3c] sm:$0xf]
      %v3109 = vld [vmem:[%s423 + $0x40] sm:$0xf]
      %v3110 = vld [vmem:[%s423 + $0x44] sm:$0xf]
      %v3111 = vld [vmem:[%s423 + $0x48] sm:$0xf]
      %v3112 = vld [vmem:[%s423 + $0x4c] sm:$0xf]
      %v3113 = vld [vmem:[%s423 + $0x50] sm:$0xf]
      %v3114 = vld [vmem:[%s423 + $0x54] sm:$0xf]
      %v3115 = vld [vmem:[%s423 + $0x58] sm:$0xf]
      %v3116 = vld [vmem:[%s423 + $0x5c] sm:$0xf]
      %v3117 = vld [vmem:[%s423 + $0x60] sm:$0xf]
      %v3118 = vld [vmem:[%s423 + $0x64] sm:$0xf]
      %v3119 = vld [vmem:[%s423 + $0x68] sm:$0xf]
      %v3120 = vld [vmem:[%s423 + $0x6c] sm:$0xf]
      %v3121 = vld [vmem:[%s423 + $0x70] sm:$0xf]
      %v3122 = vld [vmem:[%s423 + $0x74] sm:$0xf]
      %v3123 = vld [vmem:[%s423 + $0x78] sm:$0xf]
      %v3124 = vld [vmem:[%s423 + $0x7c] sm:$0xf]
      %v3125 = vunpack.c.l.bf16 %v3093
      %v3126 = vunpack.c.l.bf16 %v3094
      %v3127 = vunpack.c.l.bf16 %v3095
      %v3128 = vunpack.c.l.bf16 %v3096
      %v3129 = vunpack.c.l.bf16 %v3097
      %v3130 = vunpack.c.l.bf16 %v3098
      %v3131 = vunpack.c.l.bf16 %v3099
      %v3132 = vunpack.c.l.bf16 %v3100
      %v3133 = vunpack.c.l.bf16 %v3101
      %v3134 = vunpack.c.l.bf16 %v3102
      %v3135 = vunpack.c.l.bf16 %v3103
      %v3136 = vunpack.c.l.bf16 %v3104
      %v3137 = vunpack.c.l.bf16 %v3105
      %v3138 = vunpack.c.l.bf16 %v3106
      %v3139 = vunpack.c.l.bf16 %v3107
      %v3140 = vunpack.c.l.bf16 %v3108
      %v3141 = vunpack.c.l.bf16 %v3109
      %v3142 = vunpack.c.l.bf16 %v3110
      %v3143 = vunpack.c.l.bf16 %v3111
      %v3144 = vunpack.c.l.bf16 %v3112
      %v3145 = vunpack.c.l.bf16 %v3113
      %v3146 = vunpack.c.l.bf16 %v3114
      %v3147 = vunpack.c.l.bf16 %v3115
      %v3148 = vunpack.c.l.bf16 %v3116
      %v3149 = vunpack.c.l.bf16 %v3117
      %v3150 = vunpack.c.l.bf16 %v3118
      %v3151 = vunpack.c.l.bf16 %v3119
      %v3152 = vunpack.c.l.bf16 %v3120
      %v3153 = vunpack.c.l.bf16 %v3121
      %v3154 = vunpack.c.l.bf16 %v3122
      %v3155 = vunpack.c.l.bf16 %v3123
      %v3156 = vunpack.c.l.bf16 %v3124
      %v3157 = vld [vmem:[%s6] sm:$0x1]
      %v3159 = vlaneseq
      %v3160 = vshrl.u32 %v3159, 7
      %v3161 = vsub.s32 0, %v3160
      %v3162 = vrot.slane %v3157, %v3161
      %v3165 = vsel %vm2152, %v3076, 0
      %v3168 = vsel %vm2152, %v3077, 0
      %v3171 = vsel %vm2152, %v3078, 0
      %v3174 = vsel %vm2152, %v3079, 0
      %v3177 = vsel %vm2152, %v3080, 0
      %v3180 = vsel %vm2152, %v3081, 0
      %v3183 = vsel %vm2152, %v3082, 0
      %v3186 = vsel %vm2152, %v3083, 0
      %v3189 = vsel %vm2152, %v3084, 0
      %v3192 = vsel %vm2152, %v3085, 0
      %v3195 = vsel %vm2152, %v3086, 0
      %v3198 = vsel %vm2152, %v3087, 0
      %v3201 = vsel %vm2152, %v3088, 0
      %v3204 = vsel %vm2152, %v3089, 0
      %v3207 = vsel %vm2152, %v3090, 0
      %v3210 = vsel %vm2152, %v3091, 0
      %vm3212 = vcmask 1041408
      %v3214 = vsel %vm3212, %v3092, 0
      %3216 = vmatprep.subr.bf16.mxu0 0
      %3217 = vmatpush1.bf16.msra.mxu0 %v3214
      %3218 = vmatprep.subr.bf16.mxu0 0
      %3219 = vmatpush1.bf16.msra.mxu0 0
      %3220 = vmatprep.subr.bf16.mxu0 0
      %3221 = vmatpush1.bf16.msra.mxu0 0
      %3222 = vmatprep.subr.bf16.mxu0 0
      %3223 = vmatpush1.bf16.msra.mxu0 0
      %3224 = vmatprep.subr.bf16.mxu0 0
      %3225 = vmatpush1.bf16.msra.mxu0 0
      %3226 = vmatprep.subr.bf16.mxu0 0
      %3227 = vmatpush1.bf16.msra.mxu0 0
      %3228 = vmatprep.subr.bf16.mxu0 0
      %3229 = vmatpush1.bf16.msra.mxu0 0
      %3230 = vmatprep.subr.bf16.mxu0 0
      %3231 = vmatpush1.bf16.msra.mxu0 0
      %3232 = vmatprep.subr.bf16.mxu0 0
      %3233 = vmatpush1.bf16.msra.mxu0 0
      %3234 = vmatprep.subr.bf16.mxu0 0
      %3235 = vmatpush1.bf16.msra.mxu0 0
      %3236 = vmatprep.subr.bf16.mxu0 0
      %3237 = vmatpush1.bf16.msra.mxu0 0
      %3238 = vmatprep.subr.bf16.mxu0 0
      %3239 = vmatpush1.bf16.msra.mxu0 0
      %3240 = vmatprep.subr.bf16.mxu0 0
      %3241 = vmatpush1.bf16.msra.mxu0 0
      %3242 = vmatprep.subr.bf16.mxu0 0
      %3243 = vmatpush1.bf16.msra.mxu0 0
      %3244 = vmatprep.subr.bf16.mxu0 0
      %3245 = vmatpush1.bf16.msra.mxu0 0
      %3246 = vmatprep.subr.bf16.mxu0 0
      %3247 = vmatpush1.bf16.msra.mxu0 0
      %3248 = vmatprep.mubr.bf16.mxu0 0
      %3249 = vmatmul.mubr.bf16.gmra.mrb[0].mxu0 %v3165
      %v3250 = vpop.f32.mrb[0].mxu0
      %v3251 = vadd.f32 %v3162, %v3250
      %v3252 = vpop.f32.mrb[0].mxu0
      %v3253 = vpop.f32.mrb[0].mxu0
      %v3254 = vadd.f32 %v3162, %v3253
      %v3255 = vpop.f32.mrb[0].mxu0
      %3256 = vmatprep.mubr.bf16.mxu0 0
      %3257 = vmatmul.mubr.bf16.gmra.mrb[0].mxu0 %v3168
      %v3258 = vpop.f32.mrb[0].mxu0
      %v3259 = vadd.f32 %v3162, %v3258
      %v3260 = vpop.f32.mrb[0].mxu0
      %v3261 = vpop.f32.mrb[0].mxu0
      %v3262 = vadd.f32 %v3162, %v3261
      %v3263 = vpop.f32.mrb[0].mxu0
      %3264 = vmatprep.mubr.bf16.mxu0 0
      %3265 = vmatmul.mubr.bf16.gmra.mrb[0].mxu0 %v3171
      %v3266 = vpop.f32.mrb[0].mxu0
      %v3267 = vadd.f32 %v3162, %v3266
      %v3268 = vpop.f32.mrb[0].mxu0
      %v3269 = vpop.f32.mrb[0].mxu0
      %v3270 = vadd.f32 %v3162, %v3269
      %v3271 = vpop.f32.mrb[0].mxu0
      %3272 = vmatprep.mubr.bf16.mxu0 0
      %3273 = vmatmul.mubr.bf16.gmra.mrb[0].mxu0 %v3174
      %v3274 = vpop.f32.mrb[0].mxu0
      %v3275 = vadd.f32 %v3162, %v3274
      %v3276 = vpop.f32.mrb[0].mxu0
      %v3277 = vpop.f32.mrb[0].mxu0
      %v3278 = vadd.f32 %v3162, %v3277
      %v3279 = vpop.f32.mrb[0].mxu0
      %3280 = vmatprep.mubr.bf16.mxu0 0
      %3281 = vmatmul.mubr.bf16.gmra.mrb[0].mxu0 %v3177
      %v3282 = vpop.f32.mrb[0].mxu0
      %v3283 = vadd.f32 %v3162, %v3282
      %v3284 = vpop.f32.mrb[0].mxu0
      %v3285 = vpop.f32.mrb[0].mxu0
      %v3286 = vadd.f32 %v3162, %v3285
      %v3287 = vpop.f32.mrb[0].mxu0
      %3288 = vmatprep.mubr.bf16.mxu0 0
      %3289 = vmatmul.mubr.bf16.gmra.mrb[0].mxu0 %v3180
      %v3290 = vpop.f32.mrb[0].mxu0
      %v3291 = vadd.f32 %v3162, %v3290
      %v3292 = vpop.f32.mrb[0].mxu0
      %v3293 = vpop.f32.mrb[0].mxu0
      %v3294 = vadd.f32 %v3162, %v3293
      %v3295 = vpop.f32.mrb[0].mxu0
      %3296 = vmatprep.mubr.bf16.mxu0 0
      %3297 = vmatmul.mubr.bf16.gmra.mrb[0].mxu0 %v3183
      %v3298 = vpop.f32.mrb[0].mxu0
      %v3299 = vadd.f32 %v3162, %v3298
      %v3300 = vpop.f32.mrb[0].mxu0
      %v3301 = vpop.f32.mrb[0].mxu0
      %v3302 = vadd.f32 %v3162, %v3301
      %v3303 = vpop.f32.mrb[0].mxu0
      %3304 = vmatprep.mubr.bf16.mxu0 0
      %3305 = vmatmul.mubr.bf16.gmra.mrb[0].mxu0 %v3186
      %v3306 = vpop.f32.mrb[0].mxu0
      %v3307 = vadd.f32 %v3162, %v3306
      %v3308 = vpop.f32.mrb[0].mxu0
      %v3309 = vpop.f32.mrb[0].mxu0
      %v3310 = vadd.f32 %v3162, %v3309
      %v3311 = vpop.f32.mrb[0].mxu0
      %3312 = vmatprep.mubr.bf16.mxu0 0
      %3313 = vmatmul.mubr.bf16.gmra.mrb[0].mxu0 %v3189
      %v3314 = vpop.f32.mrb[0].mxu0
      %v3315 = vadd.f32 %v3162, %v3314
      %v3316 = vpop.f32.mrb[0].mxu0
      %v3317 = vpop.f32.mrb[0].mxu0
      %v3318 = vadd.f32 %v3162, %v3317
      %v3319 = vpop.f32.mrb[0].mxu0
      %3320 = vmatprep.mubr.bf16.mxu0 0
      %3321 = vmatmul.mubr.bf16.gmra.mrb[0].mxu0 %v3192
      %v3322 = vpop.f32.mrb[0].mxu0
      %v3323 = vadd.f32 %v3162, %v3322
      %v3324 = vpop.f32.mrb[0].mxu0
      %v3325 = vpop.f32.mrb[0].mxu0
      %v3326 = vadd.f32 %v3162, %v3325
      %v3327 = vpop.f32.mrb[0].mxu0
      %3328 = vmatprep.mubr.bf16.mxu0 0
      %3329 = vmatmul.mubr.bf16.gmra.mrb[0].mxu0 %v3195
      %v3330 = vpop.f32.mrb[0].mxu0
      %v3331 = vadd.f32 %v3162, %v3330
      %v3332 = vpop.f32.mrb[0].mxu0
      %v3333 = vpop.f32.mrb[0].mxu0
      %v3334 = vadd.f32 %v3162, %v3333
      %v3335 = vpop.f32.mrb[0].mxu0
      %3336 = vmatprep.mubr.bf16.mxu0 0
      %3337 = vmatmul.mubr.bf16.gmra.mrb[0].mxu0 %v3198
      %v3338 = vpop.f32.mrb[0].mxu0
      %v3339 = vadd.f32 %v3162, %v3338
      %v3340 = vpop.f32.mrb[0].mxu0
      %v3341 = vpop.f32.mrb[0].mxu0
      %v3342 = vadd.f32 %v3162, %v3341
      %v3343 = vpop.f32.mrb[0].mxu0
      %3344 = vmatprep.mubr.bf16.mxu0 0
      %3345 = vmatmul.mubr.bf16.gmra.mrb[0].mxu0 %v3201
      %v3346 = vpop.f32.mrb[0].mxu0
      %v3347 = vadd.f32 %v3162, %v3346
      %v3348 = vpop.f32.mrb[0].mxu0
      %v3349 = vpop.f32.mrb[0].mxu0
      %v3350 = vadd.f32 %v3162, %v3349
      %v3351 = vpop.f32.mrb[0].mxu0
      %3352 = vmatprep.mubr.bf16.mxu0 0
      %3353 = vmatmul.mubr.bf16.gmra.mrb[0].mxu0 %v3204
      %v3354 = vpop.f32.mrb[0].mxu0
      %v3355 = vadd.f32 %v3162, %v3354
      %v3356 = vpop.f32.mrb[0].mxu0
      %v3357 = vpop.f32.mrb[0].mxu0
      %v3358 = vadd.f32 %v3162, %v3357
      %v3359 = vpop.f32.mrb[0].mxu0
      %3360 = vmatprep.mubr.bf16.mxu0 0
      %3361 = vmatmul.mubr.bf16.gmra.mrb[0].mxu0 %v3207
      %v3362 = vpop.f32.mrb[0].mxu0
      %v3363 = vadd.f32 %v3162, %v3362
      %v3364 = vpop.f32.mrb[0].mxu0
      %v3365 = vpop.f32.mrb[0].mxu0
      %v3366 = vadd.f32 %v3162, %v3365
      %v3367 = vpop.f32.mrb[0].mxu0
      %3368 = vmatprep.mubr.bf16.mxu0 0
      %3369 = vmatmul.mubr.bf16.gmra.mrb[0].mxu0 %v3210
      %v3370 = vpop.f32.mrb[0].mxu0
      %v3371 = vadd.f32 %v3162, %v3370
      %v3372 = vpop.f32.mrb[0].mxu0
      %v3373 = vpop.f32.mrb[0].mxu0
      %v3374 = vadd.f32 %v3162, %v3373
      %v3375 = vpop.f32.mrb[0].mxu0
      %3376 = vdwg.mxu0
      %v3377 = vadd.f32 %v3251, %v3125
      %v3378 = vadd.f32 %v3254, %v3126
      %v3379 = vadd.f32 %v3259, %v3127
      %v3380 = vadd.f32 %v3262, %v3128
      %v3381 = vadd.f32 %v3267, %v3129
      %v3382 = vadd.f32 %v3270, %v3130
      %v3383 = vadd.f32 %v3275, %v3131
      %v3384 = vadd.f32 %v3278, %v3132
      %v3385 = vadd.f32 %v3283, %v3133
      %v3386 = vadd.f32 %v3286, %v3134
      %v3387 = vadd.f32 %v3291, %v3135
      %v3388 = vadd.f32 %v3294, %v3136
      %v3389 = vadd.f32 %v3299, %v3137
      %v3390 = vadd.f32 %v3302, %v3138
      %v3391 = vadd.f32 %v3307, %v3139
      %v3392 = vadd.f32 %v3310, %v3140
      %v3393 = vadd.f32 %v3315, %v3141
      %v3394 = vadd.f32 %v3318, %v3142
      %v3395 = vadd.f32 %v3323, %v3143
      %v3396 = vadd.f32 %v3326, %v3144
      %v3397 = vadd.f32 %v3331, %v3145
      %v3398 = vadd.f32 %v3334, %v3146
      %v3399 = vadd.f32 %v3339, %v3147
      %v3400 = vadd.f32 %v3342, %v3148
      %v3401 = vadd.f32 %v3347, %v3149
      %v3402 = vadd.f32 %v3350, %v3150
      %v3403 = vadd.f32 %v3355, %v3151
      %v3404 = vadd.f32 %v3358, %v3152
      %v3405 = vadd.f32 %v3363, %v3153
      %v3406 = vadd.f32 %v3366, %v3154
      %v3407 = vadd.f32 %v3371, %v3155
      %v3408 = vadd.f32 %v3374, %v3156
      %v3409 = vmax.f32 %v3377, 0.0
      %v3410 = vmax.f32 %v3378, 0.0
      %v3411 = vmax.f32 %v3379, 0.0
      %v3412 = vmax.f32 %v3380, 0.0
      %v3413 = vmax.f32 %v3381, 0.0
      %v3414 = vmax.f32 %v3382, 0.0
      %v3415 = vmax.f32 %v3383, 0.0
      %v3416 = vmax.f32 %v3384, 0.0
      %v3417 = vmax.f32 %v3385, 0.0
      %v3418 = vmax.f32 %v3386, 0.0
      %v3419 = vmax.f32 %v3387, 0.0
      %v3420 = vmax.f32 %v3388, 0.0
      %v3421 = vmax.f32 %v3389, 0.0
      %v3422 = vmax.f32 %v3390, 0.0
      %v3423 = vmax.f32 %v3391, 0.0
      %v3424 = vmax.f32 %v3392, 0.0
      %v3425 = vmax.f32 %v3393, 0.0
      %v3426 = vmax.f32 %v3394, 0.0
      %v3427 = vmax.f32 %v3395, 0.0
      %v3428 = vmax.f32 %v3396, 0.0
      %v3429 = vmax.f32 %v3397, 0.0
      %v3430 = vmax.f32 %v3398, 0.0
      %v3431 = vmax.f32 %v3399, 0.0
      %v3432 = vmax.f32 %v3400, 0.0
      %v3433 = vmax.f32 %v3401, 0.0
      %v3434 = vmax.f32 %v3402, 0.0
      %v3435 = vmax.f32 %v3403, 0.0
      %v3436 = vmax.f32 %v3404, 0.0
      %v3437 = vmax.f32 %v3405, 0.0
      %v3438 = vmax.f32 %v3406, 0.0
      %v3439 = vmax.f32 %v3407, 0.0
      %v3440 = vmax.f32 %v3408, 0.0
      %v3441 = vpack.c.bf16 %v3410, %v3409
      %v3442 = vpack.c.bf16 %v3412, %v3411
      %v3443 = vpack.c.bf16 %v3414, %v3413
      %v3444 = vpack.c.bf16 %v3416, %v3415
      %v3445 = vpack.c.bf16 %v3418, %v3417
      %v3446 = vpack.c.bf16 %v3420, %v3419
      %v3447 = vpack.c.bf16 %v3422, %v3421
      %v3448 = vpack.c.bf16 %v3424, %v3423
      %v3449 = vpack.c.bf16 %v3426, %v3425
      %v3450 = vpack.c.bf16 %v3428, %v3427
      %v3451 = vpack.c.bf16 %v3430, %v3429
      %v3452 = vpack.c.bf16 %v3432, %v3431
      %v3453 = vpack.c.bf16 %v3434, %v3433
      %v3454 = vpack.c.bf16 %v3436, %v3435
      %v3455 = vpack.c.bf16 %v3438, %v3437
      %v3456 = vpack.c.bf16 %v3440, %v3439
      %v3473 = vunpack.c.l.b16 %v3441
      %v3474 = vunpack.c.h.b16 %v3441
      %v3475 = vunpack.c.l.b16 %v3442
      %v3476 = vunpack.c.h.b16 %v3442
      %v3477 = vunpack.c.l.b16 %v3443
      %v3478 = vunpack.c.h.b16 %v3443
      %v3479 = vunpack.c.l.b16 %v3444
      %v3480 = vunpack.c.h.b16 %v3444
      %v3481 = vunpack.c.l.b16 %v3445
      %v3482 = vunpack.c.h.b16 %v3445
      %v3483 = vunpack.c.l.b16 %v3446
      %v3484 = vunpack.c.h.b16 %v3446
      %v3485 = vunpack.c.l.b16 %v3447
      %v3486 = vunpack.c.h.b16 %v3447
      %v3487 = vunpack.c.l.b16 %v3448
      %v3488 = vunpack.c.h.b16 %v3448
      %v3489 = vunpack.c.l.b16 %v3449
      %v3490 = vunpack.c.h.b16 %v3449
      %v3491 = vunpack.c.l.b16 %v3450
      %v3492 = vunpack.c.h.b16 %v3450
      %v3493 = vunpack.c.l.b16 %v3451
      %v3494 = vunpack.c.h.b16 %v3451
      %v3495 = vunpack.c.l.b16 %v3452
      %v3496 = vunpack.c.h.b16 %v3452
      %v3497 = vunpack.c.l.b16 %v3453
      %v3498 = vunpack.c.h.b16 %v3453
      %v3499 = vunpack.c.l.b16 %v3454
      %v3500 = vunpack.c.h.b16 %v3454
      %v3501 = vunpack.c.l.b16 %v3455
      %v3502 = vunpack.c.h.b16 %v3455
      %v3503 = vunpack.c.l.b16 %v3456
      %v3504 = vunpack.c.h.b16 %v3456
      %v3505 = vpack.c.b16 %v3473, %v3473
      %v3506 = vpack.c.b16 %v3474, %v3474
      %v3507 = vpack.c.b16 %v3475, %v3475
      %v3508 = vpack.c.b16 %v3476, %v3476
      %v3509 = vpack.c.b16 %v3477, %v3477
      %v3510 = vpack.c.b16 %v3478, %v3478
      %v3511 = vpack.c.b16 %v3479, %v3479
      %v3512 = vpack.c.b16 %v3480, %v3480
      %v3513 = vpack.c.b16 %v3481, %v3481
      %v3514 = vpack.c.b16 %v3482, %v3482
      %v3515 = vpack.c.b16 %v3483, %v3483
      %v3516 = vpack.c.b16 %v3484, %v3484
      %v3517 = vpack.c.b16 %v3485, %v3485
      %v3518 = vpack.c.b16 %v3486, %v3486
      %v3519 = vpack.c.b16 %v3487, %v3487
      %v3520 = vpack.c.b16 %v3488, %v3488
      %v3521 = vpack.c.b16 %v3489, %v3489
      %v3522 = vpack.c.b16 %v3490, %v3490
      %v3523 = vpack.c.b16 %v3491, %v3491
      %v3524 = vpack.c.b16 %v3492, %v3492
      %v3525 = vpack.c.b16 %v3493, %v3493
      %v3526 = vpack.c.b16 %v3494, %v3494
      %v3527 = vpack.c.b16 %v3495, %v3495
      %v3528 = vpack.c.b16 %v3496, %v3496
      %v3529 = vpack.c.b16 %v3497, %v3497
      %v3530 = vpack.c.b16 %v3498, %v3498
      %v3531 = vpack.c.b16 %v3499, %v3499
      %v3532 = vpack.c.b16 %v3500, %v3500
      %v3533 = vpack.c.b16 %v3501, %v3501
      %v3534 = vpack.c.b16 %v3502, %v3502
      %v3535 = vpack.c.b16 %v3503, %v3503
      %v3536 = vpack.c.b16 %v3504, %v3504
      %vm3569 = vcmask 125952
      %3570 = vst.msk [vmem:[%s300] sm:$0xf] %vm3569, %v3505
      %3571 = vst.msk [vmem:[%s300 + $0x4] sm:$0xf] %vm3569, %v3506
      %3572 = vst.msk [vmem:[%s300 + $0x8] sm:$0xf] %vm3569, %v3507
      %3573 = vst.msk [vmem:[%s300 + $0xc] sm:$0xf] %vm3569, %v3508
      %3574 = vst.msk [vmem:[%s300 + $0x10] sm:$0xf] %vm3569, %v3509
      %3575 = vst.msk [vmem:[%s300 + $0x14] sm:$0xf] %vm3569, %v3510
      %3576 = vst.msk [vmem:[%s300 + $0x18] sm:$0xf] %vm3569, %v3511
      %3577 = vst.msk [vmem:[%s300 + $0x1c] sm:$0xf] %vm3569, %v3512
      %3578 = vst.msk [vmem:[%s300 + $0x20] sm:$0xf] %vm3569, %v3513
      %3579 = vst.msk [vmem:[%s300 + $0x24] sm:$0xf] %vm3569, %v3514
      %3580 = vst.msk [vmem:[%s300 + $0x28] sm:$0xf] %vm3569, %v3515
      %3581 = vst.msk [vmem:[%s300 + $0x2c] sm:$0xf] %vm3569, %v3516
      %3582 = vst.msk [vmem:[%s300 + $0x30] sm:$0xf] %vm3569, %v3517
      %3583 = vst.msk [vmem:[%s300 + $0x34] sm:$0xf] %vm3569, %v3518
      %3584 = vst.msk [vmem:[%s300 + $0x38] sm:$0xf] %vm3569, %v3519
      %3585 = vst.msk [vmem:[%s300 + $0x3c] sm:$0xf] %vm3569, %v3520
      %3586 = vst.msk [vmem:[%s300 + $0x40] sm:$0xf] %vm3569, %v3521
      %3587 = vst.msk [vmem:[%s300 + $0x44] sm:$0xf] %vm3569, %v3522
      %3588 = vst.msk [vmem:[%s300 + $0x48] sm:$0xf] %vm3569, %v3523
      %3589 = vst.msk [vmem:[%s300 + $0x4c] sm:$0xf] %vm3569, %v3524
      %3590 = vst.msk [vmem:[%s300 + $0x50] sm:$0xf] %vm3569, %v3525
      %3591 = vst.msk [vmem:[%s300 + $0x54] sm:$0xf] %vm3569, %v3526
      %3592 = vst.msk [vmem:[%s300 + $0x58] sm:$0xf] %vm3569, %v3527
      %3593 = vst.msk [vmem:[%s300 + $0x5c] sm:$0xf] %vm3569, %v3528
      %3594 = vst.msk [vmem:[%s300 + $0x60] sm:$0xf] %vm3569, %v3529
      %3595 = vst.msk [vmem:[%s300 + $0x64] sm:$0xf] %vm3569, %v3530
      %3596 = vst.msk [vmem:[%s300 + $0x68] sm:$0xf] %vm3569, %v3531
      %3597 = vst.msk [vmem:[%s300 + $0x6c] sm:$0xf] %vm3569, %v3532
      %3598 = vst.msk [vmem:[%s300 + $0x70] sm:$0xf] %vm3569, %v3533
      %3599 = vst.msk [vmem:[%s300 + $0x74] sm:$0xf] %vm3569, %v3534
      %3600 = vst.msk [vmem:[%s300 + $0x78] sm:$0xf] %vm3569, %v3535
      %3601 = vst.msk [vmem:[%s300 + $0x7c] sm:$0xf] %vm3569, %v3536
      %s3602 = smul.u32 32, %s23
      %p3603 = scmp.lt.s32.totalorder %s22, 1
      %s3604 = scalar_select %p3603, %s22, 1
      %p3605 = scmp.lt.s32.totalorder %s3602, 31
      %s3606 = scalar_select %p3605, %s3602, 31
      %s3607 = smul.addr %s3604, 32
      %s3608 = sadd.s32 %s3606, %s3607
      %s3609 = smul.addr %s3608, 4
      %s3610 = scalar_lea.vmem %s7, %s3609
      // Predicated region
      $region65: #{tpu_custom_call.1} parent=47 // pred_check
        %p3611 = pneg %p202
      $region66: #{tpu_custom_call.1} parent=47 // pred_check_branch
        %3613 = sbr.rel (%p3611) target = $region68
      $region67: #{tpu_custom_call.1} parent=47 // pred_region
        %s3614 = smul.u32 32, %s23
      $region68: #{tpu_custom_call.1} parent=47 // pred_fallthru
        _
    $region48: #{tpu_custom_call.1} parent=5 // pred_fallthru
      _
    %p3615 = scmp.le.s32.totalorder 2, %s13
    // Predicated region
    $region69: #{tpu_custom_call.1} parent=5 // pred_check
      %p3616 = pneg %p3615
    $region70: #{tpu_custom_call.1} parent=5 // pred_check_branch
      %3618 = sbr.rel (%p3616) target = $region72
    $region71: #{tpu_custom_call.1} parent=5 // pred_region
      %s3619 = ssub.s32 %s13, 2
      // Predicated region
      $region73: #{tpu_custom_call.1} parent=71 // pred_check
        %p3620 = pneg %p208
      $region74: #{tpu_custom_call.1} parent=71 // pred_check_branch
        %3622 = sbr.rel (%p3620) target = $region76
      $region75: #{tpu_custom_call.1} parent=71 // pred_region
        %s3623 = smul.u32 32, %s25
        %p3624 = scmp.lt.s32.totalorder %s24, 1
        %s3625 = scalar_select %p3624, %s24, 1
        %p3626 = scmp.lt.s32.totalorder %s3623, 31
        %s3627 = scalar_select %p3626, %s3623, 31
        %s3628 = smul.addr %s3625, 32
        %s3629 = sadd.s32 %s3627, %s3628
        %s3630 = smul.addr %s3629, 4
        %s3631 = scalar_lea.vmem %s7, %s3630
      $region76: #{tpu_custom_call.1} parent=71 // pred_fallthru
        _
    $region72: #{tpu_custom_call.1} parent=5 // pred_fallthru
      _
  $region6: #{tpu_custom_call.1} parent=0 // loop_footer
    %s17 = sadd.s32 1, %s13
  $region7: #{tpu_custom_call.1} parent=0 // loop_footer_branch
    %12 = sbr.rel target = $region3
  $region8: #{tpu_custom_call.1} parent=0 // loop_exit
    _

</llo_original>
